<compile_context>
chip_gen: v7x
topology: tpu7x:2x2x1
jax: 0.10.0
libtpu: 0.0.40
codegen_flags: <defaults>
</compile_context>

<pallas_src>
import math

import jax
import jax.numpy as jnp
from jax import lax
from jax.experimental import pallas as pl
from jax.experimental.pallas import tpu as pltpu

NUM_HEADS = 8
LN_EPS = 1e-5
HIDDEN_CHUNK = 512  # MLP hidden-dim streaming chunk (multiple of 128/256 MXU tiles)

_WEIGHT_NAMES = ("wq", "wk", "wv", "wo", "w1", "w2")
_PARAM_ORDER = ("wq", "bq", "wk", "bk", "wv", "bv", "wo", "bo",
                "g1", "be1", "w1", "b1", "w2", "b2", "g2", "be2")


def _layernorm(y, gamma, beta):
    # Two-pass statistics (subtract mean first); biased variance like PyTorch.
    mu = jnp.mean(y, axis=-1, keepdims=True)
    d = y - mu
    var = jnp.mean(d * d, axis=-1, keepdims=True)
    return d * lax.rsqrt(var + LN_EPS) * gamma + beta


def transformer_block_kernel(
    x_full_ref, x_q_ref,
    wq_ref, bq_ref, wk_ref, bk_ref, wv_ref, bv_ref, wo_ref, bo_ref,
    g1_ref, be1_ref, w1_ref, b1_ref, w2_ref, b2_ref, g2_ref, be2_ref,
    o_ref,
    k_scr, v_scr, heads_scr, y_scr, mlp_scr,
):
    TS, E = y_scr.shape
    D = E // NUM_HEADS
    scale = 1.0 / math.sqrt(D)

    s_idx = pl.program_id(1)
    c_idx = pl.program_id(2)

    # ---- K/V projections: once per batch element, cached in bf16 scratch ----
    @pl.when(jnp.logical_and(s_idx == 0, c_idx == 0))
    def _compute_kv():
        xkv_bf = x_full_ref[0].astype(jnp.bfloat16)                 # (S, E)
        k = jnp.dot(xkv_bf, wk_ref[...],
                    preferred_element_type=jnp.float32) + bk_ref[0]
        v = jnp.dot(xkv_bf, wv_ref[...],
                    preferred_element_type=jnp.float32) + bv_ref[0]
        k_scr[...] = k.astype(jnp.bfloat16)
        v_scr[...] = v.astype(jnp.bfloat16)

    # ---- Attention + residual + LayerNorm1: once per query tile (c == 0) ----
    @pl.when(c_idx == 0)
    def _attention_ln1():
        x_tile = x_q_ref[0]                                          # (TS, E) f32
        xq_bf = x_tile.astype(jnp.bfloat16)
        # Fold 1/sqrt(D) into Q once.
        q = (jnp.dot(xq_bf, wq_ref[...],
                     preferred_element_type=jnp.float32) + bq_ref[0]) * scale
        q = q.astype(jnp.bfloat16)                                   # (TS, E)
        k = k_scr[...]                                               # (S, E) bf16
        v = v_scr[...]                                               # (S, E) bf16

        dim_nums = (((1,), (1,)), ((), ()))  # contract last dims, no batch dims
        for h in range(NUM_HEADS):           # static unroll (NUM_HEADS = 8)
            lo = h * D
            qh = q[:, lo:lo + D]             # (TS, D) bf16
            kh = k[:, lo:lo + D]             # (S, D)  bf16
            vh = v[:, lo:lo + D]             # (S, D)  bf16
            sc = lax.dot_general(qh, kh, dim_nums,
                                 preferred_element_type=jnp.float32)  # (TS, S)
            sc = sc - jnp.max(sc, axis=-1, keepdims=True)
            p = jnp.exp(sc)
            p = p * pl.reciprocal(jnp.sum(p, axis=-1, keepdims=True), approx=True)
            ho = jnp.dot(p.astype(jnp.bfloat16), vh,
                         preferred_element_type=jnp.float32)          # (TS, D)
            heads_scr[:, lo:lo + D] = ho     # concat heads in VMEM scratch

        # Single dense output projection (K = E) instead of 8 skinny matmuls.
        attn = jnp.dot(heads_scr[...].astype(jnp.bfloat16), wo_ref[...],
                       preferred_element_type=jnp.float32) + bo_ref[0]

        y_scr[...] = _layernorm(x_tile + attn, g1_ref[0], be1_ref[0])
        mlp_scr[...] = jnp.zeros_like(mlp_scr)

    # ---- MLP: streamed hidden-dim chunk c (w1/w2 blocks pipelined by grid) ---
    y_bf = y_scr[...].astype(jnp.bfloat16)
    h1 = jnp.dot(y_bf, w1_ref[...],
                 preferred_element_type=jnp.float32) + b1_ref[0]      # (TS, HC)
    h1 = jnp.where(h1 > 0, h1, jnp.exp(jnp.minimum(h1, 0.0)) - 1.0)   # ELU(1)
    mlp_scr[...] += jnp.dot(h1.astype(jnp.bfloat16), w2_ref[...],
                            preferred_element_type=jnp.float32)       # (TS, E)

    # ---- Residual + LayerNorm 2 + store: last hidden chunk only -------------
    @pl.when(c_idx == pl.num_programs(2) - 1)
    def _finalize():
        z = y_scr[...] + mlp_scr[...] + b2_ref[0]
        o_ref[0] = _layernorm(z, g2_ref[0], be2_ref[0]).astype(o_ref.dtype)


def transformer_block(x, params, *, single_buffer_weights=True, seq_tile=256,
                      hidden_chunk=HIDDEN_CHUNK, vmem_limit_bytes=None):
    """x: (B, S, E) float32; params: dict from init_params (f32, (in,out) weights)."""
    B, S, E = x.shape
    assert E % NUM_HEADS == 0, "embed dim must be divisible by NUM_HEADS"
    TS = min(S, seq_tile)                   # query-sequence tile
    assert S % TS == 0, "sequence length must be divisible by the query tile"

    H4 = 4 * E
    if H4 <= hidden_chunk or H4 % hidden_chunk != 0:
        HC = H4                              # no streaming needed / not divisible
    else:
        HC = hidden_chunk
    NC = H4 // HC

    if vmem_limit_bytes is None:
        # ~48 MiB on 64-MiB-VMEM chips (v7x), ~100 MiB on 128-MiB chips (v5e/v6e).
        try:
            cap = pltpu.get_tpu_info().vmem_capacity_bytes
        except Exception:
            cap = 64 << 20
        vmem_limit_bytes = int(min(100 << 20, max(32 << 20, cap - (16 << 20))))

    # bf16 weight matrices for the MXU (halved HBM/VMEM traffic); biases and
    # LayerNorm parameters stay f32 (applied in f32).
    prepared = {n: (params[n].astype(jnp.bfloat16) if n in _WEIGHT_NAMES
                    else params[n].astype(jnp.float32))
                for n in _PARAM_ORDER}
    param_vals = [prepared[n] for n in _PARAM_ORDER]

    def const_spec(shape):
        # Constant index map -> fetched once; single-buffer to halve weight VMEM.
        if single_buffer_weights:
            return pl.BlockSpec(shape, lambda b, s, c: (0,) * len(shape),
                                pipeline_mode=pl.Buffered(1))
        return pl.BlockSpec(shape, lambda b, s, c: (0,) * len(shape))

    param_specs = {
        "wq": const_spec((E, E)), "bq": const_spec((1, E)),
        "wk": const_spec((E, E)), "bk": const_spec((1, E)),
        "wv": const_spec((E, E)), "bv": const_spec((1, E)),
        "wo": const_spec((E, E)), "bo": const_spec((1, E)),
        "g1": const_spec((1, E)), "be1": const_spec((1, E)),
        # Streamed MLP weights: indexed by the hidden-chunk grid axis c,
        # default double-buffering overlaps their DMA with the matmuls.
        "w1": pl.BlockSpec((E, HC), lambda b, s, c: (0, c)),
        "b1": pl.BlockSpec((1, HC), lambda b, s, c: (0, c)),
        "w2": pl.BlockSpec((HC, E), lambda b, s, c: (c, 0)),
        "b2": const_spec((1, E)),
        "g2": const_spec((1, E)), "be2": const_spec((1, E)),
    }

    in_specs = [
        # Full-sequence x block (only read at s==0,c==0 for the K/V projection).
        pl.BlockSpec((1, S, E), lambda b, s, c: (b, 0, 0)),
        # Query / residual rows for this grid step (no in-kernel dynamic slice).
        pl.BlockSpec((1, TS, E), lambda b, s, c: (b, s, 0)),
    ] + [param_specs[n] for n in _PARAM_ORDER]

    grid_spec = pltpu.PrefetchScalarGridSpec(
        num_scalar_prefetch=0,
        grid=(B, S // TS, NC),
        in_specs=in_specs,
        out_specs=pl.BlockSpec((1, TS, E), lambda b, s, c: (b, s, 0)),
        scratch_shapes=[
            pltpu.VMEM((S, E), jnp.bfloat16),   # K cache (persists across s, c)
            pltpu.VMEM((S, E), jnp.bfloat16),   # V cache
            pltpu.VMEM((TS, E), jnp.float32),   # concatenated per-head outputs
            pltpu.VMEM((TS, E), jnp.float32),   # y = ln1(x + attn), carried over c
            pltpu.VMEM((TS, E), jnp.float32),   # MLP accumulator
        ],
    )

    return pl.pallas_call(
        transformer_block_kernel,
        out_shape=jax.ShapeDtypeStruct((B, S, E), jnp.float32),
        grid_spec=grid_spec,
        compiler_params=pltpu.CompilerParams(
            # b parallel (megacore); s carries the K/V scratch, c carries the
            # MLP accumulator -> both must be "arbitrary".
            dimension_semantics=("parallel", "arbitrary", "arbitrary"),
            vmem_limit_bytes=vmem_limit_bytes),
    )(x, x, *param_vals)


def init_params(key, E):
    """Deterministic synthetic parameters. Weights stored (in, out); biases (1, out)."""
    ks = jax.random.split(key, 16)
    s = 0.05
    return {
        "wq": s * jax.random.normal(ks[0], (E, E), jnp.float32),
        "bq": s * jax.random.normal(ks[1], (1, E), jnp.float32),
        "wk": s * jax.random.normal(ks[2], (E, E), jnp.float32),
        "bk": s * jax.random.normal(ks[3], (1, E), jnp.float32),
        "wv": s * jax.random.normal(ks[4], (E, E), jnp.float32),
        "bv": s * jax.random.normal(ks[5], (1, E), jnp.float32),
        "wo": s * jax.random.normal(ks[6], (E, E), jnp.float32),
        "bo": s * jax.random.normal(ks[7], (1, E), jnp.float32),
        "g1": jnp.ones((1, E), jnp.float32),
        "be1": jnp.zeros((1, E), jnp.float32),
        "w1": s * jax.random.normal(ks[8], (E, 4 * E), jnp.float32),
        "b1": s * jax.random.normal(ks[9], (1, 4 * E), jnp.float32),
        "w2": s * jax.random.normal(ks[10], (4 * E, E), jnp.float32),
        "b2": s * jax.random.normal(ks[11], (1, E), jnp.float32),
        "g2": jnp.ones((1, E), jnp.float32),
        "be2": jnp.zeros((1, E), jnp.float32),
    }


def reference_block(x, params):
    """Pure-JAX f32 reference mirroring PyTorch nn.MultiheadAttention + block."""
    B, S, E = x.shape
    D = E // NUM_HEADS
    scale = 1.0 / (D ** 0.5)

    def ln(y, g, b):
        mu = jnp.mean(y, axis=-1, keepdims=True)
        var = jnp.mean((y - mu) ** 2, axis=-1, keepdims=True)
        return (y - mu) * lax.rsqrt(var + LN_EPS) * g + b

    q = x @ params["wq"] + params["bq"][0]
    k = x @ params["wk"] + params["bk"][0]
    v = x @ params["wv"] + params["bv"][0]
    q = q.reshape(B, S, NUM_HEADS, D).transpose(0, 2, 1, 3)
    k = k.reshape(B, S, NUM_HEADS, D).transpose(0, 2, 1, 3)
    v = v.reshape(B, S, NUM_HEADS, D).transpose(0, 2, 1, 3)
    s = jnp.einsum("bhqd,bhkd->bhqk", q, k) * scale
    p = jax.nn.softmax(s, axis=-1)
    o = jnp.einsum("bhqk,bhkd->bhqd", p, v)
    o = o.transpose(0, 2, 1, 3).reshape(B, S, E)
    attn = o @ params["wo"] + params["bo"][0]

    y = ln(x + attn, params["g1"][0], params["be1"][0])
    h1 = y @ params["w1"] + params["b1"][0]
    h1 = jnp.where(h1 > 0, h1, jnp.exp(jnp.minimum(h1, 0.0)) - 1.0)
    h2 = h1 @ params["w2"] + params["b2"][0]
    return ln(y + h2, params["g2"][0], params["be2"][0])


def _run_kernel(x, params):
    try:
        return jax.block_until_ready(transformer_block(x, params))
    except Exception:
        # Fallback only flips single-buffering of the constant weight specs
        # (pl.Buffered(1)); everything else (KV cache, streaming) is unchanged.
        return jax.block_until_ready(
            transformer_block(x, params, single_buffer_weights=False))


def _check(B, S, E, seed):
    kx, kp = jax.random.split(jax.random.PRNGKey(seed))
    x = jax.random.normal(kx, (B, S, E), jnp.float32)
    params = init_params(kp, E)
    out = _run_kernel(x, params)
    ref = reference_block(x, params)
    assert out.shape == (B, S, E)
    max_err = float(jnp.max(jnp.abs(out - ref)))
    # bf16 matmuls + approx reciprocal vs f32 reference -> loosened tolerance.
    assert jnp.allclose(out, ref, atol=5e-2, rtol=5e-2), \
        f"mismatch vs JAX reference (shape {(B, S, E)}, max abs err {max_err})"


if __name__ == "__main__":
    # Small module-consistent shape (feature_dim = 64 -> head_dim 8).
    _check(B=2, S=8, E=64, seed=0)
    # A lane-aligned shape (E = 128 -> head_dim 16) to exercise real layouts.
    _check(B=2, S=128, E=128, seed=1)
    print("KERNEL_OK")
</pallas_src>

<mosaic_0001>
module attributes {stable_mosaic.version = 11 : i64} {
  func.func @transformer_block_kernel(%arg0: i32, %arg1: i32, %arg2: i32, %arg3: memref<1x8x64xf32, #tpu.memory_space<vmem>>, %arg4: memref<1x8x64xf32, #tpu.memory_space<vmem>>, %arg5: memref<64x64xbf16, #tpu.memory_space<vmem>>, %arg6: memref<1x64xf32, #tpu.memory_space<vmem>>, %arg7: memref<64x64xbf16, #tpu.memory_space<vmem>>, %arg8: memref<1x64xf32, #tpu.memory_space<vmem>>, %arg9: memref<64x64xbf16, #tpu.memory_space<vmem>>, %arg10: memref<1x64xf32, #tpu.memory_space<vmem>>, %arg11: memref<64x64xbf16, #tpu.memory_space<vmem>>, %arg12: memref<1x64xf32, #tpu.memory_space<vmem>>, %arg13: memref<1x64xf32, #tpu.memory_space<vmem>>, %arg14: memref<1x64xf32, #tpu.memory_space<vmem>>, %arg15: memref<64x256xbf16, #tpu.memory_space<vmem>>, %arg16: memref<1x256xf32, #tpu.memory_space<vmem>>, %arg17: memref<256x64xbf16, #tpu.memory_space<vmem>>, %arg18: memref<1x64xf32, #tpu.memory_space<vmem>>, %arg19: memref<1x64xf32, #tpu.memory_space<vmem>>, %arg20: memref<1x64xf32, #tpu.memory_space<vmem>>, %arg21: memref<1x8x64xf32, #tpu.memory_space<vmem>>, %arg22: memref<8x64xbf16, #tpu.memory_space<vmem>>, %arg23: memref<8x64xbf16, #tpu.memory_space<vmem>>, %arg24: memref<8x64xf32, #tpu.memory_space<vmem>>, %arg25: memref<8x64xf32, #tpu.memory_space<vmem>>, %arg26: memref<8x64xf32, #tpu.memory_space<vmem>>) attributes {dimension_semantics = [#tpu.dimension_semantics<parallel>, #tpu.dimension_semantics<arbitrary>, #tpu.dimension_semantics<arbitrary>], iteration_bounds = array<i64: 2, 1, 1>, scalar_prefetch = 0 : i64, scratch_operands = 5 : i64, tpu.core_type = #tpu.core_type<tc>, window_params = [{transform_indices = @transform_0, window_bounds = array<i64: 1, 8, 64>}, {transform_indices = @transform_1, window_bounds = array<i64: 1, 8, 64>}, {pipeline_mode = #tpu.pipeline_mode<synchronous>, transform_indices = @transform_2, window_bounds = array<i64: 64, 64>}, {pipeline_mode = #tpu.pipeline_mode<synchronous>, transform_indices = @transform_3, window_bounds = array<i64: 1, 64>}, {pipeline_mode = #tpu.pipeline_mode<synchronous>, transform_indices = @transform_4, window_bounds = array<i64: 64, 64>}, {pipeline_mode = #tpu.pipeline_mode<synchronous>, transform_indices = @transform_5, window_bounds = array<i64: 1, 64>}, {pipeline_mode = #tpu.pipeline_mode<synchronous>, transform_indices = @transform_6, window_bounds = array<i64: 64, 64>}, {pipeline_mode = #tpu.pipeline_mode<synchronous>, transform_indices = @transform_7, window_bounds = array<i64: 1, 64>}, {pipeline_mode = #tpu.pipeline_mode<synchronous>, transform_indices = @transform_8, window_bounds = array<i64: 64, 64>}, {pipeline_mode = #tpu.pipeline_mode<synchronous>, transform_indices = @transform_9, window_bounds = array<i64: 1, 64>}, {pipeline_mode = #tpu.pipeline_mode<synchronous>, transform_indices = @transform_10, window_bounds = array<i64: 1, 64>}, {pipeline_mode = #tpu.pipeline_mode<synchronous>, transform_indices = @transform_11, window_bounds = array<i64: 1, 64>}, {transform_indices = @transform_12, window_bounds = array<i64: 64, 256>}, {transform_indices = @transform_13, window_bounds = array<i64: 1, 256>}, {transform_indices = @transform_14, window_bounds = array<i64: 256, 64>}, {pipeline_mode = #tpu.pipeline_mode<synchronous>, transform_indices = @transform_15, window_bounds = array<i64: 1, 64>}, {pipeline_mode = #tpu.pipeline_mode<synchronous>, transform_indices = @transform_16, window_bounds = array<i64: 1, 64>}, {pipeline_mode = #tpu.pipeline_mode<synchronous>, transform_indices = @transform_17, window_bounds = array<i64: 1, 64>}, {transform_indices = @transform_18, window_bounds = array<i64: 1, 8, 64>}]} {
    %c0_i32 = arith.constant 0 : i32
    %0 = arith.cmpi eq, %arg1, %c0_i32 : i32
    %c0_i32_0 = arith.constant 0 : i32
    %1 = arith.cmpi eq, %arg2, %c0_i32_0 : i32
    %2 = arith.andi %0, %1 : i1
    %3 = arith.extui %2 : i1 to i32
    %c0_i32_1 = arith.constant 0 : i32
    %4 = arith.cmpi ne, %3, %c0_i32_1 : i32
    scf.if %4 {
      %c0_21 = arith.constant 0 : index
      %c0_22 = arith.constant 0 : index
      %c0_23 = arith.constant 0 : index
      %34 = vector.load %arg3[%c0_21, %c0_22, %c0_23] : memref<1x8x64xf32, #tpu.memory_space<vmem>>, vector<1x8x64xf32>
      %35 = vector.shape_cast %34 : vector<1x8x64xf32> to vector<8x64xf32>
      %36 = arith.truncf %35 : vector<8x64xf32> to vector<8x64xbf16>
      %c0_24 = arith.constant 0 : index
      %c0_25 = arith.constant 0 : index
      %37 = vector.load %arg7[%c0_24, %c0_25] : memref<64x64xbf16, #tpu.memory_space<vmem>>, vector<64x64xbf16>
      %cst_26 = arith.constant dense<0.000000e+00> : vector<8x64xf32>
      %38 = tpu.matmul %36, %37, %cst_26 {dimension_numbers = #tpu.dot_dimension_numbers<[1], [0], [0], [1], [0, 0, 1, 1], [], []>} : vector<8x64xbf16>, vector<64x64xbf16>, vector<8x64xf32> -> vector<8x64xf32>
      %c0_27 = arith.constant 0 : index
      %c0_28 = arith.constant 0 : index
      %39 = vector.load %arg8[%c0_27, %c0_28] : memref<1x64xf32, #tpu.memory_space<vmem>>, vector<1x64xf32>
      %40 = vector.shape_cast %39 : vector<1x64xf32> to vector<64xf32>
      %41 = vector.shape_cast %40 : vector<64xf32> to vector<1x64xf32>
      %42 = vector.broadcast %41 : vector<1x64xf32> to vector<8x64xf32>
      %43 = arith.addf %38, %42 : vector<8x64xf32>
      %c0_29 = arith.constant 0 : index
      %c0_30 = arith.constant 0 : index
      %44 = vector.load %arg9[%c0_29, %c0_30] : memref<64x64xbf16, #tpu.memory_space<vmem>>, vector<64x64xbf16>
      %cst_31 = arith.constant dense<0.000000e+00> : vector<8x64xf32>
      %45 = tpu.matmul %36, %44, %cst_31 {dimension_numbers = #tpu.dot_dimension_numbers<[1], [0], [0], [1], [0, 0, 1, 1], [], []>} : vector<8x64xbf16>, vector<64x64xbf16>, vector<8x64xf32> -> vector<8x64xf32>
      %c0_32 = arith.constant 0 : index
      %c0_33 = arith.constant 0 : index
      %46 = vector.load %arg10[%c0_32, %c0_33] : memref<1x64xf32, #tpu.memory_space<vmem>>, vector<1x64xf32>
      %47 = vector.shape_cast %46 : vector<1x64xf32> to vector<64xf32>
      %48 = vector.shape_cast %47 : vector<64xf32> to vector<1x64xf32>
      %49 = vector.broadcast %48 : vector<1x64xf32> to vector<8x64xf32>
      %50 = arith.addf %45, %49 : vector<8x64xf32>
      %51 = arith.truncf %43 : vector<8x64xf32> to vector<8x64xbf16>
      %c0_34 = arith.constant 0 : index
      %c0_35 = arith.constant 0 : index
      %52 = vector.load %arg22[%c0_34, %c0_35] : memref<8x64xbf16, #tpu.memory_space<vmem>>, vector<8x64xbf16>
      tpu.vector_store %arg22[%c0_34, %c0_35], %51 {strides = array<i32>} : memref<8x64xbf16, #tpu.memory_space<vmem>>, vector<8x64xbf16>,
      %53 = arith.truncf %50 : vector<8x64xf32> to vector<8x64xbf16>
      %c0_36 = arith.constant 0 : index
      %c0_37 = arith.constant 0 : index
      %54 = vector.load %arg23[%c0_36, %c0_37] : memref<8x64xbf16, #tpu.memory_space<vmem>>, vector<8x64xbf16>
      tpu.vector_store %arg23[%c0_36, %c0_37], %53 {strides = array<i32>} : memref<8x64xbf16, #tpu.memory_space<vmem>>, vector<8x64xbf16>,
    } else {
    }
    %c0_i32_2 = arith.constant 0 : i32
    %5 = arith.cmpi eq, %arg2, %c0_i32_2 : i32
    %6 = arith.extui %5 : i1 to i32
    %c0_i32_3 = arith.constant 0 : i32
    %7 = arith.cmpi ne, %6, %c0_i32_3 : i32
    scf.if %7 {
      %c0_21 = arith.constant 0 : index
      %c0_22 = arith.constant 0 : index
      %c0_23 = arith.constant 0 : index
      %34 = vector.load %arg4[%c0_21, %c0_22, %c0_23] : memref<1x8x64xf32, #tpu.memory_space<vmem>>, vector<1x8x64xf32>
      %35 = vector.shape_cast %34 : vector<1x8x64xf32> to vector<8x64xf32>
      %36 = arith.truncf %35 : vector<8x64xf32> to vector<8x64xbf16>
      %c0_24 = arith.constant 0 : index
      %c0_25 = arith.constant 0 : index
      %37 = vector.load %arg5[%c0_24, %c0_25] : memref<64x64xbf16, #tpu.memory_space<vmem>>, vector<64x64xbf16>
      %cst_26 = arith.constant dense<0.000000e+00> : vector<8x64xf32>
      %38 = tpu.matmul %36, %37, %cst_26 {dimension_numbers = #tpu.dot_dimension_numbers<[1], [0], [0], [1], [0, 0, 1, 1], [], []>} : vector<8x64xbf16>, vector<64x64xbf16>, vector<8x64xf32> -> vector<8x64xf32>
      %c0_27 = arith.constant 0 : index
      %c0_28 = arith.constant 0 : index
      %39 = vector.load %arg6[%c0_27, %c0_28] : memref<1x64xf32, #tpu.memory_space<vmem>>, vector<1x64xf32>
      %40 = vector.shape_cast %39 : vector<1x64xf32> to vector<64xf32>
      %41 = vector.shape_cast %40 : vector<64xf32> to vector<1x64xf32>
      %42 = vector.broadcast %41 : vector<1x64xf32> to vector<8x64xf32>
      %43 = arith.addf %38, %42 : vector<8x64xf32>
      %cst_29 = arith.constant 0.353553385 : f32
      %44 = vector.broadcast %cst_29 : f32 to vector<8x64xf32>
      %45 = arith.mulf %43, %44 : vector<8x64xf32>
      %46 = arith.truncf %45 : vector<8x64xf32> to vector<8x64xbf16>
      %c0_30 = arith.constant 0 : index
      %c0_31 = arith.constant 0 : index
      %47 = vector.load %arg22[%c0_30, %c0_31] : memref<8x64xbf16, #tpu.memory_space<vmem>>, vector<8x64xbf16>
      %c0_32 = arith.constant 0 : index
      %c0_33 = arith.constant 0 : index
      %48 = vector.load %arg23[%c0_32, %c0_33] : memref<8x64xbf16, #tpu.memory_space<vmem>>, vector<8x64xbf16>
      %49 = vector.extract_strided_slice %46 {offsets = [0, 0], sizes = [8, 8], strides = [1, 1]} : vector<8x64xbf16> to vector<8x8xbf16>
      %50 = vector.extract_strided_slice %47 {offsets = [0, 0], sizes = [8, 8], strides = [1, 1]} : vector<8x64xbf16> to vector<8x8xbf16>
      %51 = vector.extract_strided_slice %48 {offsets = [0, 0], sizes = [8, 8], strides = [1, 1]} : vector<8x64xbf16> to vector<8x8xbf16>
      %cst_34 = arith.constant dense<0.000000e+00> : vector<8x8xf32>
      %52 = tpu.matmul %49, %50, %cst_34 {dimension_numbers = #tpu.dot_dimension_numbers<[1], [1], [0], [0], [0, 0, 1, 0], [], []>} : vector<8x8xbf16>, vector<8x8xbf16>, vector<8x8xf32> -> vector<8x8xf32>
      %cst_35 = arith.constant dense<0xFF800000> : vector<8xf32>
      %53 = vector.multi_reduction <maximumf>, %52, %cst_35 [1] : vector<8x8xf32> to vector<8xf32>
      %54 = vector.shape_cast %53 : vector<8xf32> to vector<8x1xf32>
      %55 = vector.broadcast %54 : vector<8x1xf32> to vector<8x8xf32>
      %56 = arith.subf %52, %55 : vector<8x8xf32>
      %57 = math.exp %56 : vector<8x8xf32>
      %cst_36 = arith.constant dense<0.000000e+00> : vector<8xf32>
      %58 = vector.multi_reduction <add>, %57, %cst_36 [1] : vector<8x8xf32> to vector<8xf32>
      %59 = vector.shape_cast %58 : vector<8xf32> to vector<8x1xf32>
      %60 = tpu.reciprocal %59 {approx = true} : vector<8x1xf32> -> vector<8x1xf32>
      %61 = vector.broadcast %60 : vector<8x1xf32> to vector<8x8xf32>
      %62 = arith.mulf %57, %61 : vector<8x8xf32>
      %63 = arith.truncf %62 : vector<8x8xf32> to vector<8x8xbf16>
      %cst_37 = arith.constant dense<0.000000e+00> : vector<8x8xf32>
      %64 = tpu.matmul %63, %51, %cst_37 {dimension_numbers = #tpu.dot_dimension_numbers<[1], [0], [0], [1], [0, 0, 1, 1], [], []>} : vector<8x8xbf16>, vector<8x8xbf16>, vector<8x8xf32> -> vector<8x8xf32>
      %c0_38 = arith.constant 0 : index
      %c0_39 = arith.constant 0 : index
      %65 = vector.load %arg24[%c0_38, %c0_39] : memref<8x64xf32, #tpu.memory_space<vmem>>, vector<8x8xf32>
      tpu.vector_store %arg24[%c0_38, %c0_39], %64 {strides = array<i32>} : memref<8x64xf32, #tpu.memory_space<vmem>>, vector<8x8xf32>,
      %66 = vector.extract_strided_slice %46 {offsets = [0, 8], sizes = [8, 8], strides = [1, 1]} : vector<8x64xbf16> to vector<8x8xbf16>
      %67 = vector.extract_strided_slice %47 {offsets = [0, 8], sizes = [8, 8], strides = [1, 1]} : vector<8x64xbf16> to vector<8x8xbf16>
      %68 = vector.extract_strided_slice %48 {offsets = [0, 8], sizes = [8, 8], strides = [1, 1]} : vector<8x64xbf16> to vector<8x8xbf16>
      %cst_40 = arith.constant dense<0.000000e+00> : vector<8x8xf32>
      %69 = tpu.matmul %66, %67, %cst_40 {dimension_numbers = #tpu.dot_dimension_numbers<[1], [1], [0], [0], [0, 0, 1, 0], [], []>} : vector<8x8xbf16>, vector<8x8xbf16>, vector<8x8xf32> -> vector<8x8xf32>
      %cst_41 = arith.constant dense<0xFF800000> : vector<8xf32>
      %70 = vector.multi_reduction <maximumf>, %69, %cst_41 [1] : vector<8x8xf32> to vector<8xf32>
      %71 = vector.shape_cast %70 : vector<8xf32> to vector<8x1xf32>
      %72 = vector.broadcast %71 : vector<8x1xf32> to vector<8x8xf32>
      %73 = arith.subf %69, %72 : vector<8x8xf32>
      %74 = math.exp %73 : vector<8x8xf32>
      %cst_42 = arith.constant dense<0.000000e+00> : vector<8xf32>
      %75 = vector.multi_reduction <add>, %74, %cst_42 [1] : vector<8x8xf32> to vector<8xf32>
      %76 = vector.shape_cast %75 : vector<8xf32> to vector<8x1xf32>
      %77 = tpu.reciprocal %76 {approx = true} : vector<8x1xf32> -> vector<8x1xf32>
      %78 = vector.broadcast %77 : vector<8x1xf32> to vector<8x8xf32>
      %79 = arith.mulf %74, %78 : vector<8x8xf32>
      %80 = arith.truncf %79 : vector<8x8xf32> to vector<8x8xbf16>
      %cst_43 = arith.constant dense<0.000000e+00> : vector<8x8xf32>
      %81 = tpu.matmul %80, %68, %cst_43 {dimension_numbers = #tpu.dot_dimension_numbers<[1], [0], [0], [1], [0, 0, 1, 1], [], []>} : vector<8x8xbf16>, vector<8x8xbf16>, vector<8x8xf32> -> vector<8x8xf32>
      %c0_44 = arith.constant 0 : index
      %c8 = arith.constant 8 : index
      %82 = vector.load %arg24[%c0_44, %c8] : memref<8x64xf32, #tpu.memory_space<vmem>>, vector<8x8xf32>
      tpu.vector_store %arg24[%c0_44, %c8], %81 {strides = array<i32>} : memref<8x64xf32, #tpu.memory_space<vmem>>, vector<8x8xf32>,
      %83 = vector.extract_strided_slice %46 {offsets = [0, 16], sizes = [8, 8], strides = [1, 1]} : vector<8x64xbf16> to vector<8x8xbf16>
      %84 = vector.extract_strided_slice %47 {offsets = [0, 16], sizes = [8, 8], strides = [1, 1]} : vector<8x64xbf16> to vector<8x8xbf16>
      %85 = vector.extract_strided_slice %48 {offsets = [0, 16], sizes = [8, 8], strides = [1, 1]} : vector<8x64xbf16> to vector<8x8xbf16>
      %cst_45 = arith.constant dense<0.000000e+00> : vector<8x8xf32>
      %86 = tpu.matmul %83, %84, %cst_45 {dimension_numbers = #tpu.dot_dimension_numbers<[1], [1], [0], [0], [0, 0, 1, 0], [], []>} : vector<8x8xbf16>, vector<8x8xbf16>, vector<8x8xf32> -> vector<8x8xf32>
      %cst_46 = arith.constant dense<0xFF800000> : vector<8xf32>
      %87 = vector.multi_reduction <maximumf>, %86, %cst_46 [1] : vector<8x8xf32> to vector<8xf32>
      %88 = vector.shape_cast %87 : vector<8xf32> to vector<8x1xf32>
      %89 = vector.broadcast %88 : vector<8x1xf32> to vector<8x8xf32>
      %90 = arith.subf %86, %89 : vector<8x8xf32>
      %91 = math.exp %90 : vector<8x8xf32>
      %cst_47 = arith.constant dense<0.000000e+00> : vector<8xf32>
      %92 = vector.multi_reduction <add>, %91, %cst_47 [1] : vector<8x8xf32> to vector<8xf32>
      %93 = vector.shape_cast %92 : vector<8xf32> to vector<8x1xf32>
      %94 = tpu.reciprocal %93 {approx = true} : vector<8x1xf32> -> vector<8x1xf32>
      %95 = vector.broadcast %94 : vector<8x1xf32> to vector<8x8xf32>
      %96 = arith.mulf %91, %95 : vector<8x8xf32>
      %97 = arith.truncf %96 : vector<8x8xf32> to vector<8x8xbf16>
      %cst_48 = arith.constant dense<0.000000e+00> : vector<8x8xf32>
      %98 = tpu.matmul %97, %85, %cst_48 {dimension_numbers = #tpu.dot_dimension_numbers<[1], [0], [0], [1], [0, 0, 1, 1], [], []>} : vector<8x8xbf16>, vector<8x8xbf16>, vector<8x8xf32> -> vector<8x8xf32>
      %c0_49 = arith.constant 0 : index
      %c16 = arith.constant 16 : index
      %99 = vector.load %arg24[%c0_49, %c16] : memref<8x64xf32, #tpu.memory_space<vmem>>, vector<8x8xf32>
      tpu.vector_store %arg24[%c0_49, %c16], %98 {strides = array<i32>} : memref<8x64xf32, #tpu.memory_space<vmem>>, vector<8x8xf32>,
      %100 = vector.extract_strided_slice %46 {offsets = [0, 24], sizes = [8, 8], strides = [1, 1]} : vector<8x64xbf16> to vector<8x8xbf16>
      %101 = vector.extract_strided_slice %47 {offsets = [0, 24], sizes = [8, 8], strides = [1, 1]} : vector<8x64xbf16> to vector<8x8xbf16>
      %102 = vector.extract_strided_slice %48 {offsets = [0, 24], sizes = [8, 8], strides = [1, 1]} : vector<8x64xbf16> to vector<8x8xbf16>
      %cst_50 = arith.constant dense<0.000000e+00> : vector<8x8xf32>
      %103 = tpu.matmul %100, %101, %cst_50 {dimension_numbers = #tpu.dot_dimension_numbers<[1], [1], [0], [0], [0, 0, 1, 0], [], []>} : vector<8x8xbf16>, vector<8x8xbf16>, vector<8x8xf32> -> vector<8x8xf32>
      %cst_51 = arith.constant dense<0xFF800000> : vector<8xf32>
      %104 = vector.multi_reduction <maximumf>, %103, %cst_51 [1] : vector<8x8xf32> to vector<8xf32>
      %105 = vector.shape_cast %104 : vector<8xf32> to vector<8x1xf32>
      %106 = vector.broadcast %105 : vector<8x1xf32> to vector<8x8xf32>
      %107 = arith.subf %103, %106 : vector<8x8xf32>
      %108 = math.exp %107 : vector<8x8xf32>
      %cst_52 = arith.constant dense<0.000000e+00> : vector<8xf32>
      %109 = vector.multi_reduction <add>, %108, %cst_52 [1] : vector<8x8xf32> to vector<8xf32>
      %110 = vector.shape_cast %109 : vector<8xf32> to vector<8x1xf32>
      %111 = tpu.reciprocal %110 {approx = true} : vector<8x1xf32> -> vector<8x1xf32>
      %112 = vector.broadcast %111 : vector<8x1xf32> to vector<8x8xf32>
      %113 = arith.mulf %108, %112 : vector<8x8xf32>
      %114 = arith.truncf %113 : vector<8x8xf32> to vector<8x8xbf16>
      %cst_53 = arith.constant dense<0.000000e+00> : vector<8x8xf32>
      %115 = tpu.matmul %114, %102, %cst_53 {dimension_numbers = #tpu.dot_dimension_numbers<[1], [0], [0], [1], [0, 0, 1, 1], [], []>} : vector<8x8xbf16>, vector<8x8xbf16>, vector<8x8xf32> -> vector<8x8xf32>
      %c0_54 = arith.constant 0 : index
      %c24 = arith.constant 24 : index
      %116 = vector.load %arg24[%c0_54, %c24] : memref<8x64xf32, #tpu.memory_space<vmem>>, vector<8x8xf32>
      tpu.vector_store %arg24[%c0_54, %c24], %115 {strides = array<i32>} : memref<8x64xf32, #tpu.memory_space<vmem>>, vector<8x8xf32>,
      %117 = vector.extract_strided_slice %46 {offsets = [0, 32], sizes = [8, 8], strides = [1, 1]} : vector<8x64xbf16> to vector<8x8xbf16>
      %118 = vector.extract_strided_slice %47 {offsets = [0, 32], sizes = [8, 8], strides = [1, 1]} : vector<8x64xbf16> to vector<8x8xbf16>
      %119 = vector.extract_strided_slice %48 {offsets = [0, 32], sizes = [8, 8], strides = [1, 1]} : vector<8x64xbf16> to vector<8x8xbf16>
      %cst_55 = arith.constant dense<0.000000e+00> : vector<8x8xf32>
      %120 = tpu.matmul %117, %118, %cst_55 {dimension_numbers = #tpu.dot_dimension_numbers<[1], [1], [0], [0], [0, 0, 1, 0], [], []>} : vector<8x8xbf16>, vector<8x8xbf16>, vector<8x8xf32> -> vector<8x8xf32>
      %cst_56 = arith.constant dense<0xFF800000> : vector<8xf32>
      %121 = vector.multi_reduction <maximumf>, %120, %cst_56 [1] : vector<8x8xf32> to vector<8xf32>
      %122 = vector.shape_cast %121 : vector<8xf32> to vector<8x1xf32>
      %123 = vector.broadcast %122 : vector<8x1xf32> to vector<8x8xf32>
      %124 = arith.subf %120, %123 : vector<8x8xf32>
      %125 = math.exp %124 : vector<8x8xf32>
      %cst_57 = arith.constant dense<0.000000e+00> : vector<8xf32>
      %126 = vector.multi_reduction <add>, %125, %cst_57 [1] : vector<8x8xf32> to vector<8xf32>
      %127 = vector.shape_cast %126 : vector<8xf32> to vector<8x1xf32>
      %128 = tpu.reciprocal %127 {approx = true} : vector<8x1xf32> -> vector<8x1xf32>
      %129 = vector.broadcast %128 : vector<8x1xf32> to vector<8x8xf32>
      %130 = arith.mulf %125, %129 : vector<8x8xf32>
      %131 = arith.truncf %130 : vector<8x8xf32> to vector<8x8xbf16>
      %cst_58 = arith.constant dense<0.000000e+00> : vector<8x8xf32>
      %132 = tpu.matmul %131, %119, %cst_58 {dimension_numbers = #tpu.dot_dimension_numbers<[1], [0], [0], [1], [0, 0, 1, 1], [], []>} : vector<8x8xbf16>, vector<8x8xbf16>, vector<8x8xf32> -> vector<8x8xf32>
      %c0_59 = arith.constant 0 : index
      %c32 = arith.constant 32 : index
      %133 = vector.load %arg24[%c0_59, %c32] : memref<8x64xf32, #tpu.memory_space<vmem>>, vector<8x8xf32>
      tpu.vector_store %arg24[%c0_59, %c32], %132 {strides = array<i32>} : memref<8x64xf32, #tpu.memory_space<vmem>>, vector<8x8xf32>,
      %134 = vector.extract_strided_slice %46 {offsets = [0, 40], sizes = [8, 8], strides = [1, 1]} : vector<8x64xbf16> to vector<8x8xbf16>
      %135 = vector.extract_strided_slice %47 {offsets = [0, 40], sizes = [8, 8], strides = [1, 1]} : vector<8x64xbf16> to vector<8x8xbf16>
      %136 = vector.extract_strided_slice %48 {offsets = [0, 40], sizes = [8, 8], strides = [1, 1]} : vector<8x64xbf16> to vector<8x8xbf16>
      %cst_60 = arith.constant dense<0.000000e+00> : vector<8x8xf32>
      %137 = tpu.matmul %134, %135, %cst_60 {dimension_numbers = #tpu.dot_dimension_numbers<[1], [1], [0], [0], [0, 0, 1, 0], [], []>} : vector<8x8xbf16>, vector<8x8xbf16>, vector<8x8xf32> -> vector<8x8xf32>
      %cst_61 = arith.constant dense<0xFF800000> : vector<8xf32>
      %138 = vector.multi_reduction <maximumf>, %137, %cst_61 [1] : vector<8x8xf32> to vector<8xf32>
      %139 = vector.shape_cast %138 : vector<8xf32> to vector<8x1xf32>
      %140 = vector.broadcast %139 : vector<8x1xf32> to vector<8x8xf32>
      %141 = arith.subf %137, %140 : vector<8x8xf32>
      %142 = math.exp %141 : vector<8x8xf32>
      %cst_62 = arith.constant dense<0.000000e+00> : vector<8xf32>
      %143 = vector.multi_reduction <add>, %142, %cst_62 [1] : vector<8x8xf32> to vector<8xf32>
      %144 = vector.shape_cast %143 : vector<8xf32> to vector<8x1xf32>
      %145 = tpu.reciprocal %144 {approx = true} : vector<8x1xf32> -> vector<8x1xf32>
      %146 = vector.broadcast %145 : vector<8x1xf32> to vector<8x8xf32>
      %147 = arith.mulf %142, %146 : vector<8x8xf32>
      %148 = arith.truncf %147 : vector<8x8xf32> to vector<8x8xbf16>
      %cst_63 = arith.constant dense<0.000000e+00> : vector<8x8xf32>
      %149 = tpu.matmul %148, %136, %cst_63 {dimension_numbers = #tpu.dot_dimension_numbers<[1], [0], [0], [1], [0, 0, 1, 1], [], []>} : vector<8x8xbf16>, vector<8x8xbf16>, vector<8x8xf32> -> vector<8x8xf32>
      %c0_64 = arith.constant 0 : index
      %c40 = arith.constant 40 : index
      %150 = vector.load %arg24[%c0_64, %c40] : memref<8x64xf32, #tpu.memory_space<vmem>>, vector<8x8xf32>
      tpu.vector_store %arg24[%c0_64, %c40], %149 {strides = array<i32>} : memref<8x64xf32, #tpu.memory_space<vmem>>, vector<8x8xf32>,
      %151 = vector.extract_strided_slice %46 {offsets = [0, 48], sizes = [8, 8], strides = [1, 1]} : vector<8x64xbf16> to vector<8x8xbf16>
      %152 = vector.extract_strided_slice %47 {offsets = [0, 48], sizes = [8, 8], strides = [1, 1]} : vector<8x64xbf16> to vector<8x8xbf16>
      %153 = vector.extract_strided_slice %48 {offsets = [0, 48], sizes = [8, 8], strides = [1, 1]} : vector<8x64xbf16> to vector<8x8xbf16>
      %cst_65 = arith.constant dense<0.000000e+00> : vector<8x8xf32>
      %154 = tpu.matmul %151, %152, %cst_65 {dimension_numbers = #tpu.dot_dimension_numbers<[1], [1], [0], [0], [0, 0, 1, 0], [], []>} : vector<8x8xbf16>, vector<8x8xbf16>, vector<8x8xf32> -> vector<8x8xf32>
      %cst_66 = arith.constant dense<0xFF800000> : vector<8xf32>
      %155 = vector.multi_reduction <maximumf>, %154, %cst_66 [1] : vector<8x8xf32> to vector<8xf32>
      %156 = vector.shape_cast %155 : vector<8xf32> to vector<8x1xf32>
      %157 = vector.broadcast %156 : vector<8x1xf32> to vector<8x8xf32>
      %158 = arith.subf %154, %157 : vector<8x8xf32>
      %159 = math.exp %158 : vector<8x8xf32>
      %cst_67 = arith.constant dense<0.000000e+00> : vector<8xf32>
      %160 = vector.multi_reduction <add>, %159, %cst_67 [1] : vector<8x8xf32> to vector<8xf32>
      %161 = vector.shape_cast %160 : vector<8xf32> to vector<8x1xf32>
      %162 = tpu.reciprocal %161 {approx = true} : vector<8x1xf32> -> vector<8x1xf32>
      %163 = vector.broadcast %162 : vector<8x1xf32> to vector<8x8xf32>
      %164 = arith.mulf %159, %163 : vector<8x8xf32>
      %165 = arith.truncf %164 : vector<8x8xf32> to vector<8x8xbf16>
      %cst_68 = arith.constant dense<0.000000e+00> : vector<8x8xf32>
      %166 = tpu.matmul %165, %153, %cst_68 {dimension_numbers = #tpu.dot_dimension_numbers<[1], [0], [0], [1], [0, 0, 1, 1], [], []>} : vector<8x8xbf16>, vector<8x8xbf16>, vector<8x8xf32> -> vector<8x8xf32>
      %c0_69 = arith.constant 0 : index
      %c48 = arith.constant 48 : index
      %167 = vector.load %arg24[%c0_69, %c48] : memref<8x64xf32, #tpu.memory_space<vmem>>, vector<8x8xf32>
      tpu.vector_store %arg24[%c0_69, %c48], %166 {strides = array<i32>} : memref<8x64xf32, #tpu.memory_space<vmem>>, vector<8x8xf32>,
      %168 = vector.extract_strided_slice %46 {offsets = [0, 56], sizes = [8, 8], strides = [1, 1]} : vector<8x64xbf16> to vector<8x8xbf16>
      %169 = vector.extract_strided_slice %47 {offsets = [0, 56], sizes = [8, 8], strides = [1, 1]} : vector<8x64xbf16> to vector<8x8xbf16>
      %170 = vector.extract_strided_slice %48 {offsets = [0, 56], sizes = [8, 8], strides = [1, 1]} : vector<8x64xbf16> to vector<8x8xbf16>
      %cst_70 = arith.constant dense<0.000000e+00> : vector<8x8xf32>
      %171 = tpu.matmul %168, %169, %cst_70 {dimension_numbers = #tpu.dot_dimension_numbers<[1], [1], [0], [0], [0, 0, 1, 0], [], []>} : vector<8x8xbf16>, vector<8x8xbf16>, vector<8x8xf32> -> vector<8x8xf32>
      %cst_71 = arith.constant dense<0xFF800000> : vector<8xf32>
      %172 = vector.multi_reduction <maximumf>, %171, %cst_71 [1] : vector<8x8xf32> to vector<8xf32>
      %173 = vector.shape_cast %172 : vector<8xf32> to vector<8x1xf32>
      %174 = vector.broadcast %173 : vector<8x1xf32> to vector<8x8xf32>
      %175 = arith.subf %171, %174 : vector<8x8xf32>
      %176 = math.exp %175 : vector<8x8xf32>
      %cst_72 = arith.constant dense<0.000000e+00> : vector<8xf32>
      %177 = vector.multi_reduction <add>, %176, %cst_72 [1] : vector<8x8xf32> to vector<8xf32>
      %178 = vector.shape_cast %177 : vector<8xf32> to vector<8x1xf32>
      %179 = tpu.reciprocal %178 {approx = true} : vector<8x1xf32> -> vector<8x1xf32>
      %180 = vector.broadcast %179 : vector<8x1xf32> to vector<8x8xf32>
      %181 = arith.mulf %176, %180 : vector<8x8xf32>
      %182 = arith.truncf %181 : vector<8x8xf32> to vector<8x8xbf16>
      %cst_73 = arith.constant dense<0.000000e+00> : vector<8x8xf32>
      %183 = tpu.matmul %182, %170, %cst_73 {dimension_numbers = #tpu.dot_dimension_numbers<[1], [0], [0], [1], [0, 0, 1, 1], [], []>} : vector<8x8xbf16>, vector<8x8xbf16>, vector<8x8xf32> -> vector<8x8xf32>
      %c0_74 = arith.constant 0 : index
      %c56 = arith.constant 56 : index
      %184 = vector.load %arg24[%c0_74, %c56] : memref<8x64xf32, #tpu.memory_space<vmem>>, vector<8x8xf32>
      tpu.vector_store %arg24[%c0_74, %c56], %183 {strides = array<i32>} : memref<8x64xf32, #tpu.memory_space<vmem>>, vector<8x8xf32>,
      %c0_75 = arith.constant 0 : index
      %c0_76 = arith.constant 0 : index
      %185 = vector.load %arg24[%c0_75, %c0_76] : memref<8x64xf32, #tpu.memory_space<vmem>>, vector<8x64xf32>
      %186 = arith.truncf %185 : vector<8x64xf32> to vector<8x64xbf16>
      %c0_77 = arith.constant 0 : index
      %c0_78 = arith.constant 0 : index
      %187 = vector.load %arg11[%c0_77, %c0_78] : memref<64x64xbf16, #tpu.memory_space<vmem>>, vector<64x64xbf16>
      %cst_79 = arith.constant dense<0.000000e+00> : vector<8x64xf32>
      %188 = tpu.matmul %186, %187, %cst_79 {dimension_numbers = #tpu.dot_dimension_numbers<[1], [0], [0], [1], [0, 0, 1, 1], [], []>} : vector<8x64xbf16>, vector<64x64xbf16>, vector<8x64xf32> -> vector<8x64xf32>
      %c0_80 = arith.constant 0 : index
      %c0_81 = arith.constant 0 : index
      %189 = vector.load %arg12[%c0_80, %c0_81] : memref<1x64xf32, #tpu.memory_space<vmem>>, vector<1x64xf32>
      %190 = vector.shape_cast %189 : vector<1x64xf32> to vector<64xf32>
      %191 = vector.shape_cast %190 : vector<64xf32> to vector<1x64xf32>
      %192 = vector.broadcast %191 : vector<1x64xf32> to vector<8x64xf32>
      %193 = arith.addf %188, %192 : vector<8x64xf32>
      %194 = arith.addf %35, %193 : vector<8x64xf32>
      %c0_82 = arith.constant 0 : index
      %c0_83 = arith.constant 0 : index
      %195 = vector.load %arg13[%c0_82, %c0_83] : memref<1x64xf32, #tpu.memory_space<vmem>>, vector<1x64xf32>
      %196 = vector.shape_cast %195 : vector<1x64xf32> to vector<64xf32>
      %c0_84 = arith.constant 0 : index
      %c0_85 = arith.constant 0 : index
      %197 = vector.load %arg14[%c0_84, %c0_85] : memref<1x64xf32, #tpu.memory_space<vmem>>, vector<1x64xf32>
      %198 = vector.shape_cast %197 : vector<1x64xf32> to vector<64xf32>
      %cst_86 = arith.constant dense<0.000000e+00> : vector<8xf32>
      %199 = vector.multi_reduction <add>, %194, %cst_86 [1] : vector<8x64xf32> to vector<8xf32>
      %200 = vector.shape_cast %199 : vector<8xf32> to vector<8x1xf32>
      %cst_87 = arith.constant 6.400000e+01 : f32
      %201 = vector.broadcast %cst_87 : f32 to vector<8x1xf32>
      %202 = arith.divf %200, %201 : vector<8x1xf32>
      %203 = vector.broadcast %202 : vector<8x1xf32> to vector<8x64xf32>
      %204 = arith.subf %194, %203 : vector<8x64xf32>
      %205 = arith.mulf %204, %204 : vector<8x64xf32>
      %cst_88 = arith.constant dense<0.000000e+00> : vector<8xf32>
      %206 = vector.multi_reduction <add>, %205, %cst_88 [1] : vector<8x64xf32> to vector<8xf32>
      %207 = vector.shape_cast %206 : vector<8xf32> to vector<8x1xf32>
      %cst_89 = arith.constant 6.400000e+01 : f32
      %208 = vector.broadcast %cst_89 : f32 to vector<8x1xf32>
      %209 = arith.divf %207, %208 : vector<8x1xf32>
      %cst_90 = arith.constant 9.99999974E-6 : f32
      %210 = vector.broadcast %cst_90 : f32 to vector<8x1xf32>
      %211 = arith.addf %209, %210 : vector<8x1xf32>
      %212 = math.rsqrt %211 : vector<8x1xf32>
      %213 = vector.broadcast %212 : vector<8x1xf32> to vector<8x64xf32>
      %214 = arith.mulf %204, %213 : vector<8x64xf32>
      %215 = vector.shape_cast %196 : vector<64xf32> to vector<1x64xf32>
      %216 = vector.broadcast %215 : vector<1x64xf32> to vector<8x64xf32>
      %217 = arith.mulf %214, %216 : vector<8x64xf32>
      %218 = vector.shape_cast %198 : vector<64xf32> to vector<1x64xf32>
      %219 = vector.broadcast %218 : vector<1x64xf32> to vector<8x64xf32>
      %220 = arith.addf %217, %219 : vector<8x64xf32>
      %c0_91 = arith.constant 0 : index
      %c0_92 = arith.constant 0 : index
      %221 = vector.load %arg25[%c0_91, %c0_92] : memref<8x64xf32, #tpu.memory_space<vmem>>, vector<8x64xf32>
      tpu.vector_store %arg25[%c0_91, %c0_92], %220 {strides = array<i32>} : memref<8x64xf32, #tpu.memory_space<vmem>>, vector<8x64xf32>,
      %cst_93 = arith.constant 0.000000e+00 : f32
      %222 = vector.broadcast %cst_93 : f32 to vector<8x64xf32>
      %c0_94 = arith.constant 0 : index
      %c0_95 = arith.constant 0 : index
      %223 = vector.load %arg26[%c0_94, %c0_95] : memref<8x64xf32, #tpu.memory_space<vmem>>, vector<8x64xf32>
      tpu.vector_store %arg26[%c0_94, %c0_95], %222 {strides = array<i32>} : memref<8x64xf32, #tpu.memory_space<vmem>>, vector<8x64xf32>,
    } else {
    }
    %c0 = arith.constant 0 : index
    %c0_4 = arith.constant 0 : index
    %8 = vector.load %arg25[%c0, %c0_4] : memref<8x64xf32, #tpu.memory_space<vmem>>, vector<8x64xf32>
    %9 = arith.truncf %8 : vector<8x64xf32> to vector<8x64xbf16>
    %c0_5 = arith.constant 0 : index
    %c0_6 = arith.constant 0 : index
    %10 = vector.load %arg15[%c0_5, %c0_6] : memref<64x256xbf16, #tpu.memory_space<vmem>>, vector<64x256xbf16>
    %cst = arith.constant dense<0.000000e+00> : vector<8x256xf32>
    %11 = tpu.matmul %9, %10, %cst {dimension_numbers = #tpu.dot_dimension_numbers<[1], [0], [0], [1], [0, 0, 1, 1], [], []>} : vector<8x64xbf16>, vector<64x256xbf16>, vector<8x256xf32> -> vector<8x256xf32>
    %c0_7 = arith.constant 0 : index
    %c0_8 = arith.constant 0 : index
    %12 = vector.load %arg16[%c0_7, %c0_8] : memref<1x256xf32, #tpu.memory_space<vmem>>, vector<1x256xf32>
    %13 = vector.shape_cast %12 : vector<1x256xf32> to vector<256xf32>
    %14 = vector.shape_cast %13 : vector<256xf32> to vector<1x256xf32>
    %15 = vector.broadcast %14 : vector<1x256xf32> to vector<8x256xf32>
    %16 = arith.addf %11, %15 : vector<8x256xf32>
    %cst_9 = arith.constant 0.000000e+00 : f32
    %17 = vector.broadcast %cst_9 : f32 to vector<8x256xf32>
    %18 = arith.cmpf ogt, %16, %17 : vector<8x256xf32>
    %cst_10 = arith.constant 0.000000e+00 : f32
    %19 = vector.broadcast %cst_10 : f32 to vector<8x256xf32>
    %20 = arith.minimumf %16, %19 : vector<8x256xf32>
    %21 = math.exp %20 : vector<8x256xf32>
    %cst_11 = arith.constant 1.000000e+00 : f32
    %22 = vector.broadcast %cst_11 : f32 to vector<8x256xf32>
    %23 = arith.subf %21, %22 : vector<8x256xf32>
    %24 = arith.select %18, %16, %23 : vector<8x256xi1>, vector<8x256xf32>
    %c0_12 = arith.constant 0 : index
    %c0_13 = arith.constant 0 : index
    %25 = vector.load %arg26[%c0_12, %c0_13] : memref<8x64xf32, #tpu.memory_space<vmem>>, vector<8x64xf32>
    %26 = arith.truncf %24 : vector<8x256xf32> to vector<8x256xbf16>
    %c0_14 = arith.constant 0 : index
    %c0_15 = arith.constant 0 : index
    %27 = vector.load %arg17[%c0_14, %c0_15] : memref<256x64xbf16, #tpu.memory_space<vmem>>, vector<256x64xbf16>
    %cst_16 = arith.constant dense<0.000000e+00> : vector<8x64xf32>
    %28 = tpu.matmul %26, %27, %cst_16 {dimension_numbers = #tpu.dot_dimension_numbers<[1], [0], [0], [1], [0, 0, 1, 1], [], []>} : vector<8x256xbf16>, vector<256x64xbf16>, vector<8x64xf32> -> vector<8x64xf32>
    %29 = arith.addf %25, %28 : vector<8x64xf32>
    %c0_17 = arith.constant 0 : index
    %c0_18 = arith.constant 0 : index
    %30 = vector.load %arg26[%c0_17, %c0_18] : memref<8x64xf32, #tpu.memory_space<vmem>>, vector<8x64xf32>
    tpu.vector_store %arg26[%c0_17, %c0_18], %29 {strides = array<i32>} : memref<8x64xf32, #tpu.memory_space<vmem>>, vector<8x64xf32>,
    %c0_i32_19 = arith.constant 0 : i32
    %31 = arith.cmpi eq, %arg2, %c0_i32_19 : i32
    %32 = arith.extui %31 : i1 to i32
    %c0_i32_20 = arith.constant 0 : i32
    %33 = arith.cmpi ne, %32, %c0_i32_20 : i32
    scf.if %33 {
      %c0_21 = arith.constant 0 : index
      %c0_22 = arith.constant 0 : index
      %34 = vector.load %arg25[%c0_21, %c0_22] : memref<8x64xf32, #tpu.memory_space<vmem>>, vector<8x64xf32>
      %c0_23 = arith.constant 0 : index
      %c0_24 = arith.constant 0 : index
      %35 = vector.load %arg26[%c0_23, %c0_24] : memref<8x64xf32, #tpu.memory_space<vmem>>, vector<8x64xf32>
      %36 = arith.addf %34, %35 : vector<8x64xf32>
      %c0_25 = arith.constant 0 : index
      %c0_26 = arith.constant 0 : index
      %37 = vector.load %arg18[%c0_25, %c0_26] : memref<1x64xf32, #tpu.memory_space<vmem>>, vector<1x64xf32>
      %38 = vector.shape_cast %37 : vector<1x64xf32> to vector<64xf32>
      %39 = vector.shape_cast %38 : vector<64xf32> to vector<1x64xf32>
      %40 = vector.broadcast %39 : vector<1x64xf32> to vector<8x64xf32>
      %41 = arith.addf %36, %40 : vector<8x64xf32>
      %c0_27 = arith.constant 0 : index
      %c0_28 = arith.constant 0 : index
      %42 = vector.load %arg19[%c0_27, %c0_28] : memref<1x64xf32, #tpu.memory_space<vmem>>, vector<1x64xf32>
      %43 = vector.shape_cast %42 : vector<1x64xf32> to vector<64xf32>
      %c0_29 = arith.constant 0 : index
      %c0_30 = arith.constant 0 : index
      %44 = vector.load %arg20[%c0_29, %c0_30] : memref<1x64xf32, #tpu.memory_space<vmem>>, vector<1x64xf32>
      %45 = vector.shape_cast %44 : vector<1x64xf32> to vector<64xf32>
      %cst_31 = arith.constant dense<0.000000e+00> : vector<8xf32>
      %46 = vector.multi_reduction <add>, %41, %cst_31 [1] : vector<8x64xf32> to vector<8xf32>
      %47 = vector.shape_cast %46 : vector<8xf32> to vector<8x1xf32>
      %cst_32 = arith.constant 6.400000e+01 : f32
      %48 = vector.broadcast %cst_32 : f32 to vector<8x1xf32>
      %49 = arith.divf %47, %48 : vector<8x1xf32>
      %50 = vector.broadcast %49 : vector<8x1xf32> to vector<8x64xf32>
      %51 = arith.subf %41, %50 : vector<8x64xf32>
      %52 = arith.mulf %51, %51 : vector<8x64xf32>
      %cst_33 = arith.constant dense<0.000000e+00> : vector<8xf32>
      %53 = vector.multi_reduction <add>, %52, %cst_33 [1] : vector<8x64xf32> to vector<8xf32>
      %54 = vector.shape_cast %53 : vector<8xf32> to vector<8x1xf32>
      %cst_34 = arith.constant 6.400000e+01 : f32
      %55 = vector.broadcast %cst_34 : f32 to vector<8x1xf32>
      %56 = arith.divf %54, %55 : vector<8x1xf32>
      %cst_35 = arith.constant 9.99999974E-6 : f32
      %57 = vector.broadcast %cst_35 : f32 to vector<8x1xf32>
      %58 = arith.addf %56, %57 : vector<8x1xf32>
      %59 = math.rsqrt %58 : vector<8x1xf32>
      %60 = vector.broadcast %59 : vector<8x1xf32> to vector<8x64xf32>
      %61 = arith.mulf %51, %60 : vector<8x64xf32>
      %62 = vector.shape_cast %43 : vector<64xf32> to vector<1x64xf32>
      %63 = vector.broadcast %62 : vector<1x64xf32> to vector<8x64xf32>
      %64 = arith.mulf %61, %63 : vector<8x64xf32>
      %65 = vector.shape_cast %45 : vector<64xf32> to vector<1x64xf32>
      %66 = vector.broadcast %65 : vector<1x64xf32> to vector<8x64xf32>
      %67 = arith.addf %64, %66 : vector<8x64xf32>
      %c0_36 = arith.constant 0 : index
      %c0_37 = arith.constant 0 : index
      %c0_38 = arith.constant 0 : index
      %68 = vector.load %arg21[%c0_36, %c0_37, %c0_38] : memref<1x8x64xf32, #tpu.memory_space<vmem>>, vector<1x8x64xf32>
      %69 = vector.shape_cast %68 : vector<1x8x64xf32> to vector<8x64xf32>
      %70 = vector.shape_cast %67 : vector<8x64xf32> to vector<1x8x64xf32>
      tpu.vector_store %arg21[%c0_36, %c0_37, %c0_38], %70 {strides = array<i32>} : memref<1x8x64xf32, #tpu.memory_space<vmem>>, vector<1x8x64xf32>,
    } else {
    }
    return
  }
  func.func @transform_0(%arg0: i32, %arg1: i32, %arg2: i32) -> (i32, i32, i32) {
    %c0_i32 = arith.constant 0 : i32
    %c0_i32_0 = arith.constant 0 : i32
    %c0_i32_1 = arith.constant 0 : i32
    return %arg0, %c0_i32, %c0_i32_0 : i32, i32, i32
  }
  func.func @transform_1(%arg0: i32, %arg1: i32, %arg2: i32) -> (i32, i32, i32) {
    %c0_i32 = arith.constant 0 : i32
    %c0_i32_0 = arith.constant 0 : i32
    return %arg0, %arg1, %c0_i32 : i32, i32, i32
  }
  func.func @transform_2(%arg0: i32, %arg1: i32, %arg2: i32) -> (i32, i32) {
    %c0_i32 = arith.constant 0 : i32
    %c0_i32_0 = arith.constant 0 : i32
    %c0_i32_1 = arith.constant 0 : i32
    return %c0_i32, %c0_i32_0 : i32, i32
  }
  func.func @transform_3(%arg0: i32, %arg1: i32, %arg2: i32) -> (i32, i32) {
    %c0_i32 = arith.constant 0 : i32
    %c0_i32_0 = arith.constant 0 : i32
    %c0_i32_1 = arith.constant 0 : i32
    return %c0_i32, %c0_i32_0 : i32, i32
  }
  func.func @transform_4(%arg0: i32, %arg1: i32, %arg2: i32) -> (i32, i32) {
    %c0_i32 = arith.constant 0 : i32
    %c0_i32_0 = arith.constant 0 : i32
    %c0_i32_1 = arith.constant 0 : i32
    return %c0_i32, %c0_i32_0 : i32, i32
  }
  func.func @transform_5(%arg0: i32, %arg1: i32, %arg2: i32) -> (i32, i32) {
    %c0_i32 = arith.constant 0 : i32
    %c0_i32_0 = arith.constant 0 : i32
    %c0_i32_1 = arith.constant 0 : i32
    return %c0_i32, %c0_i32_0 : i32, i32
  }
  func.func @transform_6(%arg0: i32, %arg1: i32, %arg2: i32) -> (i32, i32) {
    %c0_i32 = arith.constant 0 : i32
    %c0_i32_0 = arith.constant 0 : i32
    %c0_i32_1 = arith.constant 0 : i32
    return %c0_i32, %c0_i32_0 : i32, i32
  }
  func.func @transform_7(%arg0: i32, %arg1: i32, %arg2: i32) -> (i32, i32) {
    %c0_i32 = arith.constant 0 : i32
    %c0_i32_0 = arith.constant 0 : i32
    %c0_i32_1 = arith.constant 0 : i32
    return %c0_i32, %c0_i32_0 : i32, i32
  }
  func.func @transform_8(%arg0: i32, %arg1: i32, %arg2: i32) -> (i32, i32) {
    %c0_i32 = arith.constant 0 : i32
    %c0_i32_0 = arith.constant 0 : i32
    %c0_i32_1 = arith.constant 0 : i32
    return %c0_i32, %c0_i32_0 : i32, i32
  }
  func.func @transform_9(%arg0: i32, %arg1: i32, %arg2: i32) -> (i32, i32) {
    %c0_i32 = arith.constant 0 : i32
    %c0_i32_0 = arith.constant 0 : i32
    %c0_i32_1 = arith.constant 0 : i32
    return %c0_i32, %c0_i32_0 : i32, i32
  }
  func.func @transform_10(%arg0: i32, %arg1: i32, %arg2: i32) -> (i32, i32) {
    %c0_i32 = arith.constant 0 : i32
    %c0_i32_0 = arith.constant 0 : i32
    %c0_i32_1 = arith.constant 0 : i32
    return %c0_i32, %c0_i32_0 : i32, i32
  }
  func.func @transform_11(%arg0: i32, %arg1: i32, %arg2: i32) -> (i32, i32) {
    %c0_i32 = arith.constant 0 : i32
    %c0_i32_0 = arith.constant 0 : i32
    %c0_i32_1 = arith.constant 0 : i32
    return %c0_i32, %c0_i32_0 : i32, i32
  }
  func.func @transform_12(%arg0: i32, %arg1: i32, %arg2: i32) -> (i32, i32) {
    %c0_i32 = arith.constant 0 : i32
    %c0_i32_0 = arith.constant 0 : i32
    return %c0_i32, %arg2 : i32, i32
  }
  func.func @transform_13(%arg0: i32, %arg1: i32, %arg2: i32) -> (i32, i32) {
    %c0_i32 = arith.constant 0 : i32
    %c0_i32_0 = arith.constant 0 : i32
    return %c0_i32, %arg2 : i32, i32
  }
  func.func @transform_14(%arg0: i32, %arg1: i32, %arg2: i32) -> (i32, i32) {
    %c0_i32 = arith.constant 0 : i32
    %c0_i32_0 = arith.constant 0 : i32
    return %arg2, %c0_i32 : i32, i32
  }
  func.func @transform_15(%arg0: i32, %arg1: i32, %arg2: i32) -> (i32, i32) {
    %c0_i32 = arith.constant 0 : i32
    %c0_i32_0 = arith.constant 0 : i32
    %c0_i32_1 = arith.constant 0 : i32
    return %c0_i32, %c0_i32_0 : i32, i32
  }
  func.func @transform_16(%arg0: i32, %arg1: i32, %arg2: i32) -> (i32, i32) {
    %c0_i32 = arith.constant 0 : i32
    %c0_i32_0 = arith.constant 0 : i32
    %c0_i32_1 = arith.constant 0 : i32
    return %c0_i32, %c0_i32_0 : i32, i32
  }
  func.func @transform_17(%arg0: i32, %arg1: i32, %arg2: i32) -> (i32, i32) {
    %c0_i32 = arith.constant 0 : i32
    %c0_i32_0 = arith.constant 0 : i32
    %c0_i32_1 = arith.constant 0 : i32
    return %c0_i32, %c0_i32_0 : i32, i32
  }
  func.func @transform_18(%arg0: i32, %arg1: i32, %arg2: i32) -> (i32, i32, i32) {
    %c0_i32 = arith.constant 0 : i32
    %c0_i32_0 = arith.constant 0 : i32
    return %arg0, %arg1, %c0_i32 : i32, i32, i32
  }
}

module attributes {stable_mosaic.version = 11 : i64} {
  func.func @transformer_block_kernel(%arg0: i32, %arg1: i32, %arg2: i32, %arg3: memref<1x8x64xf32, #tpu.memory_space<vmem>>, %arg4: memref<1x8x64xf32, #tpu.memory_space<vmem>>, %arg5: memref<64x64xbf16, #tpu.memory_space<vmem>>, %arg6: memref<1x64xf32, #tpu.memory_space<vmem>>, %arg7: memref<64x64xbf16, #tpu.memory_space<vmem>>, %arg8: memref<1x64xf32, #tpu.memory_space<vmem>>, %arg9: memref<64x64xbf16, #tpu.memory_space<vmem>>, %arg10: memref<1x64xf32, #tpu.memory_space<vmem>>, %arg11: memref<64x64xbf16, #tpu.memory_space<vmem>>, %arg12: memref<1x64xf32, #tpu.memory_space<vmem>>, %arg13: memref<1x64xf32, #tpu.memory_space<vmem>>, %arg14: memref<1x64xf32, #tpu.memory_space<vmem>>, %arg15: memref<64x256xbf16, #tpu.memory_space<vmem>>, %arg16: memref<1x256xf32, #tpu.memory_space<vmem>>, %arg17: memref<256x64xbf16, #tpu.memory_space<vmem>>, %arg18: memref<1x64xf32, #tpu.memory_space<vmem>>, %arg19: memref<1x64xf32, #tpu.memory_space<vmem>>, %arg20: memref<1x64xf32, #tpu.memory_space<vmem>>, %arg21: memref<1x8x64xf32, #tpu.memory_space<vmem>>, %arg22: memref<8x64xbf16, #tpu.memory_space<vmem>>, %arg23: memref<8x64xbf16, #tpu.memory_space<vmem>>, %arg24: memref<8x64xf32, #tpu.memory_space<vmem>>, %arg25: memref<8x64xf32, #tpu.memory_space<vmem>>, %arg26: memref<8x64xf32, #tpu.memory_space<vmem>>) attributes {dimension_semantics = [#tpu.dimension_semantics<parallel>, #tpu.dimension_semantics<arbitrary>, #tpu.dimension_semantics<arbitrary>], iteration_bounds = array<i64: 2, 1, 1>, scalar_prefetch = 0 : i64, scratch_operands = 5 : i64, tpu.core_type = #tpu.core_type<tc>, window_params = [{transform_indices = @transform_0, window_bounds = array<i64: 1, 8, 64>}, {transform_indices = @transform_1, window_bounds = array<i64: 1, 8, 64>}, {pipeline_mode = #tpu.pipeline_mode<synchronous>, transform_indices = @transform_2, window_bounds = array<i64: 64, 64>}, {pipeline_mode = #tpu.pipeline_mode<synchronous>, transform_indices = @transform_3, window_bounds = array<i64: 1, 64>}, {pipeline_mode = #tpu.pipeline_mode<synchronous>, transform_indices = @transform_4, window_bounds = array<i64: 64, 64>}, {pipeline_mode = #tpu.pipeline_mode<synchronous>, transform_indices = @transform_5, window_bounds = array<i64: 1, 64>}, {pipeline_mode = #tpu.pipeline_mode<synchronous>, transform_indices = @transform_6, window_bounds = array<i64: 64, 64>}, {pipeline_mode = #tpu.pipeline_mode<synchronous>, transform_indices = @transform_7, window_bounds = array<i64: 1, 64>}, {pipeline_mode = #tpu.pipeline_mode<synchronous>, transform_indices = @transform_8, window_bounds = array<i64: 64, 64>}, {pipeline_mode = #tpu.pipeline_mode<synchronous>, transform_indices = @transform_9, window_bounds = array<i64: 1, 64>}, {pipeline_mode = #tpu.pipeline_mode<synchronous>, transform_indices = @transform_10, window_bounds = array<i64: 1, 64>}, {pipeline_mode = #tpu.pipeline_mode<synchronous>, transform_indices = @transform_11, window_bounds = array<i64: 1, 64>}, {transform_indices = @transform_12, window_bounds = array<i64: 64, 256>}, {transform_indices = @transform_13, window_bounds = array<i64: 1, 256>}, {transform_indices = @transform_14, window_bounds = array<i64: 256, 64>}, {pipeline_mode = #tpu.pipeline_mode<synchronous>, transform_indices = @transform_15, window_bounds = array<i64: 1, 64>}, {pipeline_mode = #tpu.pipeline_mode<synchronous>, transform_indices = @transform_16, window_bounds = array<i64: 1, 64>}, {pipeline_mode = #tpu.pipeline_mode<synchronous>, transform_indices = @transform_17, window_bounds = array<i64: 1, 64>}, {transform_indices = @transform_18, window_bounds = array<i64: 1, 8, 64>}]} {
    %c0_i32 = arith.constant 0 : i32
    %0 = arith.cmpi eq, %arg1, %c0_i32 : i32
    %c0_i32_0 = arith.constant 0 : i32
    %1 = arith.cmpi eq, %arg2, %c0_i32_0 : i32
    %2 = arith.andi %0, %1 : i1
    %3 = arith.extui %2 : i1 to i32
    %c0_i32_1 = arith.constant 0 : i32
    %4 = arith.cmpi ne, %3, %c0_i32_1 : i32
    scf.if %4 {
      %c0_21 = arith.constant 0 : index
      %c0_22 = arith.constant 0 : index
      %c0_23 = arith.constant 0 : index
      %34 = vector.load %arg3[%c0_21, %c0_22, %c0_23] : memref<1x8x64xf32, #tpu.memory_space<vmem>>, vector<1x8x64xf32>
      %35 = vector.shape_cast %34 : vector<1x8x64xf32> to vector<8x64xf32>
      %36 = arith.truncf %35 : vector<8x64xf32> to vector<8x64xbf16>
      %c0_24 = arith.constant 0 : index
      %c0_25 = arith.constant 0 : index
      %37 = vector.load %arg7[%c0_24, %c0_25] : memref<64x64xbf16, #tpu.memory_space<vmem>>, vector<64x64xbf16>
      %cst_26 = arith.constant dense<0.000000e+00> : vector<8x64xf32>
      %38 = tpu.matmul %36, %37, %cst_26 {dimension_numbers = #tpu.dot_dimension_numbers<[1], [0], [0], [1], [0, 0, 1, 1], [], []>} : vector<8x64xbf16>, vector<64x64xbf16>, vector<8x64xf32> -> vector<8x64xf32>
      %c0_27 = arith.constant 0 : index
      %c0_28 = arith.constant 0 : index
      %39 = vector.load %arg8[%c0_27, %c0_28] : memref<1x64xf32, #tpu.memory_space<vmem>>, vector<1x64xf32>
      %40 = vector.shape_cast %39 : vector<1x64xf32> to vector<64xf32>
      %41 = vector.shape_cast %40 : vector<64xf32> to vector<1x64xf32>
      %42 = vector.broadcast %41 : vector<1x64xf32> to vector<8x64xf32>
      %43 = arith.addf %38, %42 : vector<8x64xf32>
      %c0_29 = arith.constant 0 : index
      %c0_30 = arith.constant 0 : index
      %44 = vector.load %arg9[%c0_29, %c0_30] : memref<64x64xbf16, #tpu.memory_space<vmem>>, vector<64x64xbf16>
      %cst_31 = arith.constant dense<0.000000e+00> : vector<8x64xf32>
      %45 = tpu.matmul %36, %44, %cst_31 {dimension_numbers = #tpu.dot_dimension_numbers<[1], [0], [0], [1], [0, 0, 1, 1], [], []>} : vector<8x64xbf16>, vector<64x64xbf16>, vector<8x64xf32> -> vector<8x64xf32>
      %c0_32 = arith.constant 0 : index
      %c0_33 = arith.constant 0 : index
      %46 = vector.load %arg10[%c0_32, %c0_33] : memref<1x64xf32, #tpu.memory_space<vmem>>, vector<1x64xf32>
      %47 = vector.shape_cast %46 : vector<1x64xf32> to vector<64xf32>
      %48 = vector.shape_cast %47 : vector<64xf32> to vector<1x64xf32>
      %49 = vector.broadcast %48 : vector<1x64xf32> to vector<8x64xf32>
      %50 = arith.addf %45, %49 : vector<8x64xf32>
      %51 = arith.truncf %43 : vector<8x64xf32> to vector<8x64xbf16>
      %c0_34 = arith.constant 0 : index
      %c0_35 = arith.constant 0 : index
      %52 = vector.load %arg22[%c0_34, %c0_35] : memref<8x64xbf16, #tpu.memory_space<vmem>>, vector<8x64xbf16>
      tpu.vector_store %arg22[%c0_34, %c0_35], %51 {strides = array<i32>} : memref<8x64xbf16, #tpu.memory_space<vmem>>, vector<8x64xbf16>,
      %53 = arith.truncf %50 : vector<8x64xf32> to vector<8x64xbf16>
      %c0_36 = arith.constant 0 : index
      %c0_37 = arith.constant 0 : index
      %54 = vector.load %arg23[%c0_36, %c0_37] : memref<8x64xbf16, #tpu.memory_space<vmem>>, vector<8x64xbf16>
      tpu.vector_store %arg23[%c0_36, %c0_37], %53 {strides = array<i32>} : memref<8x64xbf16, #tpu.memory_space<vmem>>, vector<8x64xbf16>,
    } else {
    }
    %c0_i32_2 = arith.constant 0 : i32
    %5 = arith.cmpi eq, %arg2, %c0_i32_2 : i32
    %6 = arith.extui %5 : i1 to i32
    %c0_i32_3 = arith.constant 0 : i32
    %7 = arith.cmpi ne, %6, %c0_i32_3 : i32
    scf.if %7 {
      %c0_21 = arith.constant 0 : index
      %c0_22 = arith.constant 0 : index
      %c0_23 = arith.constant 0 : index
      %34 = vector.load %arg4[%c0_21, %c0_22, %c0_23] : memref<1x8x64xf32, #tpu.memory_space<vmem>>, vector<1x8x64xf32>
      %35 = vector.shape_cast %34 : vector<1x8x64xf32> to vector<8x64xf32>
      %36 = arith.truncf %35 : vector<8x64xf32> to vector<8x64xbf16>
      %c0_24 = arith.constant 0 : index
      %c0_25 = arith.constant 0 : index
      %37 = vector.load %arg5[%c0_24, %c0_25] : memref<64x64xbf16, #tpu.memory_space<vmem>>, vector<64x64xbf16>
      %cst_26 = arith.constant dense<0.000000e+00> : vector<8x64xf32>
      %38 = tpu.matmul %36, %37, %cst_26 {dimension_numbers = #tpu.dot_dimension_numbers<[1], [0], [0], [1], [0, 0, 1, 1], [], []>} : vector<8x64xbf16>, vector<64x64xbf16>, vector<8x64xf32> -> vector<8x64xf32>
      %c0_27 = arith.constant 0 : index
      %c0_28 = arith.constant 0 : index
      %39 = vector.load %arg6[%c0_27, %c0_28] : memref<1x64xf32, #tpu.memory_space<vmem>>, vector<1x64xf32>
      %40 = vector.shape_cast %39 : vector<1x64xf32> to vector<64xf32>
      %41 = vector.shape_cast %40 : vector<64xf32> to vector<1x64xf32>
      %42 = vector.broadcast %41 : vector<1x64xf32> to vector<8x64xf32>
      %43 = arith.addf %38, %42 : vector<8x64xf32>
      %cst_29 = arith.constant 0.353553385 : f32
      %44 = vector.broadcast %cst_29 : f32 to vector<8x64xf32>
      %45 = arith.mulf %43, %44 : vector<8x64xf32>
      %46 = arith.truncf %45 : vector<8x64xf32> to vector<8x64xbf16>
      %c0_30 = arith.constant 0 : index
      %c0_31 = arith.constant 0 : index
      %47 = vector.load %arg22[%c0_30, %c0_31] : memref<8x64xbf16, #tpu.memory_space<vmem>>, vector<8x64xbf16>
      %c0_32 = arith.constant 0 : index
      %c0_33 = arith.constant 0 : index
      %48 = vector.load %arg23[%c0_32, %c0_33] : memref<8x64xbf16, #tpu.memory_space<vmem>>, vector<8x64xbf16>
      %49 = vector.extract_strided_slice %46 {offsets = [0, 0], sizes = [8, 8], strides = [1, 1]} : vector<8x64xbf16> to vector<8x8xbf16>
      %50 = vector.extract_strided_slice %47 {offsets = [0, 0], sizes = [8, 8], strides = [1, 1]} : vector<8x64xbf16> to vector<8x8xbf16>
      %51 = vector.extract_strided_slice %48 {offsets = [0, 0], sizes = [8, 8], strides = [1, 1]} : vector<8x64xbf16> to vector<8x8xbf16>
      %cst_34 = arith.constant dense<0.000000e+00> : vector<8x8xf32>
      %52 = tpu.matmul %49, %50, %cst_34 {dimension_numbers = #tpu.dot_dimension_numbers<[1], [1], [0], [0], [0, 0, 1, 0], [], []>} : vector<8x8xbf16>, vector<8x8xbf16>, vector<8x8xf32> -> vector<8x8xf32>
      %cst_35 = arith.constant dense<0xFF800000> : vector<8xf32>
      %53 = vector.multi_reduction <maximumf>, %52, %cst_35 [1] : vector<8x8xf32> to vector<8xf32>
      %54 = vector.shape_cast %53 : vector<8xf32> to vector<8x1xf32>
      %55 = vector.broadcast %54 : vector<8x1xf32> to vector<8x8xf32>
      %56 = arith.subf %52, %55 : vector<8x8xf32>
      %57 = math.exp %56 : vector<8x8xf32>
      %cst_36 = arith.constant dense<0.000000e+00> : vector<8xf32>
      %58 = vector.multi_reduction <add>, %57, %cst_36 [1] : vector<8x8xf32> to vector<8xf32>
      %59 = vector.shape_cast %58 : vector<8xf32> to vector<8x1xf32>
      %60 = tpu.reciprocal %59 {approx = true} : vector<8x1xf32> -> vector<8x1xf32>
      %61 = vector.broadcast %60 : vector<8x1xf32> to vector<8x8xf32>
      %62 = arith.mulf %57, %61 : vector<8x8xf32>
      %63 = arith.truncf %62 : vector<8x8xf32> to vector<8x8xbf16>
      %cst_37 = arith.constant dense<0.000000e+00> : vector<8x8xf32>
      %64 = tpu.matmul %63, %51, %cst_37 {dimension_numbers = #tpu.dot_dimension_numbers<[1], [0], [0], [1], [0, 0, 1, 1], [], []>} : vector<8x8xbf16>, vector<8x8xbf16>, vector<8x8xf32> -> vector<8x8xf32>
      %c0_38 = arith.constant 0 : index
      %c0_39 = arith.constant 0 : index
      %65 = vector.load %arg24[%c0_38, %c0_39] : memref<8x64xf32, #tpu.memory_space<vmem>>, vector<8x8xf32>
      tpu.vector_store %arg24[%c0_38, %c0_39], %64 {strides = array<i32>} : memref<8x64xf32, #tpu.memory_space<vmem>>, vector<8x8xf32>,
      %66 = vector.extract_strided_slice %46 {offsets = [0, 8], sizes = [8, 8], strides = [1, 1]} : vector<8x64xbf16> to vector<8x8xbf16>
      %67 = vector.extract_strided_slice %47 {offsets = [0, 8], sizes = [8, 8], strides = [1, 1]} : vector<8x64xbf16> to vector<8x8xbf16>
      %68 = vector.extract_strided_slice %48 {offsets = [0, 8], sizes = [8, 8], strides = [1, 1]} : vector<8x64xbf16> to vector<8x8xbf16>
      %cst_40 = arith.constant dense<0.000000e+00> : vector<8x8xf32>
      %69 = tpu.matmul %66, %67, %cst_40 {dimension_numbers = #tpu.dot_dimension_numbers<[1], [1], [0], [0], [0, 0, 1, 0], [], []>} : vector<8x8xbf16>, vector<8x8xbf16>, vector<8x8xf32> -> vector<8x8xf32>
      %cst_41 = arith.constant dense<0xFF800000> : vector<8xf32>
      %70 = vector.multi_reduction <maximumf>, %69, %cst_41 [1] : vector<8x8xf32> to vector<8xf32>
      %71 = vector.shape_cast %70 : vector<8xf32> to vector<8x1xf32>
      %72 = vector.broadcast %71 : vector<8x1xf32> to vector<8x8xf32>
      %73 = arith.subf %69, %72 : vector<8x8xf32>
      %74 = math.exp %73 : vector<8x8xf32>
      %cst_42 = arith.constant dense<0.000000e+00> : vector<8xf32>
      %75 = vector.multi_reduction <add>, %74, %cst_42 [1] : vector<8x8xf32> to vector<8xf32>
      %76 = vector.shape_cast %75 : vector<8xf32> to vector<8x1xf32>
      %77 = tpu.reciprocal %76 {approx = true} : vector<8x1xf32> -> vector<8x1xf32>
      %78 = vector.broadcast %77 : vector<8x1xf32> to vector<8x8xf32>
      %79 = arith.mulf %74, %78 : vector<8x8xf32>
      %80 = arith.truncf %79 : vector<8x8xf32> to vector<8x8xbf16>
      %cst_43 = arith.constant dense<0.000000e+00> : vector<8x8xf32>
      %81 = tpu.matmul %80, %68, %cst_43 {dimension_numbers = #tpu.dot_dimension_numbers<[1], [0], [0], [1], [0, 0, 1, 1], [], []>} : vector<8x8xbf16>, vector<8x8xbf16>, vector<8x8xf32> -> vector<8x8xf32>
      %c0_44 = arith.constant 0 : index
      %c8 = arith.constant 8 : index
      %82 = vector.load %arg24[%c0_44, %c8] : memref<8x64xf32, #tpu.memory_space<vmem>>, vector<8x8xf32>
      tpu.vector_store %arg24[%c0_44, %c8], %81 {strides = array<i32>} : memref<8x64xf32, #tpu.memory_space<vmem>>, vector<8x8xf32>,
      %83 = vector.extract_strided_slice %46 {offsets = [0, 16], sizes = [8, 8], strides = [1, 1]} : vector<8x64xbf16> to vector<8x8xbf16>
      %84 = vector.extract_strided_slice %47 {offsets = [0, 16], sizes = [8, 8], strides = [1, 1]} : vector<8x64xbf16> to vector<8x8xbf16>
      %85 = vector.extract_strided_slice %48 {offsets = [0, 16], sizes = [8, 8], strides = [1, 1]} : vector<8x64xbf16> to vector<8x8xbf16>
      %cst_45 = arith.constant dense<0.000000e+00> : vector<8x8xf32>
      %86 = tpu.matmul %83, %84, %cst_45 {dimension_numbers = #tpu.dot_dimension_numbers<[1], [1], [0], [0], [0, 0, 1, 0], [], []>} : vector<8x8xbf16>, vector<8x8xbf16>, vector<8x8xf32> -> vector<8x8xf32>
      %cst_46 = arith.constant dense<0xFF800000> : vector<8xf32>
      %87 = vector.multi_reduction <maximumf>, %86, %cst_46 [1] : vector<8x8xf32> to vector<8xf32>
      %88 = vector.shape_cast %87 : vector<8xf32> to vector<8x1xf32>
      %89 = vector.broadcast %88 : vector<8x1xf32> to vector<8x8xf32>
      %90 = arith.subf %86, %89 : vector<8x8xf32>
      %91 = math.exp %90 : vector<8x8xf32>
      %cst_47 = arith.constant dense<0.000000e+00> : vector<8xf32>
      %92 = vector.multi_reduction <add>, %91, %cst_47 [1] : vector<8x8xf32> to vector<8xf32>
      %93 = vector.shape_cast %92 : vector<8xf32> to vector<8x1xf32>
      %94 = tpu.reciprocal %93 {approx = true} : vector<8x1xf32> -> vector<8x1xf32>
      %95 = vector.broadcast %94 : vector<8x1xf32> to vector<8x8xf32>
      %96 = arith.mulf %91, %95 : vector<8x8xf32>
      %97 = arith.truncf %96 : vector<8x8xf32> to vector<8x8xbf16>
      %cst_48 = arith.constant dense<0.000000e+00> : vector<8x8xf32>
      %98 = tpu.matmul %97, %85, %cst_48 {dimension_numbers = #tpu.dot_dimension_numbers<[1], [0], [0], [1], [0, 0, 1, 1], [], []>} : vector<8x8xbf16>, vector<8x8xbf16>, vector<8x8xf32> -> vector<8x8xf32>
      %c0_49 = arith.constant 0 : index
      %c16 = arith.constant 16 : index
      %99 = vector.load %arg24[%c0_49, %c16] : memref<8x64xf32, #tpu.memory_space<vmem>>, vector<8x8xf32>
      tpu.vector_store %arg24[%c0_49, %c16], %98 {strides = array<i32>} : memref<8x64xf32, #tpu.memory_space<vmem>>, vector<8x8xf32>,
      %100 = vector.extract_strided_slice %46 {offsets = [0, 24], sizes = [8, 8], strides = [1, 1]} : vector<8x64xbf16> to vector<8x8xbf16>
      %101 = vector.extract_strided_slice %47 {offsets = [0, 24], sizes = [8, 8], strides = [1, 1]} : vector<8x64xbf16> to vector<8x8xbf16>
      %102 = vector.extract_strided_slice %48 {offsets = [0, 24], sizes = [8, 8], strides = [1, 1]} : vector<8x64xbf16> to vector<8x8xbf16>
      %cst_50 = arith.constant dense<0.000000e+00> : vector<8x8xf32>
      %103 = tpu.matmul %100, %101, %cst_50 {dimension_numbers = #tpu.dot_dimension_numbers<[1], [1], [0], [0], [0, 0, 1, 0], [], []>} : vector<8x8xbf16>, vector<8x8xbf16>, vector<8x8xf32> -> vector<8x8xf32>
      %cst_51 = arith.constant dense<0xFF800000> : vector<8xf32>
      %104 = vector.multi_reduction <maximumf>, %103, %cst_51 [1] : vector<8x8xf32> to vector<8xf32>
      %105 = vector.shape_cast %104 : vector<8xf32> to vector<8x1xf32>
      %106 = vector.broadcast %105 : vector<8x1xf32> to vector<8x8xf32>
      %107 = arith.subf %103, %106 : vector<8x8xf32>
      %108 = math.exp %107 : vector<8x8xf32>
      %cst_52 = arith.constant dense<0.000000e+00> : vector<8xf32>
      %109 = vector.multi_reduction <add>, %108, %cst_52 [1] : vector<8x8xf32> to vector<8xf32>
      %110 = vector.shape_cast %109 : vector<8xf32> to vector<8x1xf32>
      %111 = tpu.reciprocal %110 {approx = true} : vector<8x1xf32> -> vector<8x1xf32>
      %112 = vector.broadcast %111 : vector<8x1xf32> to vector<8x8xf32>
      %113 = arith.mulf %108, %112 : vector<8x8xf32>
      %114 = arith.truncf %113 : vector<8x8xf32> to vector<8x8xbf16>
      %cst_53 = arith.constant dense<0.000000e+00> : vector<8x8xf32>
      %115 = tpu.matmul %114, %102, %cst_53 {dimension_numbers = #tpu.dot_dimension_numbers<[1], [0], [0], [1], [0, 0, 1, 1], [], []>} : vector<8x8xbf16>, vector<8x8xbf16>, vector<8x8xf32> -> vector<8x8xf32>
      %c0_54 = arith.constant 0 : index
      %c24 = arith.constant 24 : index
      %116 = vector.load %arg24[%c0_54, %c24] : memref<8x64xf32, #tpu.memory_space<vmem>>, vector<8x8xf32>
      tpu.vector_store %arg24[%c0_54, %c24], %115 {strides = array<i32>} : memref<8x64xf32, #tpu.memory_space<vmem>>, vector<8x8xf32>,
      %117 = vector.extract_strided_slice %46 {offsets = [0, 32], sizes = [8, 8], strides = [1, 1]} : vector<8x64xbf16> to vector<8x8xbf16>
      %118 = vector.extract_strided_slice %47 {offsets = [0, 32], sizes = [8, 8], strides = [1, 1]} : vector<8x64xbf16> to vector<8x8xbf16>
      %119 = vector.extract_strided_slice %48 {offsets = [0, 32], sizes = [8, 8], strides = [1, 1]} : vector<8x64xbf16> to vector<8x8xbf16>
      %cst_55 = arith.constant dense<0.000000e+00> : vector<8x8xf32>
      %120 = tpu.matmul %117, %118, %cst_55 {dimension_numbers = #tpu.dot_dimension_numbers<[1], [1], [0], [0], [0, 0, 1, 0], [], []>} : vector<8x8xbf16>, vector<8x8xbf16>, vector<8x8xf32> -> vector<8x8xf32>
      %cst_56 = arith.constant dense<0xFF800000> : vector<8xf32>
      %121 = vector.multi_reduction <maximumf>, %120, %cst_56 [1] : vector<8x8xf32> to vector<8xf32>
      %122 = vector.shape_cast %121 : vector<8xf32> to vector<8x1xf32>
      %123 = vector.broadcast %122 : vector<8x1xf32> to vector<8x8xf32>
      %124 = arith.subf %120, %123 : vector<8x8xf32>
      %125 = math.exp %124 : vector<8x8xf32>
      %cst_57 = arith.constant dense<0.000000e+00> : vector<8xf32>
      %126 = vector.multi_reduction <add>, %125, %cst_57 [1] : vector<8x8xf32> to vector<8xf32>
      %127 = vector.shape_cast %126 : vector<8xf32> to vector<8x1xf32>
      %128 = tpu.reciprocal %127 {approx = true} : vector<8x1xf32> -> vector<8x1xf32>
      %129 = vector.broadcast %128 : vector<8x1xf32> to vector<8x8xf32>
      %130 = arith.mulf %125, %129 : vector<8x8xf32>
      %131 = arith.truncf %130 : vector<8x8xf32> to vector<8x8xbf16>
      %cst_58 = arith.constant dense<0.000000e+00> : vector<8x8xf32>
      %132 = tpu.matmul %131, %119, %cst_58 {dimension_numbers = #tpu.dot_dimension_numbers<[1], [0], [0], [1], [0, 0, 1, 1], [], []>} : vector<8x8xbf16>, vector<8x8xbf16>, vector<8x8xf32> -> vector<8x8xf32>
      %c0_59 = arith.constant 0 : index
      %c32 = arith.constant 32 : index
      %133 = vector.load %arg24[%c0_59, %c32] : memref<8x64xf32, #tpu.memory_space<vmem>>, vector<8x8xf32>
      tpu.vector_store %arg24[%c0_59, %c32], %132 {strides = array<i32>} : memref<8x64xf32, #tpu.memory_space<vmem>>, vector<8x8xf32>,
      %134 = vector.extract_strided_slice %46 {offsets = [0, 40], sizes = [8, 8], strides = [1, 1]} : vector<8x64xbf16> to vector<8x8xbf16>
      %135 = vector.extract_strided_slice %47 {offsets = [0, 40], sizes = [8, 8], strides = [1, 1]} : vector<8x64xbf16> to vector<8x8xbf16>
      %136 = vector.extract_strided_slice %48 {offsets = [0, 40], sizes = [8, 8], strides = [1, 1]} : vector<8x64xbf16> to vector<8x8xbf16>
      %cst_60 = arith.constant dense<0.000000e+00> : vector<8x8xf32>
      %137 = tpu.matmul %134, %135, %cst_60 {dimension_numbers = #tpu.dot_dimension_numbers<[1], [1], [0], [0], [0, 0, 1, 0], [], []>} : vector<8x8xbf16>, vector<8x8xbf16>, vector<8x8xf32> -> vector<8x8xf32>
      %cst_61 = arith.constant dense<0xFF800000> : vector<8xf32>
      %138 = vector.multi_reduction <maximumf>, %137, %cst_61 [1] : vector<8x8xf32> to vector<8xf32>
      %139 = vector.shape_cast %138 : vector<8xf32> to vector<8x1xf32>
      %140 = vector.broadcast %139 : vector<8x1xf32> to vector<8x8xf32>
      %141 = arith.subf %137, %140 : vector<8x8xf32>
      %142 = math.exp %141 : vector<8x8xf32>
      %cst_62 = arith.constant dense<0.000000e+00> : vector<8xf32>
      %143 = vector.multi_reduction <add>, %142, %cst_62 [1] : vector<8x8xf32> to vector<8xf32>
      %144 = vector.shape_cast %143 : vector<8xf32> to vector<8x1xf32>
      %145 = tpu.reciprocal %144 {approx = true} : vector<8x1xf32> -> vector<8x1xf32>
      %146 = vector.broadcast %145 : vector<8x1xf32> to vector<8x8xf32>
      %147 = arith.mulf %142, %146 : vector<8x8xf32>
      %148 = arith.truncf %147 : vector<8x8xf32> to vector<8x8xbf16>
      %cst_63 = arith.constant dense<0.000000e+00> : vector<8x8xf32>
      %149 = tpu.matmul %148, %136, %cst_63 {dimension_numbers = #tpu.dot_dimension_numbers<[1], [0], [0], [1], [0, 0, 1, 1], [], []>} : vector<8x8xbf16>, vector<8x8xbf16>, vector<8x8xf32> -> vector<8x8xf32>
      %c0_64 = arith.constant 0 : index
      %c40 = arith.constant 40 : index
      %150 = vector.load %arg24[%c0_64, %c40] : memref<8x64xf32, #tpu.memory_space<vmem>>, vector<8x8xf32>
      tpu.vector_store %arg24[%c0_64, %c40], %149 {strides = array<i32>} : memref<8x64xf32, #tpu.memory_space<vmem>>, vector<8x8xf32>,
      %151 = vector.extract_strided_slice %46 {offsets = [0, 48], sizes = [8, 8], strides = [1, 1]} : vector<8x64xbf16> to vector<8x8xbf16>
      %152 = vector.extract_strided_slice %47 {offsets = [0, 48], sizes = [8, 8], strides = [1, 1]} : vector<8x64xbf16> to vector<8x8xbf16>
      %153 = vector.extract_strided_slice %48 {offsets = [0, 48], sizes = [8, 8], strides = [1, 1]} : vector<8x64xbf16> to vector<8x8xbf16>
      %cst_65 = arith.constant dense<0.000000e+00> : vector<8x8xf32>
      %154 = tpu.matmul %151, %152, %cst_65 {dimension_numbers = #tpu.dot_dimension_numbers<[1], [1], [0], [0], [0, 0, 1, 0], [], []>} : vector<8x8xbf16>, vector<8x8xbf16>, vector<8x8xf32> -> vector<8x8xf32>
      %cst_66 = arith.constant dense<0xFF800000> : vector<8xf32>
      %155 = vector.multi_reduction <maximumf>, %154, %cst_66 [1] : vector<8x8xf32> to vector<8xf32>
      %156 = vector.shape_cast %155 : vector<8xf32> to vector<8x1xf32>
      %157 = vector.broadcast %156 : vector<8x1xf32> to vector<8x8xf32>
      %158 = arith.subf %154, %157 : vector<8x8xf32>
      %159 = math.exp %158 : vector<8x8xf32>
      %cst_67 = arith.constant dense<0.000000e+00> : vector<8xf32>
      %160 = vector.multi_reduction <add>, %159, %cst_67 [1] : vector<8x8xf32> to vector<8xf32>
      %161 = vector.shape_cast %160 : vector<8xf32> to vector<8x1xf32>
      %162 = tpu.reciprocal %161 {approx = true} : vector<8x1xf32> -> vector<8x1xf32>
      %163 = vector.broadcast %162 : vector<8x1xf32> to vector<8x8xf32>
      %164 = arith.mulf %159, %163 : vector<8x8xf32>
      %165 = arith.truncf %164 : vector<8x8xf32> to vector<8x8xbf16>
      %cst_68 = arith.constant dense<0.000000e+00> : vector<8x8xf32>
      %166 = tpu.matmul %165, %153, %cst_68 {dimension_numbers = #tpu.dot_dimension_numbers<[1], [0], [0], [1], [0, 0, 1, 1], [], []>} : vector<8x8xbf16>, vector<8x8xbf16>, vector<8x8xf32> -> vector<8x8xf32>
      %c0_69 = arith.constant 0 : index
      %c48 = arith.constant 48 : index
      %167 = vector.load %arg24[%c0_69, %c48] : memref<8x64xf32, #tpu.memory_space<vmem>>, vector<8x8xf32>
      tpu.vector_store %arg24[%c0_69, %c48], %166 {strides = array<i32>} : memref<8x64xf32, #tpu.memory_space<vmem>>, vector<8x8xf32>,
      %168 = vector.extract_strided_slice %46 {offsets = [0, 56], sizes = [8, 8], strides = [1, 1]} : vector<8x64xbf16> to vector<8x8xbf16>
      %169 = vector.extract_strided_slice %47 {offsets = [0, 56], sizes = [8, 8], strides = [1, 1]} : vector<8x64xbf16> to vector<8x8xbf16>
      %170 = vector.extract_strided_slice %48 {offsets = [0, 56], sizes = [8, 8], strides = [1, 1]} : vector<8x64xbf16> to vector<8x8xbf16>
      %cst_70 = arith.constant dense<0.000000e+00> : vector<8x8xf32>
      %171 = tpu.matmul %168, %169, %cst_70 {dimension_numbers = #tpu.dot_dimension_numbers<[1], [1], [0], [0], [0, 0, 1, 0], [], []>} : vector<8x8xbf16>, vector<8x8xbf16>, vector<8x8xf32> -> vector<8x8xf32>
      %cst_71 = arith.constant dense<0xFF800000> : vector<8xf32>
      %172 = vector.multi_reduction <maximumf>, %171, %cst_71 [1] : vector<8x8xf32> to vector<8xf32>
      %173 = vector.shape_cast %172 : vector<8xf32> to vector<8x1xf32>
      %174 = vector.broadcast %173 : vector<8x1xf32> to vector<8x8xf32>
      %175 = arith.subf %171, %174 : vector<8x8xf32>
      %176 = math.exp %175 : vector<8x8xf32>
      %cst_72 = arith.constant dense<0.000000e+00> : vector<8xf32>
      %177 = vector.multi_reduction <add>, %176, %cst_72 [1] : vector<8x8xf32> to vector<8xf32>
      %178 = vector.shape_cast %177 : vector<8xf32> to vector<8x1xf32>
      %179 = tpu.reciprocal %178 {approx = true} : vector<8x1xf32> -> vector<8x1xf32>
      %180 = vector.broadcast %179 : vector<8x1xf32> to vector<8x8xf32>
      %181 = arith.mulf %176, %180 : vector<8x8xf32>
      %182 = arith.truncf %181 : vector<8x8xf32> to vector<8x8xbf16>
      %cst_73 = arith.constant dense<0.000000e+00> : vector<8x8xf32>
      %183 = tpu.matmul %182, %170, %cst_73 {dimension_numbers = #tpu.dot_dimension_numbers<[1], [0], [0], [1], [0, 0, 1, 1], [], []>} : vector<8x8xbf16>, vector<8x8xbf16>, vector<8x8xf32> -> vector<8x8xf32>
      %c0_74 = arith.constant 0 : index
      %c56 = arith.constant 56 : index
      %184 = vector.load %arg24[%c0_74, %c56] : memref<8x64xf32, #tpu.memory_space<vmem>>, vector<8x8xf32>
      tpu.vector_store %arg24[%c0_74, %c56], %183 {strides = array<i32>} : memref<8x64xf32, #tpu.memory_space<vmem>>, vector<8x8xf32>,
      %c0_75 = arith.constant 0 : index
      %c0_76 = arith.constant 0 : index
      %185 = vector.load %arg24[%c0_75, %c0_76] : memref<8x64xf32, #tpu.memory_space<vmem>>, vector<8x64xf32>
      %186 = arith.truncf %185 : vector<8x64xf32> to vector<8x64xbf16>
      %c0_77 = arith.constant 0 : index
      %c0_78 = arith.constant 0 : index
      %187 = vector.load %arg11[%c0_77, %c0_78] : memref<64x64xbf16, #tpu.memory_space<vmem>>, vector<64x64xbf16>
      %cst_79 = arith.constant dense<0.000000e+00> : vector<8x64xf32>
      %188 = tpu.matmul %186, %187, %cst_79 {dimension_numbers = #tpu.dot_dimension_numbers<[1], [0], [0], [1], [0, 0, 1, 1], [], []>} : vector<8x64xbf16>, vector<64x64xbf16>, vector<8x64xf32> -> vector<8x64xf32>
      %c0_80 = arith.constant 0 : index
      %c0_81 = arith.constant 0 : index
      %189 = vector.load %arg12[%c0_80, %c0_81] : memref<1x64xf32, #tpu.memory_space<vmem>>, vector<1x64xf32>
      %190 = vector.shape_cast %189 : vector<1x64xf32> to vector<64xf32>
      %191 = vector.shape_cast %190 : vector<64xf32> to vector<1x64xf32>
      %192 = vector.broadcast %191 : vector<1x64xf32> to vector<8x64xf32>
      %193 = arith.addf %188, %192 : vector<8x64xf32>
      %194 = arith.addf %35, %193 : vector<8x64xf32>
      %c0_82 = arith.constant 0 : index
      %c0_83 = arith.constant 0 : index
      %195 = vector.load %arg13[%c0_82, %c0_83] : memref<1x64xf32, #tpu.memory_space<vmem>>, vector<1x64xf32>
      %196 = vector.shape_cast %195 : vector<1x64xf32> to vector<64xf32>
      %c0_84 = arith.constant 0 : index
      %c0_85 = arith.constant 0 : index
      %197 = vector.load %arg14[%c0_84, %c0_85] : memref<1x64xf32, #tpu.memory_space<vmem>>, vector<1x64xf32>
      %198 = vector.shape_cast %197 : vector<1x64xf32> to vector<64xf32>
      %cst_86 = arith.constant dense<0.000000e+00> : vector<8xf32>
      %199 = vector.multi_reduction <add>, %194, %cst_86 [1] : vector<8x64xf32> to vector<8xf32>
      %200 = vector.shape_cast %199 : vector<8xf32> to vector<8x1xf32>
      %cst_87 = arith.constant 6.400000e+01 : f32
      %201 = vector.broadcast %cst_87 : f32 to vector<8x1xf32>
      %202 = arith.divf %200, %201 : vector<8x1xf32>
      %203 = vector.broadcast %202 : vector<8x1xf32> to vector<8x64xf32>
      %204 = arith.subf %194, %203 : vector<8x64xf32>
      %205 = arith.mulf %204, %204 : vector<8x64xf32>
      %cst_88 = arith.constant dense<0.000000e+00> : vector<8xf32>
      %206 = vector.multi_reduction <add>, %205, %cst_88 [1] : vector<8x64xf32> to vector<8xf32>
      %207 = vector.shape_cast %206 : vector<8xf32> to vector<8x1xf32>
      %cst_89 = arith.constant 6.400000e+01 : f32
      %208 = vector.broadcast %cst_89 : f32 to vector<8x1xf32>
      %209 = arith.divf %207, %208 : vector<8x1xf32>
      %cst_90 = arith.constant 9.99999974E-6 : f32
      %210 = vector.broadcast %cst_90 : f32 to vector<8x1xf32>
      %211 = arith.addf %209, %210 : vector<8x1xf32>
      %212 = math.rsqrt %211 : vector<8x1xf32>
      %213 = vector.broadcast %212 : vector<8x1xf32> to vector<8x64xf32>
      %214 = arith.mulf %204, %213 : vector<8x64xf32>
      %215 = vector.shape_cast %196 : vector<64xf32> to vector<1x64xf32>
      %216 = vector.broadcast %215 : vector<1x64xf32> to vector<8x64xf32>
      %217 = arith.mulf %214, %216 : vector<8x64xf32>
      %218 = vector.shape_cast %198 : vector<64xf32> to vector<1x64xf32>
      %219 = vector.broadcast %218 : vector<1x64xf32> to vector<8x64xf32>
      %220 = arith.addf %217, %219 : vector<8x64xf32>
      %c0_91 = arith.constant 0 : index
      %c0_92 = arith.constant 0 : index
      %221 = vector.load %arg25[%c0_91, %c0_92] : memref<8x64xf32, #tpu.memory_space<vmem>>, vector<8x64xf32>
      tpu.vector_store %arg25[%c0_91, %c0_92], %220 {strides = array<i32>} : memref<8x64xf32, #tpu.memory_space<vmem>>, vector<8x64xf32>,
      %cst_93 = arith.constant 0.000000e+00 : f32
      %222 = vector.broadcast %cst_93 : f32 to vector<8x64xf32>
      %c0_94 = arith.constant 0 : index
      %c0_95 = arith.constant 0 : index
      %223 = vector.load %arg26[%c0_94, %c0_95] : memref<8x64xf32, #tpu.memory_space<vmem>>, vector<8x64xf32>
      tpu.vector_store %arg26[%c0_94, %c0_95], %222 {strides = array<i32>} : memref<8x64xf32, #tpu.memory_space<vmem>>, vector<8x64xf32>,
    } else {
    }
    %c0 = arith.constant 0 : index
    %c0_4 = arith.constant 0 : index
    %8 = vector.load %arg25[%c0, %c0_4] : memref<8x64xf32, #tpu.memory_space<vmem>>, vector<8x64xf32>
    %9 = arith.truncf %8 : vector<8x64xf32> to vector<8x64xbf16>
    %c0_5 = arith.constant 0 : index
    %c0_6 = arith.constant 0 : index
    %10 = vector.load %arg15[%c0_5, %c0_6] : memref<64x256xbf16, #tpu.memory_space<vmem>>, vector<64x256xbf16>
    %cst = arith.constant dense<0.000000e+00> : vector<8x256xf32>
    %11 = tpu.matmul %9, %10, %cst {dimension_numbers = #tpu.dot_dimension_numbers<[1], [0], [0], [1], [0, 0, 1, 1], [], []>} : vector<8x64xbf16>, vector<64x256xbf16>, vector<8x256xf32> -> vector<8x256xf32>
    %c0_7 = arith.constant 0 : index
    %c0_8 = arith.constant 0 : index
    %12 = vector.load %arg16[%c0_7, %c0_8] : memref<1x256xf32, #tpu.memory_space<vmem>>, vector<1x256xf32>
    %13 = vector.shape_cast %12 : vector<1x256xf32> to vector<256xf32>
    %14 = vector.shape_cast %13 : vector<256xf32> to vector<1x256xf32>
    %15 = vector.broadcast %14 : vector<1x256xf32> to vector<8x256xf32>
    %16 = arith.addf %11, %15 : vector<8x256xf32>
    %cst_9 = arith.constant 0.000000e+00 : f32
    %17 = vector.broadcast %cst_9 : f32 to vector<8x256xf32>
    %18 = arith.cmpf ogt, %16, %17 : vector<8x256xf32>
    %cst_10 = arith.constant 0.000000e+00 : f32
    %19 = vector.broadcast %cst_10 : f32 to vector<8x256xf32>
    %20 = arith.minimumf %16, %19 : vector<8x256xf32>
    %21 = math.exp %20 : vector<8x256xf32>
    %cst_11 = arith.constant 1.000000e+00 : f32
    %22 = vector.broadcast %cst_11 : f32 to vector<8x256xf32>
    %23 = arith.subf %21, %22 : vector<8x256xf32>
    %24 = arith.select %18, %16, %23 : vector<8x256xi1>, vector<8x256xf32>
    %c0_12 = arith.constant 0 : index
    %c0_13 = arith.constant 0 : index
    %25 = vector.load %arg26[%c0_12, %c0_13] : memref<8x64xf32, #tpu.memory_space<vmem>>, vector<8x64xf32>
    %26 = arith.truncf %24 : vector<8x256xf32> to vector<8x256xbf16>
    %c0_14 = arith.constant 0 : index
    %c0_15 = arith.constant 0 : index
    %27 = vector.load %arg17[%c0_14, %c0_15] : memref<256x64xbf16, #tpu.memory_space<vmem>>, vector<256x64xbf16>
    %cst_16 = arith.constant dense<0.000000e+00> : vector<8x64xf32>
    %28 = tpu.matmul %26, %27, %cst_16 {dimension_numbers = #tpu.dot_dimension_numbers<[1], [0], [0], [1], [0, 0, 1, 1], [], []>} : vector<8x256xbf16>, vector<256x64xbf16>, vector<8x64xf32> -> vector<8x64xf32>
    %29 = arith.addf %25, %28 : vector<8x64xf32>
    %c0_17 = arith.constant 0 : index
    %c0_18 = arith.constant 0 : index
    %30 = vector.load %arg26[%c0_17, %c0_18] : memref<8x64xf32, #tpu.memory_space<vmem>>, vector<8x64xf32>
    tpu.vector_store %arg26[%c0_17, %c0_18], %29 {strides = array<i32>} : memref<8x64xf32, #tpu.memory_space<vmem>>, vector<8x64xf32>,
    %c0_i32_19 = arith.constant 0 : i32
    %31 = arith.cmpi eq, %arg2, %c0_i32_19 : i32
    %32 = arith.extui %31 : i1 to i32
    %c0_i32_20 = arith.constant 0 : i32
    %33 = arith.cmpi ne, %32, %c0_i32_20 : i32
    scf.if %33 {
      %c0_21 = arith.constant 0 : index
      %c0_22 = arith.constant 0 : index
      %34 = vector.load %arg25[%c0_21, %c0_22] : memref<8x64xf32, #tpu.memory_space<vmem>>, vector<8x64xf32>
      %c0_23 = arith.constant 0 : index
      %c0_24 = arith.constant 0 : index
      %35 = vector.load %arg26[%c0_23, %c0_24] : memref<8x64xf32, #tpu.memory_space<vmem>>, vector<8x64xf32>
      %36 = arith.addf %34, %35 : vector<8x64xf32>
      %c0_25 = arith.constant 0 : index
      %c0_26 = arith.constant 0 : index
      %37 = vector.load %arg18[%c0_25, %c0_26] : memref<1x64xf32, #tpu.memory_space<vmem>>, vector<1x64xf32>
      %38 = vector.shape_cast %37 : vector<1x64xf32> to vector<64xf32>
      %39 = vector.shape_cast %38 : vector<64xf32> to vector<1x64xf32>
      %40 = vector.broadcast %39 : vector<1x64xf32> to vector<8x64xf32>
      %41 = arith.addf %36, %40 : vector<8x64xf32>
      %c0_27 = arith.constant 0 : index
      %c0_28 = arith.constant 0 : index
      %42 = vector.load %arg19[%c0_27, %c0_28] : memref<1x64xf32, #tpu.memory_space<vmem>>, vector<1x64xf32>
      %43 = vector.shape_cast %42 : vector<1x64xf32> to vector<64xf32>
      %c0_29 = arith.constant 0 : index
      %c0_30 = arith.constant 0 : index
      %44 = vector.load %arg20[%c0_29, %c0_30] : memref<1x64xf32, #tpu.memory_space<vmem>>, vector<1x64xf32>
      %45 = vector.shape_cast %44 : vector<1x64xf32> to vector<64xf32>
      %cst_31 = arith.constant dense<0.000000e+00> : vector<8xf32>
      %46 = vector.multi_reduction <add>, %41, %cst_31 [1] : vector<8x64xf32> to vector<8xf32>
      %47 = vector.shape_cast %46 : vector<8xf32> to vector<8x1xf32>
      %cst_32 = arith.constant 6.400000e+01 : f32
      %48 = vector.broadcast %cst_32 : f32 to vector<8x1xf32>
      %49 = arith.divf %47, %48 : vector<8x1xf32>
      %50 = vector.broadcast %49 : vector<8x1xf32> to vector<8x64xf32>
      %51 = arith.subf %41, %50 : vector<8x64xf32>
      %52 = arith.mulf %51, %51 : vector<8x64xf32>
      %cst_33 = arith.constant dense<0.000000e+00> : vector<8xf32>
      %53 = vector.multi_reduction <add>, %52, %cst_33 [1] : vector<8x64xf32> to vector<8xf32>
      %54 = vector.shape_cast %53 : vector<8xf32> to vector<8x1xf32>
      %cst_34 = arith.constant 6.400000e+01 : f32
      %55 = vector.broadcast %cst_34 : f32 to vector<8x1xf32>
      %56 = arith.divf %54, %55 : vector<8x1xf32>
      %cst_35 = arith.constant 9.99999974E-6 : f32
      %57 = vector.broadcast %cst_35 : f32 to vector<8x1xf32>
      %58 = arith.addf %56, %57 : vector<8x1xf32>
      %59 = math.rsqrt %58 : vector<8x1xf32>
      %60 = vector.broadcast %59 : vector<8x1xf32> to vector<8x64xf32>
      %61 = arith.mulf %51, %60 : vector<8x64xf32>
      %62 = vector.shape_cast %43 : vector<64xf32> to vector<1x64xf32>
      %63 = vector.broadcast %62 : vector<1x64xf32> to vector<8x64xf32>
      %64 = arith.mulf %61, %63 : vector<8x64xf32>
      %65 = vector.shape_cast %45 : vector<64xf32> to vector<1x64xf32>
      %66 = vector.broadcast %65 : vector<1x64xf32> to vector<8x64xf32>
      %67 = arith.addf %64, %66 : vector<8x64xf32>
      %c0_36 = arith.constant 0 : index
      %c0_37 = arith.constant 0 : index
      %c0_38 = arith.constant 0 : index
      %68 = vector.load %arg21[%c0_36, %c0_37, %c0_38] : memref<1x8x64xf32, #tpu.memory_space<vmem>>, vector<1x8x64xf32>
      %69 = vector.shape_cast %68 : vector<1x8x64xf32> to vector<8x64xf32>
      %70 = vector.shape_cast %67 : vector<8x64xf32> to vector<1x8x64xf32>
      tpu.vector_store %arg21[%c0_36, %c0_37, %c0_38], %70 {strides = array<i32>} : memref<1x8x64xf32, #tpu.memory_space<vmem>>, vector<1x8x64xf32>,
    } else {
    }
    return
  }
  func.func @transform_0(%arg0: i32, %arg1: i32, %arg2: i32) -> (i32, i32, i32) {
    %c0_i32 = arith.constant 0 : i32
    %c0_i32_0 = arith.constant 0 : i32
    %c0_i32_1 = arith.constant 0 : i32
    return %arg0, %c0_i32, %c0_i32_0 : i32, i32, i32
  }
  func.func @transform_1(%arg0: i32, %arg1: i32, %arg2: i32) -> (i32, i32, i32) {
    %c0_i32 = arith.constant 0 : i32
    %c0_i32_0 = arith.constant 0 : i32
    return %arg0, %arg1, %c0_i32 : i32, i32, i32
  }
  func.func @transform_2(%arg0: i32, %arg1: i32, %arg2: i32) -> (i32, i32) {
    %c0_i32 = arith.constant 0 : i32
    %c0_i32_0 = arith.constant 0 : i32
    %c0_i32_1 = arith.constant 0 : i32
    return %c0_i32, %c0_i32_0 : i32, i32
  }
  func.func @transform_3(%arg0: i32, %arg1: i32, %arg2: i32) -> (i32, i32) {
    %c0_i32 = arith.constant 0 : i32
    %c0_i32_0 = arith.constant 0 : i32
    %c0_i32_1 = arith.constant 0 : i32
    return %c0_i32, %c0_i32_0 : i32, i32
  }
  func.func @transform_4(%arg0: i32, %arg1: i32, %arg2: i32) -> (i32, i32) {
    %c0_i32 = arith.constant 0 : i32
    %c0_i32_0 = arith.constant 0 : i32
    %c0_i32_1 = arith.constant 0 : i32
    return %c0_i32, %c0_i32_0 : i32, i32
  }
  func.func @transform_5(%arg0: i32, %arg1: i32, %arg2: i32) -> (i32, i32) {
    %c0_i32 = arith.constant 0 : i32
    %c0_i32_0 = arith.constant 0 : i32
    %c0_i32_1 = arith.constant 0 : i32
    return %c0_i32, %c0_i32_0 : i32, i32
  }
  func.func @transform_6(%arg0: i32, %arg1: i32, %arg2: i32) -> (i32, i32) {
    %c0_i32 = arith.constant 0 : i32
    %c0_i32_0 = arith.constant 0 : i32
    %c0_i32_1 = arith.constant 0 : i32
    return %c0_i32, %c0_i32_0 : i32, i32
  }
  func.func @transform_7(%arg0: i32, %arg1: i32, %arg2: i32) -> (i32, i32) {
    %c0_i32 = arith.constant 0 : i32
    %c0_i32_0 = arith.constant 0 : i32
    %c0_i32_1 = arith.constant 0 : i32
    return %c0_i32, %c0_i32_0 : i32, i32
  }
  func.func @transform_8(%arg0: i32, %arg1: i32, %arg2: i32) -> (i32, i32) {
    %c0_i32 = arith.constant 0 : i32
    %c0_i32_0 = arith.constant 0 : i32
    %c0_i32_1 = arith.constant 0 : i32
    return %c0_i32, %c0_i32_0 : i32, i32
  }
  func.func @transform_9(%arg0: i32, %arg1: i32, %arg2: i32) -> (i32, i32) {
    %c0_i32 = arith.constant 0 : i32
    %c0_i32_0 = arith.constant 0 : i32
    %c0_i32_1 = arith.constant 0 : i32
    return %c0_i32, %c0_i32_0 : i32, i32
  }
  func.func @transform_10(%arg0: i32, %arg1: i32, %arg2: i32) -> (i32, i32) {
    %c0_i32 = arith.constant 0 : i32
    %c0_i32_0 = arith.constant 0 : i32
    %c0_i32_1 = arith.constant 0 : i32
    return %c0_i32, %c0_i32_0 : i32, i32
  }
  func.func @transform_11(%arg0: i32, %arg1: i32, %arg2: i32) -> (i32, i32) {
    %c0_i32 = arith.constant 0 : i32
    %c0_i32_0 = arith.constant 0 : i32
    %c0_i32_1 = arith.constant 0 : i32
    return %c0_i32, %c0_i32_0 : i32, i32
  }
  func.func @transform_12(%arg0: i32, %arg1: i32, %arg2: i32) -> (i32, i32) {
    %c0_i32 = arith.constant 0 : i32
    %c0_i32_0 = arith.constant 0 : i32
    return %c0_i32, %arg2 : i32, i32
  }
  func.func @transform_13(%arg0: i32, %arg1: i32, %arg2: i32) -> (i32, i32) {
    %c0_i32 = arith.constant 0 : i32
    %c0_i32_0 = arith.constant 0 : i32
    return %c0_i32, %arg2 : i32, i32
  }
  func.func @transform_14(%arg0: i32, %arg1: i32, %arg2: i32) -> (i32, i32) {
    %c0_i32 = arith.constant 0 : i32
    %c0_i32_0 = arith.constant 0 : i32
    return %arg2, %c0_i32 : i32, i32
  }
  func.func @transform_15(%arg0: i32, %arg1: i32, %arg2: i32) -> (i32, i32) {
    %c0_i32 = arith.constant 0 : i32
    %c0_i32_0 = arith.constant 0 : i32
    %c0_i32_1 = arith.constant 0 : i32
    return %c0_i32, %c0_i32_0 : i32, i32
  }
  func.func @transform_16(%arg0: i32, %arg1: i32, %arg2: i32) -> (i32, i32) {
    %c0_i32 = arith.constant 0 : i32
    %c0_i32_0 = arith.constant 0 : i32
    %c0_i32_1 = arith.constant 0 : i32
    return %c0_i32, %c0_i32_0 : i32, i32
  }
  func.func @transform_17(%arg0: i32, %arg1: i32, %arg2: i32) -> (i32, i32) {
    %c0_i32 = arith.constant 0 : i32
    %c0_i32_0 = arith.constant 0 : i32
    %c0_i32_1 = arith.constant 0 : i32
    return %c0_i32, %c0_i32_0 : i32, i32
  }
  func.func @transform_18(%arg0: i32, %arg1: i32, %arg2: i32) -> (i32, i32, i32) {
    %c0_i32 = arith.constant 0 : i32
    %c0_i32_0 = arith.constant 0 : i32
    return %arg0, %arg1, %c0_i32 : i32, i32, i32
  }
}

</mosaic_0001>

<llo_original>
// kernel: tpu_custom_call.1
$region0: #{tpu_custom_call.1}
  #allocation0 [shape = 'u32[]', space=smem, size = 0x4, offset = 0x4, fixed_abs, tag = 'smem constant byte address 0x4 - core index']
  #allocation1 [shape = 'u32[144,128]{1,0:T(1,128)}', space=vmem, size = 0x12000, scoped, tag = 'internal scratch']
  #allocation2 [shape = 'bf16[8,64]{1,0:T(8,128)(2,1)}', space=vmem, size = 0x800, scoped, tag = 'scratch operand']
  #allocation3 [shape = 'bf16[8,64]{1,0:T(8,128)(2,1)}', space=vmem, size = 0x800, scoped, tag = 'scratch operand']
  #allocation4 [shape = 'f32[8,64]{1,0:T(8,128)}', space=vmem, size = 0x1000, scoped, tag = 'scratch operand']
  #allocation5 [shape = 'f32[8,64]{1,0:T(8,128)}', space=vmem, size = 0x1000, scoped, tag = 'scratch operand']
  #allocation6 [shape = 'f32[8,64]{1,0:T(8,128)}', space=vmem, size = 0x1000, scoped, tag = 'scratch operand']
  %s0 = inlined_call_operand.hbm [shape: f32[2,8,64], index: 0, kind: input, shape index: {}]
  %s1 = inlined_call_operand.hbm [shape: f32[2,8,64], index: 1, kind: input, shape index: {}]
  %s2 = inlined_call_operand.vmem [shape: bf16[64,64], index: 2, kind: input, shape index: {}]
  %s3 = inlined_call_operand.vmem [shape: f32[1,64], index: 3, kind: input, shape index: {}]
  %s4 = inlined_call_operand.vmem [shape: bf16[64,64], index: 4, kind: input, shape index: {}]
  %s5 = inlined_call_operand.vmem [shape: f32[1,64], index: 5, kind: input, shape index: {}]
  %s6 = inlined_call_operand.vmem [shape: bf16[64,64], index: 6, kind: input, shape index: {}]
  %s7 = inlined_call_operand.vmem [shape: f32[1,64], index: 7, kind: input, shape index: {}]
  %s8 = inlined_call_operand.vmem [shape: bf16[64,64], index: 8, kind: input, shape index: {}]
  %s9 = inlined_call_operand.vmem [shape: f32[1,64], index: 9, kind: input, shape index: {}]
  %s10 = inlined_call_operand.vmem [shape: f32[1,64], index: 10, kind: input, shape index: {}]
  %s11 = inlined_call_operand.vmem [shape: f32[1,64], index: 11, kind: input, shape index: {}]
  %s12 = inlined_call_operand.vmem [shape: bf16[64,256], index: 12, kind: input, shape index: {}]
  %s13 = inlined_call_operand.vmem [shape: f32[1,256], index: 13, kind: input, shape index: {}]
  %s14 = inlined_call_operand.vmem [shape: bf16[256,64], index: 14, kind: input, shape index: {}]
  %s15 = inlined_call_operand.vmem [shape: f32[1,64], index: 15, kind: input, shape index: {}]
  %s16 = inlined_call_operand.vmem [shape: f32[1,64], index: 16, kind: input, shape index: {}]
  %s17 = inlined_call_operand.vmem [shape: f32[1,64], index: 17, kind: input, shape index: {}]
  %s18 = inlined_call_operand.hbm [shape: f32[2,8,64], index: 18, kind: output, shape index: {}]
  %s19 = sld [smem:[#allocation0]]
  $region125: #{tpu_custom_call.1} parent=0
    _
  %s21 = ssub.s32 1, %s19
  %s22 = scalar_select 0, %s21, %s19
  $region1: #{tpu_custom_call.1} parent=0
    #allocation7 [shape = 'u8[8192]{0}', space=vmem, size = 0x2000, scoped, tag = 'input window, operand 0']
    #allocation8 [shape = 's32[2]{0}', space=sflag, size = 0x8, scoped, tag = 'scoped memory for tpu_custom_call.1']
    #allocation9 [shape = 's32[2]{0}', space=sflag, size = 0x8, scoped, tag = 'scoped memory for tpu_custom_call.1']
    #allocation10 [shape = 'u8[8192]{0}', space=vmem, size = 0x2000, scoped, tag = 'input window, operand 1']
    #allocation11 [shape = 's32[2]{0}', space=sflag, size = 0x8, scoped, tag = 'scoped memory for tpu_custom_call.1']
    #allocation12 [shape = 'u8[8192]{0}', space=vmem, size = 0x2000, scoped, tag = 'output window, operand 0']
    %23 = vsyncpa [#allocation8], 0
    %s24 = scalar_lea.sflag [#allocation8], 1
    %25 = vsyncpa %s24, 0
    %26 = vsyncpa [#allocation11], 0
    %s27 = scalar_lea.sflag [#allocation11], 1
    %28 = vsyncpa %s27, 0
    %29 = vsyncpa [#allocation9], 0
    %s30 = scalar_lea.sflag [#allocation9], 1
    %31 = vsyncpa %s30, 0
    loop: start=0, step=1, limit=4
    $region2: #{tpu_custom_call.1} parent=1 // loop_pre_header
      _
    $region3: #{tpu_custom_call.1} parent=1 // loop_header
      %s33 = sphi 0, %s37
      %p34 = scmp.ge.s32.totalorder %s33, 4
      %s40 = sphi 0, %s59
      %s41 = sphi 0, %s55
      %s42 = sphi 0, %s51
      %s43 = sphi 0, %s40
      %s44 = sphi 0, %s41
      %s45 = sphi 0, %s42
      %s46 = sphi 0, %s43
      %s47 = sphi 0, %s44
      %s48 = sphi 0, %s45
      %s62 = sphi 0, %s64
      %s65 = sphi 0, %s62
      %s66 = sphi 0, %s65
      %s82 = sphi 0, %s66
      %s90 = sphi 0, %s92
      %s93 = sphi 0, %s90
      %s94 = sphi 0, %s93
      %s110 = sphi 0, %s94
      %s114 = sphi 0, %s114
      %s116 = sphi 0, %s114
      %s117 = sphi 0, %s116
      %s131 = sphi 0, %s117
      %s135 = sphi 0, %s135
      %s137 = sphi 0, %s135
      %s138 = sphi 0, %s137
      %s152 = sphi 0, %s138
      %s156 = sphi 0, %s156
      %s158 = sphi 0, %s156
      %s159 = sphi 0, %s158
      %s173 = sphi 0, %s159
      %s177 = sphi 0, %s177
      %s179 = sphi 0, %s177
      %s180 = sphi 0, %s179
      %s194 = sphi 0, %s180
      %s198 = sphi 0, %s198
      %s200 = sphi 0, %s198
      %s201 = sphi 0, %s200
      %s215 = sphi 0, %s201
      %s219 = sphi 0, %s219
      %s221 = sphi 0, %s219
      %s222 = sphi 0, %s221
      %s236 = sphi 0, %s222
      %s240 = sphi 0, %s240
      %s242 = sphi 0, %s240
      %s243 = sphi 0, %s242
      %s257 = sphi 0, %s243
      %s261 = sphi 0, %s261
      %s263 = sphi 0, %s261
      %s264 = sphi 0, %s263
      %s278 = sphi 0, %s264
      %s282 = sphi 0, %s282
      %s284 = sphi 0, %s282
      %s285 = sphi 0, %s284
      %s299 = sphi 0, %s285
      %s303 = sphi 0, %s303
      %s305 = sphi 0, %s303
      %s306 = sphi 0, %s305
      %s320 = sphi 0, %s306
      %s326 = sphi 0, %s328
      %s329 = sphi 0, %s326
      %s330 = sphi 0, %s329
      %s346 = sphi 0, %s330
      %s352 = sphi 0, %s354
      %s355 = sphi 0, %s352
      %s356 = sphi 0, %s355
      %s372 = sphi 0, %s356
      %s378 = sphi 0, %s380
      %s381 = sphi 0, %s378
      %s382 = sphi 0, %s381
      %s398 = sphi 0, %s382
      %s402 = sphi 0, %s402
      %s404 = sphi 0, %s402
      %s405 = sphi 0, %s404
      %s419 = sphi 0, %s405
      %s423 = sphi 0, %s423
      %s425 = sphi 0, %s423
      %s426 = sphi 0, %s425
      %s440 = sphi 0, %s426
      %s444 = sphi 0, %s444
      %s446 = sphi 0, %s444
      %s447 = sphi 0, %s446
      %s461 = sphi 0, %s447
      %s469 = sphi 0, %s471
      %s472 = sphi 0, %s469
      %s473 = sphi 0, %s472
      %s489 = sphi 0, %s473
    $region4: #{tpu_custom_call.1} parent=1 // loop_header_branch
      %36 = sbr.rel (%p34) target = $region8
    $region5: #{tpu_custom_call.1} parent=1 // loop_body
      %s38 = ssub.s32 %s33, 1
      %s39 = ssub.s32 %s33, 2
      %s49 = sadd.s32 1, %s42
      %p50 = scmp.ge.s32.totalorder %s49, 1
      %s51 = scalar_select %p50, 0, %s49
      %s52 = sadd.s32 1, %s41
      %s53 = scalar_select %p50, %s52, %s41
      %p54 = scmp.ge.s32.totalorder %s53, 1
      %s55 = scalar_select %p54, 0, %s53
      %s56 = sadd.s32 1, %s40
      %s57 = scalar_select %p54, %s56, %s40
      %p58 = scmp.ge.s32.totalorder %s57, 2
      %s59 = scalar_select %p58, 0, %s57
      %s60 = ssub.s32 %s40, %s59
      %p61 = scmp.eq.s32.totalorder %s60, 0
      %s63 = sadd.s32 %s62, 1
      %s64 = scalar_select %p61, %s62, %s63
      %p67 = pneg %p61
      %p68 = scmp.eq.s32.totalorder %s33, 1
      %p69 = por %p67, %p68
      %p70 = scmp.ne.s32.totalorder %s62, %s65
      %p71 = scmp.eq.s32.totalorder %s33, 0
      %p72 = por %p70, %p71
      %p73 = scmp.ne.s32.totalorder %s62, %s65
      %p74 = scmp.eq.s32.totalorder %s38, 1
      %p75 = por %p73, %p74
      %p76 = scmp.ne.s32.totalorder %s65, %s66
      %p77 = scmp.eq.s32.totalorder %s38, 0
      %p78 = por %p76, %p77
      %p79 = scmp.ne.s32.totalorder %s65, %s66
      %p80 = scmp.eq.s32.totalorder %s39, 1
      %p81 = por %p79, %p80
      %p83 = scmp.ne.s32.totalorder %s66, %s82
      %p84 = scmp.eq.s32.totalorder %s39, 0
      %p85 = por %p83, %p84
      %s86 = ssub.s32 %s40, %s59
      %s87 = ssub.s32 %s41, %s55
      %s88 = sor.u32 %s86, %s87
      %p89 = scmp.eq.s32.totalorder %s88, 0
      %s91 = sadd.s32 %s90, 1
      %s92 = scalar_select %p89, %s90, %s91
      %p95 = pneg %p89
      %p96 = scmp.eq.s32.totalorder %s33, 1
      %p97 = por %p95, %p96
      %p98 = scmp.ne.s32.totalorder %s90, %s93
      %p99 = scmp.eq.s32.totalorder %s33, 0
      %p100 = por %p98, %p99
      %p101 = scmp.ne.s32.totalorder %s90, %s93
      %p102 = scmp.eq.s32.totalorder %s38, 1
      %p103 = por %p101, %p102
      %p104 = scmp.ne.s32.totalorder %s93, %s94
      %p105 = scmp.eq.s32.totalorder %s38, 0
      %p106 = por %p104, %p105
      %p107 = scmp.ne.s32.totalorder %s93, %s94
      %p108 = scmp.eq.s32.totalorder %s39, 1
      %p109 = por %p107, %p108
      %p111 = scmp.ne.s32.totalorder %s94, %s110
      %p112 = scmp.eq.s32.totalorder %s39, 0
      %p113 = por %p111, %p112
      %s115 = sadd.s32 %s114, 1
      %p118 = scmp.eq.s32.totalorder %s33, 1
      %p119 = scmp.ne.s32.totalorder %s114, %s116
      %p120 = scmp.eq.s32.totalorder %s33, 0
      %p121 = por %p119, %p120
      %p122 = scmp.ne.s32.totalorder %s114, %s116
      %p123 = scmp.eq.s32.totalorder %s38, 1
      %p124 = por %p122, %p123
      %p125 = scmp.ne.s32.totalorder %s116, %s117
      %p126 = scmp.eq.s32.totalorder %s38, 0
      %p127 = por %p125, %p126
      %p128 = scmp.ne.s32.totalorder %s116, %s117
      %p129 = scmp.eq.s32.totalorder %s39, 1
      %p130 = por %p128, %p129
      %p132 = scmp.ne.s32.totalorder %s117, %s131
      %p133 = scmp.eq.s32.totalorder %s39, 0
      %p134 = por %p132, %p133
      %s136 = sadd.s32 %s135, 1
      %p139 = scmp.eq.s32.totalorder %s33, 1
      %p140 = scmp.ne.s32.totalorder %s135, %s137
      %p141 = scmp.eq.s32.totalorder %s33, 0
      %p142 = por %p140, %p141
      %p143 = scmp.ne.s32.totalorder %s135, %s137
      %p144 = scmp.eq.s32.totalorder %s38, 1
      %p145 = por %p143, %p144
      %p146 = scmp.ne.s32.totalorder %s137, %s138
      %p147 = scmp.eq.s32.totalorder %s38, 0
      %p148 = por %p146, %p147
      %p149 = scmp.ne.s32.totalorder %s137, %s138
      %p150 = scmp.eq.s32.totalorder %s39, 1
      %p151 = por %p149, %p150
      %p153 = scmp.ne.s32.totalorder %s138, %s152
      %p154 = scmp.eq.s32.totalorder %s39, 0
      %p155 = por %p153, %p154
      %s157 = sadd.s32 %s156, 1
      %p160 = scmp.eq.s32.totalorder %s33, 1
      %p161 = scmp.ne.s32.totalorder %s156, %s158
      %p162 = scmp.eq.s32.totalorder %s33, 0
      %p163 = por %p161, %p162
      %p164 = scmp.ne.s32.totalorder %s156, %s158
      %p165 = scmp.eq.s32.totalorder %s38, 1
      %p166 = por %p164, %p165
      %p167 = scmp.ne.s32.totalorder %s158, %s159
      %p168 = scmp.eq.s32.totalorder %s38, 0
      %p169 = por %p167, %p168
      %p170 = scmp.ne.s32.totalorder %s158, %s159
      %p171 = scmp.eq.s32.totalorder %s39, 1
      %p172 = por %p170, %p171
      %p174 = scmp.ne.s32.totalorder %s159, %s173
      %p175 = scmp.eq.s32.totalorder %s39, 0
      %p176 = por %p174, %p175
      %s178 = sadd.s32 %s177, 1
      %p181 = scmp.eq.s32.totalorder %s33, 1
      %p182 = scmp.ne.s32.totalorder %s177, %s179
      %p183 = scmp.eq.s32.totalorder %s33, 0
      %p184 = por %p182, %p183
      %p185 = scmp.ne.s32.totalorder %s177, %s179
      %p186 = scmp.eq.s32.totalorder %s38, 1
      %p187 = por %p185, %p186
      %p188 = scmp.ne.s32.totalorder %s179, %s180
      %p189 = scmp.eq.s32.totalorder %s38, 0
      %p190 = por %p188, %p189
      %p191 = scmp.ne.s32.totalorder %s179, %s180
      %p192 = scmp.eq.s32.totalorder %s39, 1
      %p193 = por %p191, %p192
      %p195 = scmp.ne.s32.totalorder %s180, %s194
      %p196 = scmp.eq.s32.totalorder %s39, 0
      %p197 = por %p195, %p196
      %s199 = sadd.s32 %s198, 1
      %p202 = scmp.eq.s32.totalorder %s33, 1
      %p203 = scmp.ne.s32.totalorder %s198, %s200
      %p204 = scmp.eq.s32.totalorder %s33, 0
      %p205 = por %p203, %p204
      %p206 = scmp.ne.s32.totalorder %s198, %s200
      %p207 = scmp.eq.s32.totalorder %s38, 1
      %p208 = por %p206, %p207
      %p209 = scmp.ne.s32.totalorder %s200, %s201
      %p210 = scmp.eq.s32.totalorder %s38, 0
      %p211 = por %p209, %p210
      %p212 = scmp.ne.s32.totalorder %s200, %s201
      %p213 = scmp.eq.s32.totalorder %s39, 1
      %p214 = por %p212, %p213
      %p216 = scmp.ne.s32.totalorder %s201, %s215
      %p217 = scmp.eq.s32.totalorder %s39, 0
      %p218 = por %p216, %p217
      %s220 = sadd.s32 %s219, 1
      %p223 = scmp.eq.s32.totalorder %s33, 1
      %p224 = scmp.ne.s32.totalorder %s219, %s221
      %p225 = scmp.eq.s32.totalorder %s33, 0
      %p226 = por %p224, %p225
      %p227 = scmp.ne.s32.totalorder %s219, %s221
      %p228 = scmp.eq.s32.totalorder %s38, 1
      %p229 = por %p227, %p228
      %p230 = scmp.ne.s32.totalorder %s221, %s222
      %p231 = scmp.eq.s32.totalorder %s38, 0
      %p232 = por %p230, %p231
      %p233 = scmp.ne.s32.totalorder %s221, %s222
      %p234 = scmp.eq.s32.totalorder %s39, 1
      %p235 = por %p233, %p234
      %p237 = scmp.ne.s32.totalorder %s222, %s236
      %p238 = scmp.eq.s32.totalorder %s39, 0
      %p239 = por %p237, %p238
      %s241 = sadd.s32 %s240, 1
      %p244 = scmp.eq.s32.totalorder %s33, 1
      %p245 = scmp.ne.s32.totalorder %s240, %s242
      %p246 = scmp.eq.s32.totalorder %s33, 0
      %p247 = por %p245, %p246
      %p248 = scmp.ne.s32.totalorder %s240, %s242
      %p249 = scmp.eq.s32.totalorder %s38, 1
      %p250 = por %p248, %p249
      %p251 = scmp.ne.s32.totalorder %s242, %s243
      %p252 = scmp.eq.s32.totalorder %s38, 0
      %p253 = por %p251, %p252
      %p254 = scmp.ne.s32.totalorder %s242, %s243
      %p255 = scmp.eq.s32.totalorder %s39, 1
      %p256 = por %p254, %p255
      %p258 = scmp.ne.s32.totalorder %s243, %s257
      %p259 = scmp.eq.s32.totalorder %s39, 0
      %p260 = por %p258, %p259
      %s262 = sadd.s32 %s261, 1
      %p265 = scmp.eq.s32.totalorder %s33, 1
      %p266 = scmp.ne.s32.totalorder %s261, %s263
      %p267 = scmp.eq.s32.totalorder %s33, 0
      %p268 = por %p266, %p267
      %p269 = scmp.ne.s32.totalorder %s261, %s263
      %p270 = scmp.eq.s32.totalorder %s38, 1
      %p271 = por %p269, %p270
      %p272 = scmp.ne.s32.totalorder %s263, %s264
      %p273 = scmp.eq.s32.totalorder %s38, 0
      %p274 = por %p272, %p273
      %p275 = scmp.ne.s32.totalorder %s263, %s264
      %p276 = scmp.eq.s32.totalorder %s39, 1
      %p277 = por %p275, %p276
      %p279 = scmp.ne.s32.totalorder %s264, %s278
      %p280 = scmp.eq.s32.totalorder %s39, 0
      %p281 = por %p279, %p280
      %s283 = sadd.s32 %s282, 1
      %p286 = scmp.eq.s32.totalorder %s33, 1
      %p287 = scmp.ne.s32.totalorder %s282, %s284
      %p288 = scmp.eq.s32.totalorder %s33, 0
      %p289 = por %p287, %p288
      %p290 = scmp.ne.s32.totalorder %s282, %s284
      %p291 = scmp.eq.s32.totalorder %s38, 1
      %p292 = por %p290, %p291
      %p293 = scmp.ne.s32.totalorder %s284, %s285
      %p294 = scmp.eq.s32.totalorder %s38, 0
      %p295 = por %p293, %p294
      %p296 = scmp.ne.s32.totalorder %s284, %s285
      %p297 = scmp.eq.s32.totalorder %s39, 1
      %p298 = por %p296, %p297
      %p300 = scmp.ne.s32.totalorder %s285, %s299
      %p301 = scmp.eq.s32.totalorder %s39, 0
      %p302 = por %p300, %p301
      %s304 = sadd.s32 %s303, 1
      %p307 = scmp.eq.s32.totalorder %s33, 1
      %p308 = scmp.ne.s32.totalorder %s303, %s305
      %p309 = scmp.eq.s32.totalorder %s33, 0
      %p310 = por %p308, %p309
      %p311 = scmp.ne.s32.totalorder %s303, %s305
      %p312 = scmp.eq.s32.totalorder %s38, 1
      %p313 = por %p311, %p312
      %p314 = scmp.ne.s32.totalorder %s305, %s306
      %p315 = scmp.eq.s32.totalorder %s38, 0
      %p316 = por %p314, %p315
      %p317 = scmp.ne.s32.totalorder %s305, %s306
      %p318 = scmp.eq.s32.totalorder %s39, 1
      %p319 = por %p317, %p318
      %p321 = scmp.ne.s32.totalorder %s306, %s320
      %p322 = scmp.eq.s32.totalorder %s39, 0
      %p323 = por %p321, %p322
      %s324 = ssub.s32 %s42, %s51
      %p325 = scmp.eq.s32.totalorder %s324, 0
      %s327 = sadd.s32 %s326, 1
      %s328 = scalar_select %p325, %s326, %s327
      %p331 = pneg %p325
      %p332 = scmp.eq.s32.totalorder %s33, 1
      %p333 = por %p331, %p332
      %p334 = scmp.ne.s32.totalorder %s326, %s329
      %p335 = scmp.eq.s32.totalorder %s33, 0
      %p336 = por %p334, %p335
      %p337 = scmp.ne.s32.totalorder %s326, %s329
      %p338 = scmp.eq.s32.totalorder %s38, 1
      %p339 = por %p337, %p338
      %p340 = scmp.ne.s32.totalorder %s329, %s330
      %p341 = scmp.eq.s32.totalorder %s38, 0
      %p342 = por %p340, %p341
      %p343 = scmp.ne.s32.totalorder %s329, %s330
      %p344 = scmp.eq.s32.totalorder %s39, 1
      %p345 = por %p343, %p344
      %p347 = scmp.ne.s32.totalorder %s330, %s346
      %p348 = scmp.eq.s32.totalorder %s39, 0
      %p349 = por %p347, %p348
      %s350 = ssub.s32 %s42, %s51
      %p351 = scmp.eq.s32.totalorder %s350, 0
      %s353 = sadd.s32 %s352, 1
      %s354 = scalar_select %p351, %s352, %s353
      %p357 = pneg %p351
      %p358 = scmp.eq.s32.totalorder %s33, 1
      %p359 = por %p357, %p358
      %p360 = scmp.ne.s32.totalorder %s352, %s355
      %p361 = scmp.eq.s32.totalorder %s33, 0
      %p362 = por %p360, %p361
      %p363 = scmp.ne.s32.totalorder %s352, %s355
      %p364 = scmp.eq.s32.totalorder %s38, 1
      %p365 = por %p363, %p364
      %p366 = scmp.ne.s32.totalorder %s355, %s356
      %p367 = scmp.eq.s32.totalorder %s38, 0
      %p368 = por %p366, %p367
      %p369 = scmp.ne.s32.totalorder %s355, %s356
      %p370 = scmp.eq.s32.totalorder %s39, 1
      %p371 = por %p369, %p370
      %p373 = scmp.ne.s32.totalorder %s356, %s372
      %p374 = scmp.eq.s32.totalorder %s39, 0
      %p375 = por %p373, %p374
      %s376 = ssub.s32 %s42, %s51
      %p377 = scmp.eq.s32.totalorder %s376, 0
      %s379 = sadd.s32 %s378, 1
      %s380 = scalar_select %p377, %s378, %s379
      %p383 = pneg %p377
      %p384 = scmp.eq.s32.totalorder %s33, 1
      %p385 = por %p383, %p384
      %p386 = scmp.ne.s32.totalorder %s378, %s381
      %p387 = scmp.eq.s32.totalorder %s33, 0
      %p388 = por %p386, %p387
      %p389 = scmp.ne.s32.totalorder %s378, %s381
      %p390 = scmp.eq.s32.totalorder %s38, 1
      %p391 = por %p389, %p390
      %p392 = scmp.ne.s32.totalorder %s381, %s382
      %p393 = scmp.eq.s32.totalorder %s38, 0
      %p394 = por %p392, %p393
      %p395 = scmp.ne.s32.totalorder %s381, %s382
      %p396 = scmp.eq.s32.totalorder %s39, 1
      %p397 = por %p395, %p396
      %p399 = scmp.ne.s32.totalorder %s382, %s398
      %p400 = scmp.eq.s32.totalorder %s39, 0
      %p401 = por %p399, %p400
      %s403 = sadd.s32 %s402, 1
      %p406 = scmp.eq.s32.totalorder %s33, 1
      %p407 = scmp.ne.s32.totalorder %s402, %s404
      %p408 = scmp.eq.s32.totalorder %s33, 0
      %p409 = por %p407, %p408
      %p410 = scmp.ne.s32.totalorder %s402, %s404
      %p411 = scmp.eq.s32.totalorder %s38, 1
      %p412 = por %p410, %p411
      %p413 = scmp.ne.s32.totalorder %s404, %s405
      %p414 = scmp.eq.s32.totalorder %s38, 0
      %p415 = por %p413, %p414
      %p416 = scmp.ne.s32.totalorder %s404, %s405
      %p417 = scmp.eq.s32.totalorder %s39, 1
      %p418 = por %p416, %p417
      %p420 = scmp.ne.s32.totalorder %s405, %s419
      %p421 = scmp.eq.s32.totalorder %s39, 0
      %p422 = por %p420, %p421
      %s424 = sadd.s32 %s423, 1
      %p427 = scmp.eq.s32.totalorder %s33, 1
      %p428 = scmp.ne.s32.totalorder %s423, %s425
      %p429 = scmp.eq.s32.totalorder %s33, 0
      %p430 = por %p428, %p429
      %p431 = scmp.ne.s32.totalorder %s423, %s425
      %p432 = scmp.eq.s32.totalorder %s38, 1
      %p433 = por %p431, %p432
      %p434 = scmp.ne.s32.totalorder %s425, %s426
      %p435 = scmp.eq.s32.totalorder %s38, 0
      %p436 = por %p434, %p435
      %p437 = scmp.ne.s32.totalorder %s425, %s426
      %p438 = scmp.eq.s32.totalorder %s39, 1
      %p439 = por %p437, %p438
      %p441 = scmp.ne.s32.totalorder %s426, %s440
      %p442 = scmp.eq.s32.totalorder %s39, 0
      %p443 = por %p441, %p442
      %s445 = sadd.s32 %s444, 1
      %p448 = scmp.eq.s32.totalorder %s33, 1
      %p449 = scmp.ne.s32.totalorder %s444, %s446
      %p450 = scmp.eq.s32.totalorder %s33, 0
      %p451 = por %p449, %p450
      %p452 = scmp.ne.s32.totalorder %s444, %s446
      %p453 = scmp.eq.s32.totalorder %s38, 1
      %p454 = por %p452, %p453
      %p455 = scmp.ne.s32.totalorder %s446, %s447
      %p456 = scmp.eq.s32.totalorder %s38, 0
      %p457 = por %p455, %p456
      %p458 = scmp.ne.s32.totalorder %s446, %s447
      %p459 = scmp.eq.s32.totalorder %s39, 1
      %p460 = por %p458, %p459
      %p462 = scmp.ne.s32.totalorder %s447, %s461
      %p463 = scmp.eq.s32.totalorder %s39, 0
      %p464 = por %p462, %p463
      %s465 = ssub.s32 %s40, %s59
      %s466 = ssub.s32 %s41, %s55
      %s467 = sor.u32 %s465, %s466
      %p468 = scmp.eq.s32.totalorder %s467, 0
      %s470 = sadd.s32 %s469, 1
      %s471 = scalar_select %p468, %s469, %s470
      %p474 = pneg %p468
      %p475 = scmp.eq.s32.totalorder %s33, 1
      %p476 = por %p474, %p475
      %p477 = scmp.ne.s32.totalorder %s469, %s472
      %p478 = scmp.eq.s32.totalorder %s33, 0
      %p479 = por %p477, %p478
      %p480 = scmp.ne.s32.totalorder %s469, %s472
      %p481 = scmp.eq.s32.totalorder %s38, 1
      %p482 = por %p480, %p481
      %p483 = scmp.ne.s32.totalorder %s472, %s473
      %p484 = scmp.eq.s32.totalorder %s38, 0
      %p485 = por %p483, %p484
      %p486 = scmp.ne.s32.totalorder %s472, %s473
      %p487 = scmp.eq.s32.totalorder %s39, 1
      %p488 = por %p486, %p487
      %p490 = scmp.ne.s32.totalorder %s473, %s489
      %p491 = scmp.eq.s32.totalorder %s39, 0
      %p492 = por %p490, %p491
      %p493 = scmp.le.s32.totalorder 1, %s33
      %p494 = scmp.lt.s32.totalorder %s33, 3
      %p495 = pnand %p493, %p494
      %p496 = pneg %p495
      // Predicated region
      $region9: #{tpu_custom_call.1} parent=5 // pred_check
        _
      $region10: #{tpu_custom_call.1} parent=5 // pred_check_branch
        %498 = sbr.rel (%p495) target = $region12
      $region11: #{tpu_custom_call.1} parent=5 // pred_region
        %s499 = ssub.s32 %s33, 1
        // Predicated region
        $region13: #{tpu_custom_call.1} parent=11 // pred_check
          %p500 = pneg %p127
        $region14: #{tpu_custom_call.1} parent=11 // pred_check_branch
          %502 = sbr.rel (%p500) target = $region16
        $region15: #{tpu_custom_call.1} parent=11 // pred_region
          _
        $region16: #{tpu_custom_call.1} parent=11 // pred_fallthru
          _
        // Predicated region
        $region17: #{tpu_custom_call.1} parent=11 // pred_check
          %p503 = pneg %p148
        $region18: #{tpu_custom_call.1} parent=11 // pred_check_branch
          %505 = sbr.rel (%p503) target = $region20
        $region19: #{tpu_custom_call.1} parent=11 // pred_region
          _
        $region20: #{tpu_custom_call.1} parent=11 // pred_fallthru
          _
        // Predicated region
        $region21: #{tpu_custom_call.1} parent=11 // pred_check
          %p506 = pneg %p169
        $region22: #{tpu_custom_call.1} parent=11 // pred_check_branch
          %508 = sbr.rel (%p506) target = $region24
        $region23: #{tpu_custom_call.1} parent=11 // pred_region
          _
        $region24: #{tpu_custom_call.1} parent=11 // pred_fallthru
          _
        // Predicated region
        $region25: #{tpu_custom_call.1} parent=11 // pred_check
          %p509 = pneg %p190
        $region26: #{tpu_custom_call.1} parent=11 // pred_check_branch
          %511 = sbr.rel (%p509) target = $region28
        $region27: #{tpu_custom_call.1} parent=11 // pred_region
          _
        $region28: #{tpu_custom_call.1} parent=11 // pred_fallthru
          _
        // Predicated region
        $region29: #{tpu_custom_call.1} parent=11 // pred_check
          %p512 = pneg %p211
        $region30: #{tpu_custom_call.1} parent=11 // pred_check_branch
          %514 = sbr.rel (%p512) target = $region32
        $region31: #{tpu_custom_call.1} parent=11 // pred_region
          _
        $region32: #{tpu_custom_call.1} parent=11 // pred_fallthru
          _
        // Predicated region
        $region33: #{tpu_custom_call.1} parent=11 // pred_check
          %p515 = pneg %p232
        $region34: #{tpu_custom_call.1} parent=11 // pred_check_branch
          %517 = sbr.rel (%p515) target = $region36
        $region35: #{tpu_custom_call.1} parent=11 // pred_region
          _
        $region36: #{tpu_custom_call.1} parent=11 // pred_fallthru
          _
        // Predicated region
        $region37: #{tpu_custom_call.1} parent=11 // pred_check
          %p518 = pneg %p253
        $region38: #{tpu_custom_call.1} parent=11 // pred_check_branch
          %520 = sbr.rel (%p518) target = $region40
        $region39: #{tpu_custom_call.1} parent=11 // pred_region
          _
        $region40: #{tpu_custom_call.1} parent=11 // pred_fallthru
          _
        // Predicated region
        $region41: #{tpu_custom_call.1} parent=11 // pred_check
          %p521 = pneg %p274
        $region42: #{tpu_custom_call.1} parent=11 // pred_check_branch
          %523 = sbr.rel (%p521) target = $region44
        $region43: #{tpu_custom_call.1} parent=11 // pred_region
          _
        $region44: #{tpu_custom_call.1} parent=11 // pred_fallthru
          _
        // Predicated region
        $region45: #{tpu_custom_call.1} parent=11 // pred_check
          %p524 = pneg %p295
        $region46: #{tpu_custom_call.1} parent=11 // pred_check_branch
          %526 = sbr.rel (%p524) target = $region48
        $region47: #{tpu_custom_call.1} parent=11 // pred_region
          _
        $region48: #{tpu_custom_call.1} parent=11 // pred_fallthru
          _
        // Predicated region
        $region49: #{tpu_custom_call.1} parent=11 // pred_check
          %p527 = pneg %p316
        $region50: #{tpu_custom_call.1} parent=11 // pred_check_branch
          %529 = sbr.rel (%p527) target = $region52
        $region51: #{tpu_custom_call.1} parent=11 // pred_region
          _
        $region52: #{tpu_custom_call.1} parent=11 // pred_fallthru
          _
        // Predicated region
        $region53: #{tpu_custom_call.1} parent=11 // pred_check
          %p530 = pneg %p342
        $region54: #{tpu_custom_call.1} parent=11 // pred_check_branch
          %532 = sbr.rel (%p530) target = $region56
        $region55: #{tpu_custom_call.1} parent=11 // pred_region
          %s533 = smul.u32 2, %s45
          %p534 = scmp.lt.s32.totalorder %s533, 1
          %s535 = scalar_select %p534, %s533, 1
          %s536 = smul.addr %s535, 4
          %s537 = scalar_lea.vmem %s12, %s536
          %s538 = smul.u32 2, %s45
        $region56: #{tpu_custom_call.1} parent=11 // pred_fallthru
          _
        // Predicated region
        $region57: #{tpu_custom_call.1} parent=11 // pred_check
          %p539 = pneg %p368
        $region58: #{tpu_custom_call.1} parent=11 // pred_check_branch
          %541 = sbr.rel (%p539) target = $region60
        $region59: #{tpu_custom_call.1} parent=11 // pred_region
          %s542 = smul.u32 2, %s45
          %p543 = scmp.lt.s32.totalorder %s542, 1
          %s544 = scalar_select %p543, %s542, 1
          %s545 = scalar_lea.vmem %s13, %s544
          %s546 = smul.u32 2, %s45
        $region60: #{tpu_custom_call.1} parent=11 // pred_fallthru
          _
        // Predicated region
        $region61: #{tpu_custom_call.1} parent=11 // pred_check
          %p547 = pneg %p394
        $region62: #{tpu_custom_call.1} parent=11 // pred_check_branch
          %549 = sbr.rel (%p547) target = $region64
        $region63: #{tpu_custom_call.1} parent=11 // pred_region
          %s550 = smul.u32 32, %s45
          %p551 = scmp.lt.s32.totalorder %s550, 31
          %s552 = scalar_select %p551, %s550, 31
          %s553 = smul.addr %s552, 4
          %s554 = scalar_lea.vmem %s14, %s553
          %s555 = smul.u32 32, %s45
        $region64: #{tpu_custom_call.1} parent=11 // pred_fallthru
          _
        // Predicated region
        $region65: #{tpu_custom_call.1} parent=11 // pred_check
          %p556 = pneg %p415
        $region66: #{tpu_custom_call.1} parent=11 // pred_check_branch
          %558 = sbr.rel (%p556) target = $region68
        $region67: #{tpu_custom_call.1} parent=11 // pred_region
          _
        $region68: #{tpu_custom_call.1} parent=11 // pred_fallthru
          _
        // Predicated region
        $region69: #{tpu_custom_call.1} parent=11 // pred_check
          %p559 = pneg %p436
        $region70: #{tpu_custom_call.1} parent=11 // pred_check_branch
          %561 = sbr.rel (%p559) target = $region72
        $region71: #{tpu_custom_call.1} parent=11 // pred_region
          _
        $region72: #{tpu_custom_call.1} parent=11 // pred_fallthru
          _
        // Predicated region
        $region73: #{tpu_custom_call.1} parent=11 // pred_check
          %p562 = pneg %p457
        $region74: #{tpu_custom_call.1} parent=11 // pred_check_branch
          %564 = sbr.rel (%p562) target = $region76
        $region75: #{tpu_custom_call.1} parent=11 // pred_region
          _
        $region76: #{tpu_custom_call.1} parent=11 // pred_fallthru
          _
      $region12: #{tpu_custom_call.1} parent=5 // pred_fallthru
        _
      %p565 = scmp.lt.s32.totalorder %s33, 2
      // Predicated region
      $region77: #{tpu_custom_call.1} parent=5 // pred_check
        %p566 = pneg %p565
      $region78: #{tpu_custom_call.1} parent=5 // pred_check_branch
        %568 = sbr.rel (%p566) target = $region80
      $region79: #{tpu_custom_call.1} parent=5 // pred_region
        // Predicated region
        $region81: #{tpu_custom_call.1} parent=79 // pred_check
          %p569 = pneg %p72
        $region82: #{tpu_custom_call.1} parent=79 // pred_check_branch
          %571 = sbr.rel (%p569) target = $region84
        $region83: #{tpu_custom_call.1} parent=79 // pred_region
          %s572 = sand.u32 %s62, 1
          %s573 = scalar_lea.sflag [#allocation8], %s572
          %s574 = sand.u32 %s62, 1
          %s575 = smul.addr %s574, 8
          %s576 = scalar_lea.vmem [#allocation7], %s575
          %s578 = ssub.s32 128, 128
          %579 = vsyncadd %s573, %s578
          %s580 = smul.addr %s40, 128
          %s581 = scalar_lea.hbm %s0, %s580
          %s583 = sshll.u32 %s576, 4
          %s584 = int_to_ptr.vmem [resolvable:$true] %s583
          %586 = dma.hbm_to_vmem [thread:$0]  %s581, 128, %s584, %s573
        $region84: #{tpu_custom_call.1} parent=79 // pred_fallthru
          _
        // Predicated region
        $region85: #{tpu_custom_call.1} parent=79 // pred_check
          %p587 = pneg %p100
        $region86: #{tpu_custom_call.1} parent=79 // pred_check_branch
          %589 = sbr.rel (%p587) target = $region88
        $region87: #{tpu_custom_call.1} parent=79 // pred_region
          %s590 = sand.u32 %s90, 1
          %s591 = scalar_lea.sflag [#allocation11], %s590
          %s592 = sand.u32 %s90, 1
          %s593 = smul.addr %s592, 8
          %s594 = scalar_lea.vmem [#allocation10], %s593
          %s596 = ssub.s32 128, 128
          %597 = vsyncadd %s591, %s596
          %s598 = sadd.s32 %s41, %s40
          %s599 = smul.addr %s598, 128
          %s600 = scalar_lea.hbm %s1, %s599
          %s602 = sshll.u32 %s594, 4
          %s603 = int_to_ptr.vmem [resolvable:$true] %s602
          %605 = dma.hbm_to_vmem [thread:$0]  %s600, 128, %s603, %s591
        $region88: #{tpu_custom_call.1} parent=79 // pred_fallthru
          _
      $region80: #{tpu_custom_call.1} parent=5 // pred_fallthru
        _
      %p606 = scmp.le.s32.totalorder 1, %s33
      %p607 = scmp.lt.s32.totalorder %s33, 3
      %p608 = pnand %p606, %p607
      %p609 = pneg %p608
      // Predicated region
      $region89: #{tpu_custom_call.1} parent=5 // pred_check
        _
      $region90: #{tpu_custom_call.1} parent=5 // pred_check_branch
        %611 = sbr.rel (%p608) target = $region92
      $region91: #{tpu_custom_call.1} parent=5 // pred_region
        %s612 = ssub.s32 %s33, 1
        %s613 = sand.u32 %s65, 1
        %s614 = scalar_lea.sflag [#allocation8], %s613
        %s615 = sand.u32 %s65, 1
        %s616 = smul.addr %s615, 8
        %s617 = scalar_lea.vmem [#allocation7], %s616
        // Predicated region
        $region93: #{tpu_custom_call.1} parent=91 // pred_check
          %p618 = pneg %p78
        $region94: #{tpu_custom_call.1} parent=91 // pred_check_branch
          %620 = sbr.rel (%p618) target = $region96
        $region95: #{tpu_custom_call.1} parent=91 // pred_region
          %621 = dma.done %s614, 128
        $region96: #{tpu_custom_call.1} parent=91 // pred_fallthru
          _
        %s622 = sand.u32 %s93, 1
        %s623 = scalar_lea.sflag [#allocation11], %s622
        %s624 = sand.u32 %s93, 1
        %s625 = smul.addr %s624, 8
        %s626 = scalar_lea.vmem [#allocation10], %s625
        // Predicated region
        $region97: #{tpu_custom_call.1} parent=91 // pred_check
          %p627 = pneg %p106
        $region98: #{tpu_custom_call.1} parent=91 // pred_check_branch
          %629 = sbr.rel (%p627) target = $region100
        $region99: #{tpu_custom_call.1} parent=91 // pred_region
          %630 = dma.done %s623, 128
        $region100: #{tpu_custom_call.1} parent=91 // pred_fallthru
          _
        %s631 = sand.u32 %s65, 1
        %s632 = scalar_lea.sflag [#allocation8], %s631
        %s633 = sand.u32 %s65, 1
        %s634 = smul.addr %s633, 8
        %s635 = scalar_lea.vmem [#allocation7], %s634
        %p636 = pneg %p78
        %p637 = pneg %p75
        %s638 = sand.u32 %s93, 1
        %s639 = scalar_lea.sflag [#allocation11], %s638
        %s640 = sand.u32 %s93, 1
        %s641 = smul.addr %s640, 8
        %s642 = scalar_lea.vmem [#allocation10], %s641
        %p643 = pneg %p106
        %p644 = pneg %p103
        %p645 = pneg %p127
        %p646 = pneg %p124
        %p647 = pneg %p148
        %p648 = pneg %p145
        %p649 = pneg %p169
        %p650 = pneg %p166
        %p651 = pneg %p190
        %p652 = pneg %p187
        %p653 = pneg %p211
        %p654 = pneg %p208
        %p655 = pneg %p232
        %p656 = pneg %p229
        %p657 = pneg %p253
        %p658 = pneg %p250
        %p659 = pneg %p274
        %p660 = pneg %p271
        %p661 = pneg %p295
        %p662 = pneg %p292
        %p663 = pneg %p316
        %p664 = pneg %p313
        %s665 = smul.u32 2, %s45
        %p666 = scmp.lt.s32.totalorder %s665, 1
        %s667 = scalar_select %p666, %s665, 1
        %s668 = smul.addr %s667, 4
        %s669 = scalar_lea.vmem %s12, %s668
        %p670 = pneg %p342
        %p671 = pneg %p339
        %s672 = smul.u32 2, %s45
        %p673 = scmp.lt.s32.totalorder %s672, 1
        %s674 = scalar_select %p673, %s672, 1
        %s675 = scalar_lea.vmem %s13, %s674
        %p676 = pneg %p368
        %p677 = pneg %p365
        %s678 = smul.u32 32, %s45
        %p679 = scmp.lt.s32.totalorder %s678, 31
        %s680 = scalar_select %p679, %s678, 31
        %s681 = smul.addr %s680, 4
        %s682 = scalar_lea.vmem %s14, %s681
        %p683 = pneg %p394
        %p684 = pneg %p391
        %p685 = pneg %p415
        %p686 = pneg %p412
        %p687 = pneg %p436
        %p688 = pneg %p433
        %p689 = pneg %p457
        %p690 = pneg %p454
        %p691 = pneg %p485
        %p692 = pneg %p482
        %s693 = sand.u32 %s472, 1
        %s694 = scalar_lea.sflag [#allocation9], %s693
        %s695 = sand.u32 %s472, 1
        %s696 = smul.addr %s695, 8
        %s697 = scalar_lea.vmem [#allocation12], %s696
        %s698 = smul.u32 2, %s45
        %p699 = scmp.lt.s32.totalorder %s698, 1
        %s700 = scalar_select %p699, %s698, 1
        %s701 = smul.addr %s700, 4
        %s702 = scalar_lea.vmem %s12, %s701
        %s703 = smul.u32 2, %s45
        %s704 = smul.u32 2, %s45
        %p705 = scmp.lt.s32.totalorder %s704, 1
        %s706 = scalar_select %p705, %s704, 1
        %s707 = scalar_lea.vmem %s13, %s706
        %s708 = smul.u32 2, %s45
        %s709 = smul.u32 32, %s45
        %p710 = scmp.lt.s32.totalorder %s709, 31
        %s711 = scalar_select %p710, %s709, 31
        %s712 = smul.addr %s711, 4
        %s713 = scalar_lea.vmem %s14, %s712
        %s714 = smul.u32 32, %s45
        %p716 = scmp.eq.s32.totalorder %s44, 0
        %p717 = scmp.eq.s32.totalorder %s45, 0
        %p718 = pnand %p716, %p717
        %p719 = pneg %p718
        // Predicated region
        $region101: #{tpu_custom_call.1} parent=91 // pred_check
          _
        $region102: #{tpu_custom_call.1} parent=91 // pred_check_branch
          %721 = sbr.rel (%p718) target = $region104
        $region103: #{tpu_custom_call.1} parent=91 // pred_region
          %v722 = vld [vmem:[%s617] sm:$0xff]
          %v723 = vpack.c.bf16 %v722, %v722
          %v724 = vld [vmem:[%s4] sm:$0xf]
          %v725 = vld [vmem:[%s4 + $0x4] sm:$0xf]
          %v726 = vld [vmem:[%s4 + $0x8] sm:$0xf]
          %v727 = vld [vmem:[%s4 + $0xc] sm:$0xf]
          %v728 = vld [vmem:[%s4 + $0x10] sm:$0xf]
          %v729 = vld [vmem:[%s4 + $0x14] sm:$0xf]
          %v730 = vld [vmem:[%s4 + $0x18] sm:$0xf]
          %v731 = vld [vmem:[%s4 + $0x1c] sm:$0xf]
          %v732 = vld [vmem:[%s5] sm:$0x1]
          %v734 = vlaneseq
          %v735 = vshrl.u32 %v734, 7
          %v736 = vsub.s32 0, %v735
          %v737 = vrot.slane %v732, %v736
          %v747 = vunpack.c.l.b16 %v724
          %v748 = vunpack.c.l.b16 %v725
          %v749 = vunpack.c.l.b16 %v726
          %v750 = vunpack.c.l.b16 %v727
          %v751 = vunpack.c.l.b16 %v728
          %v752 = vunpack.c.l.b16 %v729
          %v753 = vunpack.c.l.b16 %v730
          %v754 = vunpack.c.l.b16 %v731
          %v755 = vpack.c.b16 %v748, %v747
          %v756 = vpack.c.b16 %v750, %v749
          %v757 = vpack.c.b16 %v752, %v751
          %v758 = vpack.c.b16 %v754, %v753
          %vm763 = vcmask 523264
          %v765 = vsel %vm763, %v723, 0
          %767 = vmatprep.subr.bf16.mxu0 0
          %768 = vmatpush1.bf16.msra.mxu0 %v755
          %769 = vmatprep.subr.bf16.mxu0 0
          %770 = vmatpush1.bf16.msra.mxu0 %v756
          %771 = vmatprep.subr.bf16.mxu0 0
          %772 = vmatpush1.bf16.msra.mxu0 %v757
          %773 = vmatprep.subr.bf16.mxu0 0
          %774 = vmatpush1.bf16.msra.mxu0 %v758
          %775 = vmatprep.subr.bf16.mxu0 0
          %776 = vmatpush1.bf16.msra.mxu0 0
          %777 = vmatprep.subr.bf16.mxu0 0
          %778 = vmatpush1.bf16.msra.mxu0 0
          %779 = vmatprep.subr.bf16.mxu0 0
          %780 = vmatpush1.bf16.msra.mxu0 0
          %781 = vmatprep.subr.bf16.mxu0 0
          %782 = vmatpush1.bf16.msra.mxu0 0
          %783 = vmatprep.subr.bf16.mxu0 0
          %784 = vmatpush1.bf16.msra.mxu0 0
          %785 = vmatprep.subr.bf16.mxu0 0
          %786 = vmatpush1.bf16.msra.mxu0 0
          %787 = vmatprep.subr.bf16.mxu0 0
          %788 = vmatpush1.bf16.msra.mxu0 0
          %789 = vmatprep.subr.bf16.mxu0 0
          %790 = vmatpush1.bf16.msra.mxu0 0
          %791 = vmatprep.subr.bf16.mxu0 0
          %792 = vmatpush1.bf16.msra.mxu0 0
          %793 = vmatprep.subr.bf16.mxu0 0
          %794 = vmatpush1.bf16.msra.mxu0 0
          %795 = vmatprep.subr.bf16.mxu0 0
          %796 = vmatpush1.bf16.msra.mxu0 0
          %797 = vmatprep.subr.bf16.mxu0 0
          %798 = vmatpush1.bf16.msra.mxu0 0
          %799 = vmatprep.mubr.bf16.mxu0 0
          %800 = vmatmul.mubr.bf16.gmra.mrb[0].mxu0 %v765
          %v801 = vpop.f32.mrb[0].mxu0
          %v802 = vadd.f32 %v737, %v801
          %v803 = vpop.f32.mrb[0].mxu0
          %v804 = vpop.f32.mrb[0].mxu0
          %v805 = vpop.f32.mrb[0].mxu0
          %806 = vdwg.mxu0
          %v807 = vld [vmem:[%s6] sm:$0xf]
          %v808 = vld [vmem:[%s6 + $0x4] sm:$0xf]
          %v809 = vld [vmem:[%s6 + $0x8] sm:$0xf]
          %v810 = vld [vmem:[%s6 + $0xc] sm:$0xf]
          %v811 = vld [vmem:[%s6 + $0x10] sm:$0xf]
          %v812 = vld [vmem:[%s6 + $0x14] sm:$0xf]
          %v813 = vld [vmem:[%s6 + $0x18] sm:$0xf]
          %v814 = vld [vmem:[%s6 + $0x1c] sm:$0xf]
          %v815 = vld [vmem:[%s7] sm:$0x1]
          %v817 = vlaneseq
          %v818 = vshrl.u32 %v817, 7
          %v819 = vsub.s32 0, %v818
          %v820 = vrot.slane %v815, %v819
          %v830 = vunpack.c.l.b16 %v807
          %v831 = vunpack.c.l.b16 %v808
          %v832 = vunpack.c.l.b16 %v809
          %v833 = vunpack.c.l.b16 %v810
          %v834 = vunpack.c.l.b16 %v811
          %v835 = vunpack.c.l.b16 %v812
          %v836 = vunpack.c.l.b16 %v813
          %v837 = vunpack.c.l.b16 %v814
          %v838 = vpack.c.b16 %v831, %v830
          %v839 = vpack.c.b16 %v833, %v832
          %v840 = vpack.c.b16 %v835, %v834
          %v841 = vpack.c.b16 %v837, %v836
          %846 = vmatprep.subr.bf16.mxu0 0
          %847 = vmatpush1.bf16.msra.mxu0 %v838
          %848 = vmatprep.subr.bf16.mxu0 0
          %849 = vmatpush1.bf16.msra.mxu0 %v839
          %850 = vmatprep.subr.bf16.mxu0 0
          %851 = vmatpush1.bf16.msra.mxu0 %v840
          %852 = vmatprep.subr.bf16.mxu0 0
          %853 = vmatpush1.bf16.msra.mxu0 %v841
          %854 = vmatprep.subr.bf16.mxu0 0
          %855 = vmatpush1.bf16.msra.mxu0 0
          %856 = vmatprep.subr.bf16.mxu0 0
          %857 = vmatpush1.bf16.msra.mxu0 0
          %858 = vmatprep.subr.bf16.mxu0 0
          %859 = vmatpush1.bf16.msra.mxu0 0
          %860 = vmatprep.subr.bf16.mxu0 0
          %861 = vmatpush1.bf16.msra.mxu0 0
          %862 = vmatprep.subr.bf16.mxu0 0
          %863 = vmatpush1.bf16.msra.mxu0 0
          %864 = vmatprep.subr.bf16.mxu0 0
          %865 = vmatpush1.bf16.msra.mxu0 0
          %866 = vmatprep.subr.bf16.mxu0 0
          %867 = vmatpush1.bf16.msra.mxu0 0
          %868 = vmatprep.subr.bf16.mxu0 0
          %869 = vmatpush1.bf16.msra.mxu0 0
          %870 = vmatprep.subr.bf16.mxu0 0
          %871 = vmatpush1.bf16.msra.mxu0 0
          %872 = vmatprep.subr.bf16.mxu0 0
          %873 = vmatpush1.bf16.msra.mxu0 0
          %874 = vmatprep.subr.bf16.mxu0 0
          %875 = vmatpush1.bf16.msra.mxu0 0
          %876 = vmatprep.subr.bf16.mxu0 0
          %877 = vmatpush1.bf16.msra.mxu0 0
          %878 = vmatprep.mubr.bf16.mxu0 0
          %879 = vmatmul.mubr.bf16.gmra.mrb[0].mxu0 %v765
          %v880 = vpop.f32.mrb[0].mxu0
          %v881 = vadd.f32 %v820, %v880
          %v882 = vpop.f32.mrb[0].mxu0
          %v883 = vpop.f32.mrb[0].mxu0
          %v884 = vpop.f32.mrb[0].mxu0
          %885 = vdwg.mxu0
          %v886 = vpack.c.bf16 %v802, %v802
          %vm887 = vcmask 519168
          %888 = vst.msk [vmem:[#allocation2] sm:$0xf] %vm887, %v886
          %v889 = vpack.c.bf16 %v881, %v881
          %890 = vst.msk [vmem:[#allocation3] sm:$0xf] %vm887, %v889
        $region104: #{tpu_custom_call.1} parent=91 // pred_fallthru
          _
        // Predicated region
        $region105: #{tpu_custom_call.1} parent=91 // pred_check
          %p891 = pneg %p717
        $region106: #{tpu_custom_call.1} parent=91 // pred_check_branch
          %893 = sbr.rel (%p891) target = $region108
        $region107: #{tpu_custom_call.1} parent=91 // pred_region
          %v894 = vld [vmem:[%s626] sm:$0xff]
          %v895 = vpack.c.bf16 %v894, %v894
          %v896 = vld [vmem:[%s2] sm:$0xf]
          %v897 = vld [vmem:[%s2 + $0x4] sm:$0xf]
          %v898 = vld [vmem:[%s2 + $0x8] sm:$0xf]
          %v899 = vld [vmem:[%s2 + $0xc] sm:$0xf]
          %v900 = vld [vmem:[%s2 + $0x10] sm:$0xf]
          %v901 = vld [vmem:[%s2 + $0x14] sm:$0xf]
          %v902 = vld [vmem:[%s2 + $0x18] sm:$0xf]
          %v903 = vld [vmem:[%s2 + $0x1c] sm:$0xf]
          %v904 = vld [vmem:[%s3] sm:$0x1]
          %v906 = vlaneseq
          %v907 = vshrl.u32 %v906, 7
          %v908 = vsub.s32 0, %v907
          %v909 = vrot.slane %v904, %v908
          %v919 = vunpack.c.l.b16 %v896
          %v920 = vunpack.c.l.b16 %v897
          %v921 = vunpack.c.l.b16 %v898
          %v922 = vunpack.c.l.b16 %v899
          %v923 = vunpack.c.l.b16 %v900
          %v924 = vunpack.c.l.b16 %v901
          %v925 = vunpack.c.l.b16 %v902
          %v926 = vunpack.c.l.b16 %v903
          %v927 = vpack.c.b16 %v920, %v919
          %v928 = vpack.c.b16 %v922, %v921
          %v929 = vpack.c.b16 %v924, %v923
          %v930 = vpack.c.b16 %v926, %v925
          %vm935 = vcmask 523264
          %v937 = vsel %vm935, %v895, 0
          %939 = vmatprep.subr.bf16.mxu0 0
          %940 = vmatpush1.bf16.msra.mxu0 %v927
          %941 = vmatprep.subr.bf16.mxu0 0
          %942 = vmatpush1.bf16.msra.mxu0 %v928
          %943 = vmatprep.subr.bf16.mxu0 0
          %944 = vmatpush1.bf16.msra.mxu0 %v929
          %945 = vmatprep.subr.bf16.mxu0 0
          %946 = vmatpush1.bf16.msra.mxu0 %v930
          %947 = vmatprep.subr.bf16.mxu0 0
          %948 = vmatpush1.bf16.msra.mxu0 0
          %949 = vmatprep.subr.bf16.mxu0 0
          %950 = vmatpush1.bf16.msra.mxu0 0
          %951 = vmatprep.subr.bf16.mxu0 0
          %952 = vmatpush1.bf16.msra.mxu0 0
          %953 = vmatprep.subr.bf16.mxu0 0
          %954 = vmatpush1.bf16.msra.mxu0 0
          %955 = vmatprep.subr.bf16.mxu0 0
          %956 = vmatpush1.bf16.msra.mxu0 0
          %957 = vmatprep.subr.bf16.mxu0 0
          %958 = vmatpush1.bf16.msra.mxu0 0
          %959 = vmatprep.subr.bf16.mxu0 0
          %960 = vmatpush1.bf16.msra.mxu0 0
          %961 = vmatprep.subr.bf16.mxu0 0
          %962 = vmatpush1.bf16.msra.mxu0 0
          %963 = vmatprep.subr.bf16.mxu0 0
          %964 = vmatpush1.bf16.msra.mxu0 0
          %965 = vmatprep.subr.bf16.mxu0 0
          %966 = vmatpush1.bf16.msra.mxu0 0
          %967 = vmatprep.subr.bf16.mxu0 0
          %968 = vmatpush1.bf16.msra.mxu0 0
          %969 = vmatprep.subr.bf16.mxu0 0
          %970 = vmatpush1.bf16.msra.mxu0 0
          %971 = vmatprep.mubr.bf16.mxu0 0
          %972 = vmatmul.mubr.bf16.gmra.mrb[0].mxu0 %v937
          %v973 = vpop.f32.mrb[0].mxu0
          %v974 = vadd.f32 %v909, %v973
          %v975 = vpop.f32.mrb[0].mxu0
          %v976 = vpop.f32.mrb[0].mxu0
          %v977 = vpop.f32.mrb[0].mxu0
          %978 = vdwg.mxu0
          %v979 = vmul.f32 %v974, 0.35355338
          %v980 = vpack.c.bf16 %v979, %v979
          %v981 = vld [vmem:[#allocation2] sm:$0xf]
          %v982 = vld [vmem:[#allocation3] sm:$0xf]
          %vm983 = vcmask 64512
          %v985 = vsel %vm983, %v980, 0
          %v988 = vsel %vm983, %v981, 0
          %990 = vmatprep.subr.bf16.mxu0 0
          %991 = vmatpush1.bf16.xpose.msra.mxu0 %v988
          %992 = vmatprep.subr.bf16.mxu0 0
          %993 = vmatpush1.bf16.xpose.msra.mxu0 0
          %994 = vmatprep.subr.bf16.mxu0 0
          %995 = vmatpush1.bf16.xpose.msra.mxu0 0
          %996 = vmatprep.subr.bf16.mxu0 0
          %997 = vmatpush1.bf16.xpose.msra.mxu0 0
          %998 = vmatprep.subr.bf16.mxu0 0
          %999 = vmatpush1.bf16.xpose.msra.mxu0 0
          %1000 = vmatprep.subr.bf16.mxu0 0
          %1001 = vmatpush1.bf16.xpose.msra.mxu0 0
          %1002 = vmatprep.subr.bf16.mxu0 0
          %1003 = vmatpush1.bf16.xpose.msra.mxu0 0
          %1004 = vmatprep.subr.bf16.mxu0 0
          %1005 = vmatpush1.bf16.xpose.msra.mxu0 0
          %1006 = vmatprep.subr.bf16.mxu0 0
          %1007 = vmatpush1.bf16.xpose.msra.mxu0 0
          %1008 = vmatprep.subr.bf16.mxu0 0
          %1009 = vmatpush1.bf16.xpose.msra.mxu0 0
          %1010 = vmatprep.subr.bf16.mxu0 0
          %1011 = vmatpush1.bf16.xpose.msra.mxu0 0
          %1012 = vmatprep.subr.bf16.mxu0 0
          %1013 = vmatpush1.bf16.xpose.msra.mxu0 0
          %1014 = vmatprep.subr.bf16.mxu0 0
          %1015 = vmatpush1.bf16.xpose.msra.mxu0 0
          %1016 = vmatprep.subr.bf16.mxu0 0
          %1017 = vmatpush1.bf16.xpose.msra.mxu0 0
          %1018 = vmatprep.subr.bf16.mxu0 0
          %1019 = vmatpush1.bf16.xpose.msra.mxu0 0
          %1020 = vmatprep.subr.bf16.mxu0 0
          %1021 = vmatpush1.bf16.xpose.msra.mxu0 0
          %1022 = vmatprep.mubr.bf16.mxu0 0
          %1023 = vmatmul.mubr.bf16.gmra.mrb[0].mxu0 %v985
          %v1024 = vpop.f32.mrb[0].mxu0
          %v1025 = vadd.f32 0.0, %v1024
          %v1026 = vpop.f32.mrb[0].mxu0
          %v1027 = vpop.f32.mrb[0].mxu0
          %v1028 = vpop.f32.mrb[0].mxu0
          %1029 = vdwg.mxu0
          %v1030 = vsel %vm983, %v1025, -inf
          %1031 = vmax.xlane.f32.xlu0 %v1030
          %v1032 = vpop.xlane.xlu0 %1031
          %v1033 = vsub.f32 %v1025, %v1032
          %v1034 = vmul.f32 %v1033, 1.442695
          %v1035 = vpow.pop %v1034
          %v1036 = vsel %vm983, %v1035, 0.0
          %1037 = vadd.xlane.f32.xlu0 %v1036
          %v1038 = vpop.xlane.xlu0 %1037
          %v1039 = vrcp.pop %v1038
          %v1040 = vmul.f32 %v1035, %v1039
          %v1041 = vpack.c.bf16 %v1040, %v1040
          %v1043 = vsel %vm983, %v1041, 0
          %vm1045 = vcmask 1043456
          %v1047 = vsel %vm1045, %v982, 0
          %1049 = vmatprep.subr.bf16.mxu0 0
          %1050 = vmatpush1.bf16.msra.mxu0 %v1047
          %1051 = vmatprep.subr.bf16.mxu0 0
          %1052 = vmatpush1.bf16.msra.mxu0 0
          %1053 = vmatprep.subr.bf16.mxu0 0
          %1054 = vmatpush1.bf16.msra.mxu0 0
          %1055 = vmatprep.subr.bf16.mxu0 0
          %1056 = vmatpush1.bf16.msra.mxu0 0
          %1057 = vmatprep.subr.bf16.mxu0 0
          %1058 = vmatpush1.bf16.msra.mxu0 0
          %1059 = vmatprep.subr.bf16.mxu0 0
          %1060 = vmatpush1.bf16.msra.mxu0 0
          %1061 = vmatprep.subr.bf16.mxu0 0
          %1062 = vmatpush1.bf16.msra.mxu0 0
          %1063 = vmatprep.subr.bf16.mxu0 0
          %1064 = vmatpush1.bf16.msra.mxu0 0
          %1065 = vmatprep.subr.bf16.mxu0 0
          %1066 = vmatpush1.bf16.msra.mxu0 0
          %1067 = vmatprep.subr.bf16.mxu0 0
          %1068 = vmatpush1.bf16.msra.mxu0 0
          %1069 = vmatprep.subr.bf16.mxu0 0
          %1070 = vmatpush1.bf16.msra.mxu0 0
          %1071 = vmatprep.subr.bf16.mxu0 0
          %1072 = vmatpush1.bf16.msra.mxu0 0
          %1073 = vmatprep.subr.bf16.mxu0 0
          %1074 = vmatpush1.bf16.msra.mxu0 0
          %1075 = vmatprep.subr.bf16.mxu0 0
          %1076 = vmatpush1.bf16.msra.mxu0 0
          %1077 = vmatprep.subr.bf16.mxu0 0
          %1078 = vmatpush1.bf16.msra.mxu0 0
          %1079 = vmatprep.subr.bf16.mxu0 0
          %1080 = vmatpush1.bf16.msra.mxu0 0
          %1081 = vmatprep.mubr.bf16.mxu0 0
          %1082 = vmatmul.mubr.bf16.gmra.mrb[0].mxu0 %v1043
          %v1083 = vpop.f32.mrb[0].mxu0
          %v1084 = vadd.f32 0.0, %v1083
          %v1085 = vpop.f32.mrb[0].mxu0
          %v1086 = vpop.f32.mrb[0].mxu0
          %v1087 = vpop.f32.mrb[0].mxu0
          %1088 = vdwg.mxu0
          %1089 = vst.msk [vmem:[#allocation4] sm:$0xff] %vm983, %v1084
          %1091 = vrot.lane.b32.xlu0 %v980, 120
          %v1092 = vpop.permute.xlu0 %1091
          %v1094 = vunpack.c.l.b16 %v981
          %v1095 = vpack.c.b16 %v1094, %v1094
          %1096 = vrot.lane.b32.xlu0 %v1095, 120
          %v1097 = vpop.permute.xlu0 %1096
          %v1099 = vsel %vm983, %v1092, 0
          %v1102 = vsel %vm983, %v1097, 0
          %1104 = vmatprep.subr.bf16.mxu0 0
          %1105 = vmatpush1.bf16.xpose.msra.mxu0 %v1102
          %1106 = vmatprep.subr.bf16.mxu0 0
          %1107 = vmatpush1.bf16.xpose.msra.mxu0 0
          %1108 = vmatprep.subr.bf16.mxu0 0
          %1109 = vmatpush1.bf16.xpose.msra.mxu0 0
          %1110 = vmatprep.subr.bf16.mxu0 0
          %1111 = vmatpush1.bf16.xpose.msra.mxu0 0
          %1112 = vmatprep.subr.bf16.mxu0 0
          %1113 = vmatpush1.bf16.xpose.msra.mxu0 0
          %1114 = vmatprep.subr.bf16.mxu0 0
          %1115 = vmatpush1.bf16.xpose.msra.mxu0 0
          %1116 = vmatprep.subr.bf16.mxu0 0
          %1117 = vmatpush1.bf16.xpose.msra.mxu0 0
          %1118 = vmatprep.subr.bf16.mxu0 0
          %1119 = vmatpush1.bf16.xpose.msra.mxu0 0
          %1120 = vmatprep.subr.bf16.mxu0 0
          %1121 = vmatpush1.bf16.xpose.msra.mxu0 0
          %1122 = vmatprep.subr.bf16.mxu0 0
          %1123 = vmatpush1.bf16.xpose.msra.mxu0 0
          %1124 = vmatprep.subr.bf16.mxu0 0
          %1125 = vmatpush1.bf16.xpose.msra.mxu0 0
          %1126 = vmatprep.subr.bf16.mxu0 0
          %1127 = vmatpush1.bf16.xpose.msra.mxu0 0
          %1128 = vmatprep.subr.bf16.mxu0 0
          %1129 = vmatpush1.bf16.xpose.msra.mxu0 0
          %1130 = vmatprep.subr.bf16.mxu0 0
          %1131 = vmatpush1.bf16.xpose.msra.mxu0 0
          %1132 = vmatprep.subr.bf16.mxu0 0
          %1133 = vmatpush1.bf16.xpose.msra.mxu0 0
          %1134 = vmatprep.subr.bf16.mxu0 0
          %1135 = vmatpush1.bf16.xpose.msra.mxu0 0
          %1136 = vmatprep.mubr.bf16.mxu0 0
          %1137 = vmatmul.mubr.bf16.gmra.mrb[0].mxu0 %v1099
          %v1138 = vpop.f32.mrb[0].mxu0
          %v1139 = vadd.f32 0.0, %v1138
          %v1140 = vpop.f32.mrb[0].mxu0
          %v1141 = vpop.f32.mrb[0].mxu0
          %v1142 = vpop.f32.mrb[0].mxu0
          %1143 = vdwg.mxu0
          %v1144 = vsel %vm983, %v1139, -inf
          %1145 = vmax.xlane.f32.xlu0 %v1144
          %v1146 = vpop.xlane.xlu0 %1145
          %v1147 = vsub.f32 %v1139, %v1146
          %v1148 = vmul.f32 %v1147, 1.442695
          %v1149 = vpow.pop %v1148
          %v1150 = vsel %vm983, %v1149, 0.0
          %1151 = vadd.xlane.f32.xlu0 %v1150
          %v1152 = vpop.xlane.xlu0 %1151
          %v1153 = vrcp.pop %v1152
          %v1154 = vmul.f32 %v1149, %v1153
          %v1155 = vpack.c.bf16 %v1154, %v1154
          %v1157 = vunpack.c.l.b16 %v982
          %v1158 = vpack.c.b16 %v1157, %v1157
          %1159 = vrot.lane.b32.xlu0 %v1158, 120
          %v1160 = vpop.permute.xlu0 %1159
          %v1162 = vsel %vm983, %v1155, 0
          %v1165 = vsel %vm1045, %v1160, 0
          %1167 = vmatprep.subr.bf16.mxu0 0
          %1168 = vmatpush1.bf16.msra.mxu0 %v1165
          %1169 = vmatprep.subr.bf16.mxu0 0
          %1170 = vmatpush1.bf16.msra.mxu0 0
          %1171 = vmatprep.subr.bf16.mxu0 0
          %1172 = vmatpush1.bf16.msra.mxu0 0
          %1173 = vmatprep.subr.bf16.mxu0 0
          %1174 = vmatpush1.bf16.msra.mxu0 0
          %1175 = vmatprep.subr.bf16.mxu0 0
          %1176 = vmatpush1.bf16.msra.mxu0 0
          %1177 = vmatprep.subr.bf16.mxu0 0
          %1178 = vmatpush1.bf16.msra.mxu0 0
          %1179 = vmatprep.subr.bf16.mxu0 0
          %1180 = vmatpush1.bf16.msra.mxu0 0
          %1181 = vmatprep.subr.bf16.mxu0 0
          %1182 = vmatpush1.bf16.msra.mxu0 0
          %1183 = vmatprep.subr.bf16.mxu0 0
          %1184 = vmatpush1.bf16.msra.mxu0 0
          %1185 = vmatprep.subr.bf16.mxu0 0
          %1186 = vmatpush1.bf16.msra.mxu0 0
          %1187 = vmatprep.subr.bf16.mxu0 0
          %1188 = vmatpush1.bf16.msra.mxu0 0
          %1189 = vmatprep.subr.bf16.mxu0 0
          %1190 = vmatpush1.bf16.msra.mxu0 0
          %1191 = vmatprep.subr.bf16.mxu0 0
          %1192 = vmatpush1.bf16.msra.mxu0 0
          %1193 = vmatprep.subr.bf16.mxu0 0
          %1194 = vmatpush1.bf16.msra.mxu0 0
          %1195 = vmatprep.subr.bf16.mxu0 0
          %1196 = vmatpush1.bf16.msra.mxu0 0
          %1197 = vmatprep.subr.bf16.mxu0 0
          %1198 = vmatpush1.bf16.msra.mxu0 0
          %1199 = vmatprep.mubr.bf16.mxu0 0
          %1200 = vmatmul.mubr.bf16.gmra.mrb[0].mxu0 %v1162
          %v1201 = vpop.f32.mrb[0].mxu0
          %v1202 = vadd.f32 0.0, %v1201
          %v1203 = vpop.f32.mrb[0].mxu0
          %v1204 = vpop.f32.mrb[0].mxu0
          %v1205 = vpop.f32.mrb[0].mxu0
          %1206 = vdwg.mxu0
          %1208 = vrot.lane.b32.xlu0 %v1202, 8
          %v1209 = vpop.permute.xlu0 %1208
          %vm1211 = vcmask 130112
          %1212 = vst.msk [vmem:[#allocation4] sm:$0xff] %vm1211, %v1209
          %1213 = vrot.lane.b32.xlu0 %v980, 112
          %v1214 = vpop.permute.xlu0 %1213
          %1215 = vrot.lane.b32.xlu0 %v1095, 112
          %v1216 = vpop.permute.xlu0 %1215
          %v1218 = vsel %vm983, %v1214, 0
          %v1221 = vsel %vm983, %v1216, 0
          %1223 = vmatprep.subr.bf16.mxu0 0
          %1224 = vmatpush1.bf16.xpose.msra.mxu0 %v1221
          %1225 = vmatprep.subr.bf16.mxu0 0
          %1226 = vmatpush1.bf16.xpose.msra.mxu0 0
          %1227 = vmatprep.subr.bf16.mxu0 0
          %1228 = vmatpush1.bf16.xpose.msra.mxu0 0
          %1229 = vmatprep.subr.bf16.mxu0 0
          %1230 = vmatpush1.bf16.xpose.msra.mxu0 0
          %1231 = vmatprep.subr.bf16.mxu0 0
          %1232 = vmatpush1.bf16.xpose.msra.mxu0 0
          %1233 = vmatprep.subr.bf16.mxu0 0
          %1234 = vmatpush1.bf16.xpose.msra.mxu0 0
          %1235 = vmatprep.subr.bf16.mxu0 0
          %1236 = vmatpush1.bf16.xpose.msra.mxu0 0
          %1237 = vmatprep.subr.bf16.mxu0 0
          %1238 = vmatpush1.bf16.xpose.msra.mxu0 0
          %1239 = vmatprep.subr.bf16.mxu0 0
          %1240 = vmatpush1.bf16.xpose.msra.mxu0 0
          %1241 = vmatprep.subr.bf16.mxu0 0
          %1242 = vmatpush1.bf16.xpose.msra.mxu0 0
          %1243 = vmatprep.subr.bf16.mxu0 0
          %1244 = vmatpush1.bf16.xpose.msra.mxu0 0
          %1245 = vmatprep.subr.bf16.mxu0 0
          %1246 = vmatpush1.bf16.xpose.msra.mxu0 0
          %1247 = vmatprep.subr.bf16.mxu0 0
          %1248 = vmatpush1.bf16.xpose.msra.mxu0 0
          %1249 = vmatprep.subr.bf16.mxu0 0
          %1250 = vmatpush1.bf16.xpose.msra.mxu0 0
          %1251 = vmatprep.subr.bf16.mxu0 0
          %1252 = vmatpush1.bf16.xpose.msra.mxu0 0
          %1253 = vmatprep.subr.bf16.mxu0 0
          %1254 = vmatpush1.bf16.xpose.msra.mxu0 0
          %1255 = vmatprep.mubr.bf16.mxu0 0
          %1256 = vmatmul.mubr.bf16.gmra.mrb[0].mxu0 %v1218
          %v1257 = vpop.f32.mrb[0].mxu0
          %v1258 = vadd.f32 0.0, %v1257
          %v1259 = vpop.f32.mrb[0].mxu0
          %v1260 = vpop.f32.mrb[0].mxu0
          %v1261 = vpop.f32.mrb[0].mxu0
          %1262 = vdwg.mxu0
          %v1263 = vsel %vm983, %v1258, -inf
          %1264 = vmax.xlane.f32.xlu0 %v1263
          %v1265 = vpop.xlane.xlu0 %1264
          %v1266 = vsub.f32 %v1258, %v1265
          %v1267 = vmul.f32 %v1266, 1.442695
          %v1268 = vpow.pop %v1267
          %v1269 = vsel %vm983, %v1268, 0.0
          %1270 = vadd.xlane.f32.xlu0 %v1269
          %v1271 = vpop.xlane.xlu0 %1270
          %v1272 = vrcp.pop %v1271
          %v1273 = vmul.f32 %v1268, %v1272
          %v1274 = vpack.c.bf16 %v1273, %v1273
          %1275 = vrot.lane.b32.xlu0 %v1158, 112
          %v1276 = vpop.permute.xlu0 %1275
          %v1278 = vsel %vm983, %v1274, 0
          %v1281 = vsel %vm1045, %v1276, 0
          %1283 = vmatprep.subr.bf16.mxu0 0
          %1284 = vmatpush1.bf16.msra.mxu0 %v1281
          %1285 = vmatprep.subr.bf16.mxu0 0
          %1286 = vmatpush1.bf16.msra.mxu0 0
          %1287 = vmatprep.subr.bf16.mxu0 0
          %1288 = vmatpush1.bf16.msra.mxu0 0
          %1289 = vmatprep.subr.bf16.mxu0 0
          %1290 = vmatpush1.bf16.msra.mxu0 0
          %1291 = vmatprep.subr.bf16.mxu0 0
          %1292 = vmatpush1.bf16.msra.mxu0 0
          %1293 = vmatprep.subr.bf16.mxu0 0
          %1294 = vmatpush1.bf16.msra.mxu0 0
          %1295 = vmatprep.subr.bf16.mxu0 0
          %1296 = vmatpush1.bf16.msra.mxu0 0
          %1297 = vmatprep.subr.bf16.mxu0 0
          %1298 = vmatpush1.bf16.msra.mxu0 0
          %1299 = vmatprep.subr.bf16.mxu0 0
          %1300 = vmatpush1.bf16.msra.mxu0 0
          %1301 = vmatprep.subr.bf16.mxu0 0
          %1302 = vmatpush1.bf16.msra.mxu0 0
          %1303 = vmatprep.subr.bf16.mxu0 0
          %1304 = vmatpush1.bf16.msra.mxu0 0
          %1305 = vmatprep.subr.bf16.mxu0 0
          %1306 = vmatpush1.bf16.msra.mxu0 0
          %1307 = vmatprep.subr.bf16.mxu0 0
          %1308 = vmatpush1.bf16.msra.mxu0 0
          %1309 = vmatprep.subr.bf16.mxu0 0
          %1310 = vmatpush1.bf16.msra.mxu0 0
          %1311 = vmatprep.subr.bf16.mxu0 0
          %1312 = vmatpush1.bf16.msra.mxu0 0
          %1313 = vmatprep.subr.bf16.mxu0 0
          %1314 = vmatpush1.bf16.msra.mxu0 0
          %1315 = vmatprep.mubr.bf16.mxu0 0
          %1316 = vmatmul.mubr.bf16.gmra.mrb[0].mxu0 %v1278
          %v1317 = vpop.f32.mrb[0].mxu0
          %v1318 = vadd.f32 0.0, %v1317
          %v1319 = vpop.f32.mrb[0].mxu0
          %v1320 = vpop.f32.mrb[0].mxu0
          %v1321 = vpop.f32.mrb[0].mxu0
          %1322 = vdwg.mxu0
          %1324 = vrot.lane.b32.xlu0 %v1318, 16
          %v1325 = vpop.permute.xlu0 %1324
          %vm1327 = vcmask 195712
          %1328 = vst.msk [vmem:[#allocation4] sm:$0xff] %vm1327, %v1325
          %1329 = vrot.lane.b32.xlu0 %v980, 104
          %v1330 = vpop.permute.xlu0 %1329
          %1331 = vrot.lane.b32.xlu0 %v1095, 104
          %v1332 = vpop.permute.xlu0 %1331
          %v1334 = vsel %vm983, %v1330, 0
          %v1337 = vsel %vm983, %v1332, 0
          %1339 = vmatprep.subr.bf16.mxu0 0
          %1340 = vmatpush1.bf16.xpose.msra.mxu0 %v1337
          %1341 = vmatprep.subr.bf16.mxu0 0
          %1342 = vmatpush1.bf16.xpose.msra.mxu0 0
          %1343 = vmatprep.subr.bf16.mxu0 0
          %1344 = vmatpush1.bf16.xpose.msra.mxu0 0
          %1345 = vmatprep.subr.bf16.mxu0 0
          %1346 = vmatpush1.bf16.xpose.msra.mxu0 0
          %1347 = vmatprep.subr.bf16.mxu0 0
          %1348 = vmatpush1.bf16.xpose.msra.mxu0 0
          %1349 = vmatprep.subr.bf16.mxu0 0
          %1350 = vmatpush1.bf16.xpose.msra.mxu0 0
          %1351 = vmatprep.subr.bf16.mxu0 0
          %1352 = vmatpush1.bf16.xpose.msra.mxu0 0
          %1353 = vmatprep.subr.bf16.mxu0 0
          %1354 = vmatpush1.bf16.xpose.msra.mxu0 0
          %1355 = vmatprep.subr.bf16.mxu0 0
          %1356 = vmatpush1.bf16.xpose.msra.mxu0 0
          %1357 = vmatprep.subr.bf16.mxu0 0
          %1358 = vmatpush1.bf16.xpose.msra.mxu0 0
          %1359 = vmatprep.subr.bf16.mxu0 0
          %1360 = vmatpush1.bf16.xpose.msra.mxu0 0
          %1361 = vmatprep.subr.bf16.mxu0 0
          %1362 = vmatpush1.bf16.xpose.msra.mxu0 0
          %1363 = vmatprep.subr.bf16.mxu0 0
          %1364 = vmatpush1.bf16.xpose.msra.mxu0 0
          %1365 = vmatprep.subr.bf16.mxu0 0
          %1366 = vmatpush1.bf16.xpose.msra.mxu0 0
          %1367 = vmatprep.subr.bf16.mxu0 0
          %1368 = vmatpush1.bf16.xpose.msra.mxu0 0
          %1369 = vmatprep.subr.bf16.mxu0 0
          %1370 = vmatpush1.bf16.xpose.msra.mxu0 0
          %1371 = vmatprep.mubr.bf16.mxu0 0
          %1372 = vmatmul.mubr.bf16.gmra.mrb[0].mxu0 %v1334
          %v1373 = vpop.f32.mrb[0].mxu0
          %v1374 = vadd.f32 0.0, %v1373
          %v1375 = vpop.f32.mrb[0].mxu0
          %v1376 = vpop.f32.mrb[0].mxu0
          %v1377 = vpop.f32.mrb[0].mxu0
          %1378 = vdwg.mxu0
          %v1379 = vsel %vm983, %v1374, -inf
          %1380 = vmax.xlane.f32.xlu0 %v1379
          %v1381 = vpop.xlane.xlu0 %1380
          %v1382 = vsub.f32 %v1374, %v1381
          %v1383 = vmul.f32 %v1382, 1.442695
          %v1384 = vpow.pop %v1383
          %v1385 = vsel %vm983, %v1384, 0.0
          %1386 = vadd.xlane.f32.xlu0 %v1385
          %v1387 = vpop.xlane.xlu0 %1386
          %v1388 = vrcp.pop %v1387
          %v1389 = vmul.f32 %v1384, %v1388
          %v1390 = vpack.c.bf16 %v1389, %v1389
          %1391 = vrot.lane.b32.xlu0 %v1158, 104
          %v1392 = vpop.permute.xlu0 %1391
          %v1394 = vsel %vm983, %v1390, 0
          %v1397 = vsel %vm1045, %v1392, 0
          %1399 = vmatprep.subr.bf16.mxu0 0
          %1400 = vmatpush1.bf16.msra.mxu0 %v1397
          %1401 = vmatprep.subr.bf16.mxu0 0
          %1402 = vmatpush1.bf16.msra.mxu0 0
          %1403 = vmatprep.subr.bf16.mxu0 0
          %1404 = vmatpush1.bf16.msra.mxu0 0
          %1405 = vmatprep.subr.bf16.mxu0 0
          %1406 = vmatpush1.bf16.msra.mxu0 0
          %1407 = vmatprep.subr.bf16.mxu0 0
          %1408 = vmatpush1.bf16.msra.mxu0 0
          %1409 = vmatprep.subr.bf16.mxu0 0
          %1410 = vmatpush1.bf16.msra.mxu0 0
          %1411 = vmatprep.subr.bf16.mxu0 0
          %1412 = vmatpush1.bf16.msra.mxu0 0
          %1413 = vmatprep.subr.bf16.mxu0 0
          %1414 = vmatpush1.bf16.msra.mxu0 0
          %1415 = vmatprep.subr.bf16.mxu0 0
          %1416 = vmatpush1.bf16.msra.mxu0 0
          %1417 = vmatprep.subr.bf16.mxu0 0
          %1418 = vmatpush1.bf16.msra.mxu0 0
          %1419 = vmatprep.subr.bf16.mxu0 0
          %1420 = vmatpush1.bf16.msra.mxu0 0
          %1421 = vmatprep.subr.bf16.mxu0 0
          %1422 = vmatpush1.bf16.msra.mxu0 0
          %1423 = vmatprep.subr.bf16.mxu0 0
          %1424 = vmatpush1.bf16.msra.mxu0 0
          %1425 = vmatprep.subr.bf16.mxu0 0
          %1426 = vmatpush1.bf16.msra.mxu0 0
          %1427 = vmatprep.subr.bf16.mxu0 0
          %1428 = vmatpush1.bf16.msra.mxu0 0
          %1429 = vmatprep.subr.bf16.mxu0 0
          %1430 = vmatpush1.bf16.msra.mxu0 0
          %1431 = vmatprep.mubr.bf16.mxu0 0
          %1432 = vmatmul.mubr.bf16.gmra.mrb[0].mxu0 %v1394
          %v1433 = vpop.f32.mrb[0].mxu0
          %v1434 = vadd.f32 0.0, %v1433
          %v1435 = vpop.f32.mrb[0].mxu0
          %v1436 = vpop.f32.mrb[0].mxu0
          %v1437 = vpop.f32.mrb[0].mxu0
          %1438 = vdwg.mxu0
          %1440 = vrot.lane.b32.xlu0 %v1434, 24
          %v1441 = vpop.permute.xlu0 %1440
          %vm1443 = vcmask 261312
          %1444 = vst.msk [vmem:[#allocation4] sm:$0xff] %vm1443, %v1441
          %1445 = vrot.lane.b32.xlu0 %v980, 96
          %v1446 = vpop.permute.xlu0 %1445
          %1447 = vrot.lane.b32.xlu0 %v1095, 96
          %v1448 = vpop.permute.xlu0 %1447
          %v1450 = vsel %vm983, %v1446, 0
          %v1453 = vsel %vm983, %v1448, 0
          %1455 = vmatprep.subr.bf16.mxu0 0
          %1456 = vmatpush1.bf16.xpose.msra.mxu0 %v1453
          %1457 = vmatprep.subr.bf16.mxu0 0
          %1458 = vmatpush1.bf16.xpose.msra.mxu0 0
          %1459 = vmatprep.subr.bf16.mxu0 0
          %1460 = vmatpush1.bf16.xpose.msra.mxu0 0
          %1461 = vmatprep.subr.bf16.mxu0 0
          %1462 = vmatpush1.bf16.xpose.msra.mxu0 0
          %1463 = vmatprep.subr.bf16.mxu0 0
          %1464 = vmatpush1.bf16.xpose.msra.mxu0 0
          %1465 = vmatprep.subr.bf16.mxu0 0
          %1466 = vmatpush1.bf16.xpose.msra.mxu0 0
          %1467 = vmatprep.subr.bf16.mxu0 0
          %1468 = vmatpush1.bf16.xpose.msra.mxu0 0
          %1469 = vmatprep.subr.bf16.mxu0 0
          %1470 = vmatpush1.bf16.xpose.msra.mxu0 0
          %1471 = vmatprep.subr.bf16.mxu0 0
          %1472 = vmatpush1.bf16.xpose.msra.mxu0 0
          %1473 = vmatprep.subr.bf16.mxu0 0
          %1474 = vmatpush1.bf16.xpose.msra.mxu0 0
          %1475 = vmatprep.subr.bf16.mxu0 0
          %1476 = vmatpush1.bf16.xpose.msra.mxu0 0
          %1477 = vmatprep.subr.bf16.mxu0 0
          %1478 = vmatpush1.bf16.xpose.msra.mxu0 0
          %1479 = vmatprep.subr.bf16.mxu0 0
          %1480 = vmatpush1.bf16.xpose.msra.mxu0 0
          %1481 = vmatprep.subr.bf16.mxu0 0
          %1482 = vmatpush1.bf16.xpose.msra.mxu0 0
          %1483 = vmatprep.subr.bf16.mxu0 0
          %1484 = vmatpush1.bf16.xpose.msra.mxu0 0
          %1485 = vmatprep.subr.bf16.mxu0 0
          %1486 = vmatpush1.bf16.xpose.msra.mxu0 0
          %1487 = vmatprep.mubr.bf16.mxu0 0
          %1488 = vmatmul.mubr.bf16.gmra.mrb[0].mxu0 %v1450
          %v1489 = vpop.f32.mrb[0].mxu0
          %v1490 = vadd.f32 0.0, %v1489
          %v1491 = vpop.f32.mrb[0].mxu0
          %v1492 = vpop.f32.mrb[0].mxu0
          %v1493 = vpop.f32.mrb[0].mxu0
          %1494 = vdwg.mxu0
          %v1495 = vsel %vm983, %v1490, -inf
          %1496 = vmax.xlane.f32.xlu0 %v1495
          %v1497 = vpop.xlane.xlu0 %1496
          %v1498 = vsub.f32 %v1490, %v1497
          %v1499 = vmul.f32 %v1498, 1.442695
          %v1500 = vpow.pop %v1499
          %v1501 = vsel %vm983, %v1500, 0.0
          %1502 = vadd.xlane.f32.xlu0 %v1501
          %v1503 = vpop.xlane.xlu0 %1502
          %v1504 = vrcp.pop %v1503
          %v1505 = vmul.f32 %v1500, %v1504
          %v1506 = vpack.c.bf16 %v1505, %v1505
          %1507 = vrot.lane.b32.xlu0 %v1158, 96
          %v1508 = vpop.permute.xlu0 %1507
          %v1510 = vsel %vm983, %v1506, 0
          %v1513 = vsel %vm1045, %v1508, 0
          %1515 = vmatprep.subr.bf16.mxu0 0
          %1516 = vmatpush1.bf16.msra.mxu0 %v1513
          %1517 = vmatprep.subr.bf16.mxu0 0
          %1518 = vmatpush1.bf16.msra.mxu0 0
          %1519 = vmatprep.subr.bf16.mxu0 0
          %1520 = vmatpush1.bf16.msra.mxu0 0
          %1521 = vmatprep.subr.bf16.mxu0 0
          %1522 = vmatpush1.bf16.msra.mxu0 0
          %1523 = vmatprep.subr.bf16.mxu0 0
          %1524 = vmatpush1.bf16.msra.mxu0 0
          %1525 = vmatprep.subr.bf16.mxu0 0
          %1526 = vmatpush1.bf16.msra.mxu0 0
          %1527 = vmatprep.subr.bf16.mxu0 0
          %1528 = vmatpush1.bf16.msra.mxu0 0
          %1529 = vmatprep.subr.bf16.mxu0 0
          %1530 = vmatpush1.bf16.msra.mxu0 0
          %1531 = vmatprep.subr.bf16.mxu0 0
          %1532 = vmatpush1.bf16.msra.mxu0 0
          %1533 = vmatprep.subr.bf16.mxu0 0
          %1534 = vmatpush1.bf16.msra.mxu0 0
          %1535 = vmatprep.subr.bf16.mxu0 0
          %1536 = vmatpush1.bf16.msra.mxu0 0
          %1537 = vmatprep.subr.bf16.mxu0 0
          %1538 = vmatpush1.bf16.msra.mxu0 0
          %1539 = vmatprep.subr.bf16.mxu0 0
          %1540 = vmatpush1.bf16.msra.mxu0 0
          %1541 = vmatprep.subr.bf16.mxu0 0
          %1542 = vmatpush1.bf16.msra.mxu0 0
          %1543 = vmatprep.subr.bf16.mxu0 0
          %1544 = vmatpush1.bf16.msra.mxu0 0
          %1545 = vmatprep.subr.bf16.mxu0 0
          %1546 = vmatpush1.bf16.msra.mxu0 0
          %1547 = vmatprep.mubr.bf16.mxu0 0
          %1548 = vmatmul.mubr.bf16.gmra.mrb[0].mxu0 %v1510
          %v1549 = vpop.f32.mrb[0].mxu0
          %v1550 = vadd.f32 0.0, %v1549
          %v1551 = vpop.f32.mrb[0].mxu0
          %v1552 = vpop.f32.mrb[0].mxu0
          %v1553 = vpop.f32.mrb[0].mxu0
          %1554 = vdwg.mxu0
          %1556 = vrot.lane.b32.xlu0 %v1550, 32
          %v1557 = vpop.permute.xlu0 %1556
          %vm1559 = vcmask 326912
          %1560 = vst.msk [vmem:[#allocation4] sm:$0xff] %vm1559, %v1557
          %1561 = vrot.lane.b32.xlu0 %v980, 88
          %v1562 = vpop.permute.xlu0 %1561
          %1563 = vrot.lane.b32.xlu0 %v1095, 88
          %v1564 = vpop.permute.xlu0 %1563
          %v1566 = vsel %vm983, %v1562, 0
          %v1569 = vsel %vm983, %v1564, 0
          %1571 = vmatprep.subr.bf16.mxu0 0
          %1572 = vmatpush1.bf16.xpose.msra.mxu0 %v1569
          %1573 = vmatprep.subr.bf16.mxu0 0
          %1574 = vmatpush1.bf16.xpose.msra.mxu0 0
          %1575 = vmatprep.subr.bf16.mxu0 0
          %1576 = vmatpush1.bf16.xpose.msra.mxu0 0
          %1577 = vmatprep.subr.bf16.mxu0 0
          %1578 = vmatpush1.bf16.xpose.msra.mxu0 0
          %1579 = vmatprep.subr.bf16.mxu0 0
          %1580 = vmatpush1.bf16.xpose.msra.mxu0 0
          %1581 = vmatprep.subr.bf16.mxu0 0
          %1582 = vmatpush1.bf16.xpose.msra.mxu0 0
          %1583 = vmatprep.subr.bf16.mxu0 0
          %1584 = vmatpush1.bf16.xpose.msra.mxu0 0
          %1585 = vmatprep.subr.bf16.mxu0 0
          %1586 = vmatpush1.bf16.xpose.msra.mxu0 0
          %1587 = vmatprep.subr.bf16.mxu0 0
          %1588 = vmatpush1.bf16.xpose.msra.mxu0 0
          %1589 = vmatprep.subr.bf16.mxu0 0
          %1590 = vmatpush1.bf16.xpose.msra.mxu0 0
          %1591 = vmatprep.subr.bf16.mxu0 0
          %1592 = vmatpush1.bf16.xpose.msra.mxu0 0
          %1593 = vmatprep.subr.bf16.mxu0 0
          %1594 = vmatpush1.bf16.xpose.msra.mxu0 0
          %1595 = vmatprep.subr.bf16.mxu0 0
          %1596 = vmatpush1.bf16.xpose.msra.mxu0 0
          %1597 = vmatprep.subr.bf16.mxu0 0
          %1598 = vmatpush1.bf16.xpose.msra.mxu0 0
          %1599 = vmatprep.subr.bf16.mxu0 0
          %1600 = vmatpush1.bf16.xpose.msra.mxu0 0
          %1601 = vmatprep.subr.bf16.mxu0 0
          %1602 = vmatpush1.bf16.xpose.msra.mxu0 0
          %1603 = vmatprep.mubr.bf16.mxu0 0
          %1604 = vmatmul.mubr.bf16.gmra.mrb[0].mxu0 %v1566
          %v1605 = vpop.f32.mrb[0].mxu0
          %v1606 = vadd.f32 0.0, %v1605
          %v1607 = vpop.f32.mrb[0].mxu0
          %v1608 = vpop.f32.mrb[0].mxu0
          %v1609 = vpop.f32.mrb[0].mxu0
          %1610 = vdwg.mxu0
          %v1611 = vsel %vm983, %v1606, -inf
          %1612 = vmax.xlane.f32.xlu0 %v1611
          %v1613 = vpop.xlane.xlu0 %1612
          %v1614 = vsub.f32 %v1606, %v1613
          %v1615 = vmul.f32 %v1614, 1.442695
          %v1616 = vpow.pop %v1615
          %v1617 = vsel %vm983, %v1616, 0.0
          %1618 = vadd.xlane.f32.xlu0 %v1617
          %v1619 = vpop.xlane.xlu0 %1618
          %v1620 = vrcp.pop %v1619
          %v1621 = vmul.f32 %v1616, %v1620
          %v1622 = vpack.c.bf16 %v1621, %v1621
          %1623 = vrot.lane.b32.xlu0 %v1158, 88
          %v1624 = vpop.permute.xlu0 %1623
          %v1626 = vsel %vm983, %v1622, 0
          %v1629 = vsel %vm1045, %v1624, 0
          %1631 = vmatprep.subr.bf16.mxu0 0
          %1632 = vmatpush1.bf16.msra.mxu0 %v1629
          %1633 = vmatprep.subr.bf16.mxu0 0
          %1634 = vmatpush1.bf16.msra.mxu0 0
          %1635 = vmatprep.subr.bf16.mxu0 0
          %1636 = vmatpush1.bf16.msra.mxu0 0
          %1637 = vmatprep.subr.bf16.mxu0 0
          %1638 = vmatpush1.bf16.msra.mxu0 0
          %1639 = vmatprep.subr.bf16.mxu0 0
          %1640 = vmatpush1.bf16.msra.mxu0 0
          %1641 = vmatprep.subr.bf16.mxu0 0
          %1642 = vmatpush1.bf16.msra.mxu0 0
          %1643 = vmatprep.subr.bf16.mxu0 0
          %1644 = vmatpush1.bf16.msra.mxu0 0
          %1645 = vmatprep.subr.bf16.mxu0 0
          %1646 = vmatpush1.bf16.msra.mxu0 0
          %1647 = vmatprep.subr.bf16.mxu0 0
          %1648 = vmatpush1.bf16.msra.mxu0 0
          %1649 = vmatprep.subr.bf16.mxu0 0
          %1650 = vmatpush1.bf16.msra.mxu0 0
          %1651 = vmatprep.subr.bf16.mxu0 0
          %1652 = vmatpush1.bf16.msra.mxu0 0
          %1653 = vmatprep.subr.bf16.mxu0 0
          %1654 = vmatpush1.bf16.msra.mxu0 0
          %1655 = vmatprep.subr.bf16.mxu0 0
          %1656 = vmatpush1.bf16.msra.mxu0 0
          %1657 = vmatprep.subr.bf16.mxu0 0
          %1658 = vmatpush1.bf16.msra.mxu0 0
          %1659 = vmatprep.subr.bf16.mxu0 0
          %1660 = vmatpush1.bf16.msra.mxu0 0
          %1661 = vmatprep.subr.bf16.mxu0 0
          %1662 = vmatpush1.bf16.msra.mxu0 0
          %1663 = vmatprep.mubr.bf16.mxu0 0
          %1664 = vmatmul.mubr.bf16.gmra.mrb[0].mxu0 %v1626
          %v1665 = vpop.f32.mrb[0].mxu0
          %v1666 = vadd.f32 0.0, %v1665
          %v1667 = vpop.f32.mrb[0].mxu0
          %v1668 = vpop.f32.mrb[0].mxu0
          %v1669 = vpop.f32.mrb[0].mxu0
          %1670 = vdwg.mxu0
          %1672 = vrot.lane.b32.xlu0 %v1666, 40
          %v1673 = vpop.permute.xlu0 %1672
          %vm1675 = vcmask 392512
          %1676 = vst.msk [vmem:[#allocation4] sm:$0xff] %vm1675, %v1673
          %1677 = vrot.lane.b32.xlu0 %v980, 80
          %v1678 = vpop.permute.xlu0 %1677
          %1679 = vrot.lane.b32.xlu0 %v1095, 80
          %v1680 = vpop.permute.xlu0 %1679
          %v1682 = vsel %vm983, %v1678, 0
          %v1685 = vsel %vm983, %v1680, 0
          %1687 = vmatprep.subr.bf16.mxu0 0
          %1688 = vmatpush1.bf16.xpose.msra.mxu0 %v1685
          %1689 = vmatprep.subr.bf16.mxu0 0
          %1690 = vmatpush1.bf16.xpose.msra.mxu0 0
          %1691 = vmatprep.subr.bf16.mxu0 0
          %1692 = vmatpush1.bf16.xpose.msra.mxu0 0
          %1693 = vmatprep.subr.bf16.mxu0 0
          %1694 = vmatpush1.bf16.xpose.msra.mxu0 0
          %1695 = vmatprep.subr.bf16.mxu0 0
          %1696 = vmatpush1.bf16.xpose.msra.mxu0 0
          %1697 = vmatprep.subr.bf16.mxu0 0
          %1698 = vmatpush1.bf16.xpose.msra.mxu0 0
          %1699 = vmatprep.subr.bf16.mxu0 0
          %1700 = vmatpush1.bf16.xpose.msra.mxu0 0
          %1701 = vmatprep.subr.bf16.mxu0 0
          %1702 = vmatpush1.bf16.xpose.msra.mxu0 0
          %1703 = vmatprep.subr.bf16.mxu0 0
          %1704 = vmatpush1.bf16.xpose.msra.mxu0 0
          %1705 = vmatprep.subr.bf16.mxu0 0
          %1706 = vmatpush1.bf16.xpose.msra.mxu0 0
          %1707 = vmatprep.subr.bf16.mxu0 0
          %1708 = vmatpush1.bf16.xpose.msra.mxu0 0
          %1709 = vmatprep.subr.bf16.mxu0 0
          %1710 = vmatpush1.bf16.xpose.msra.mxu0 0
          %1711 = vmatprep.subr.bf16.mxu0 0
          %1712 = vmatpush1.bf16.xpose.msra.mxu0 0
          %1713 = vmatprep.subr.bf16.mxu0 0
          %1714 = vmatpush1.bf16.xpose.msra.mxu0 0
          %1715 = vmatprep.subr.bf16.mxu0 0
          %1716 = vmatpush1.bf16.xpose.msra.mxu0 0
          %1717 = vmatprep.subr.bf16.mxu0 0
          %1718 = vmatpush1.bf16.xpose.msra.mxu0 0
          %1719 = vmatprep.mubr.bf16.mxu0 0
          %1720 = vmatmul.mubr.bf16.gmra.mrb[0].mxu0 %v1682
          %v1721 = vpop.f32.mrb[0].mxu0
          %v1722 = vadd.f32 0.0, %v1721
          %v1723 = vpop.f32.mrb[0].mxu0
          %v1724 = vpop.f32.mrb[0].mxu0
          %v1725 = vpop.f32.mrb[0].mxu0
          %1726 = vdwg.mxu0
          %v1727 = vsel %vm983, %v1722, -inf
          %1728 = vmax.xlane.f32.xlu0 %v1727
          %v1729 = vpop.xlane.xlu0 %1728
          %v1730 = vsub.f32 %v1722, %v1729
          %v1731 = vmul.f32 %v1730, 1.442695
          %v1732 = vpow.pop %v1731
          %v1733 = vsel %vm983, %v1732, 0.0
          %1734 = vadd.xlane.f32.xlu0 %v1733
          %v1735 = vpop.xlane.xlu0 %1734
          %v1736 = vrcp.pop %v1735
          %v1737 = vmul.f32 %v1732, %v1736
          %v1738 = vpack.c.bf16 %v1737, %v1737
          %1739 = vrot.lane.b32.xlu0 %v1158, 80
          %v1740 = vpop.permute.xlu0 %1739
          %v1742 = vsel %vm983, %v1738, 0
          %v1745 = vsel %vm1045, %v1740, 0
          %1747 = vmatprep.subr.bf16.mxu0 0
          %1748 = vmatpush1.bf16.msra.mxu0 %v1745
          %1749 = vmatprep.subr.bf16.mxu0 0
          %1750 = vmatpush1.bf16.msra.mxu0 0
          %1751 = vmatprep.subr.bf16.mxu0 0
          %1752 = vmatpush1.bf16.msra.mxu0 0
          %1753 = vmatprep.subr.bf16.mxu0 0
          %1754 = vmatpush1.bf16.msra.mxu0 0
          %1755 = vmatprep.subr.bf16.mxu0 0
          %1756 = vmatpush1.bf16.msra.mxu0 0
          %1757 = vmatprep.subr.bf16.mxu0 0
          %1758 = vmatpush1.bf16.msra.mxu0 0
          %1759 = vmatprep.subr.bf16.mxu0 0
          %1760 = vmatpush1.bf16.msra.mxu0 0
          %1761 = vmatprep.subr.bf16.mxu0 0
          %1762 = vmatpush1.bf16.msra.mxu0 0
          %1763 = vmatprep.subr.bf16.mxu0 0
          %1764 = vmatpush1.bf16.msra.mxu0 0
          %1765 = vmatprep.subr.bf16.mxu0 0
          %1766 = vmatpush1.bf16.msra.mxu0 0
          %1767 = vmatprep.subr.bf16.mxu0 0
          %1768 = vmatpush1.bf16.msra.mxu0 0
          %1769 = vmatprep.subr.bf16.mxu0 0
          %1770 = vmatpush1.bf16.msra.mxu0 0
          %1771 = vmatprep.subr.bf16.mxu0 0
          %1772 = vmatpush1.bf16.msra.mxu0 0
          %1773 = vmatprep.subr.bf16.mxu0 0
          %1774 = vmatpush1.bf16.msra.mxu0 0
          %1775 = vmatprep.subr.bf16.mxu0 0
          %1776 = vmatpush1.bf16.msra.mxu0 0
          %1777 = vmatprep.subr.bf16.mxu0 0
          %1778 = vmatpush1.bf16.msra.mxu0 0
          %1779 = vmatprep.mubr.bf16.mxu0 0
          %1780 = vmatmul.mubr.bf16.gmra.mrb[0].mxu0 %v1742
          %v1781 = vpop.f32.mrb[0].mxu0
          %v1782 = vadd.f32 0.0, %v1781
          %v1783 = vpop.f32.mrb[0].mxu0
          %v1784 = vpop.f32.mrb[0].mxu0
          %v1785 = vpop.f32.mrb[0].mxu0
          %1786 = vdwg.mxu0
          %1788 = vrot.lane.b32.xlu0 %v1782, 48
          %v1789 = vpop.permute.xlu0 %1788
          %vm1791 = vcmask 458112
          %1792 = vst.msk [vmem:[#allocation4] sm:$0xff] %vm1791, %v1789
          %1793 = vrot.lane.b32.xlu0 %v980, 72
          %v1794 = vpop.permute.xlu0 %1793
          %1795 = vrot.lane.b32.xlu0 %v1095, 72
          %v1796 = vpop.permute.xlu0 %1795
          %v1798 = vsel %vm983, %v1794, 0
          %v1801 = vsel %vm983, %v1796, 0
          %1803 = vmatprep.subr.bf16.mxu0 0
          %1804 = vmatpush1.bf16.xpose.msra.mxu0 %v1801
          %1805 = vmatprep.subr.bf16.mxu0 0
          %1806 = vmatpush1.bf16.xpose.msra.mxu0 0
          %1807 = vmatprep.subr.bf16.mxu0 0
          %1808 = vmatpush1.bf16.xpose.msra.mxu0 0
          %1809 = vmatprep.subr.bf16.mxu0 0
          %1810 = vmatpush1.bf16.xpose.msra.mxu0 0
          %1811 = vmatprep.subr.bf16.mxu0 0
          %1812 = vmatpush1.bf16.xpose.msra.mxu0 0
          %1813 = vmatprep.subr.bf16.mxu0 0
          %1814 = vmatpush1.bf16.xpose.msra.mxu0 0
          %1815 = vmatprep.subr.bf16.mxu0 0
          %1816 = vmatpush1.bf16.xpose.msra.mxu0 0
          %1817 = vmatprep.subr.bf16.mxu0 0
          %1818 = vmatpush1.bf16.xpose.msra.mxu0 0
          %1819 = vmatprep.subr.bf16.mxu0 0
          %1820 = vmatpush1.bf16.xpose.msra.mxu0 0
          %1821 = vmatprep.subr.bf16.mxu0 0
          %1822 = vmatpush1.bf16.xpose.msra.mxu0 0
          %1823 = vmatprep.subr.bf16.mxu0 0
          %1824 = vmatpush1.bf16.xpose.msra.mxu0 0
          %1825 = vmatprep.subr.bf16.mxu0 0
          %1826 = vmatpush1.bf16.xpose.msra.mxu0 0
          %1827 = vmatprep.subr.bf16.mxu0 0
          %1828 = vmatpush1.bf16.xpose.msra.mxu0 0
          %1829 = vmatprep.subr.bf16.mxu0 0
          %1830 = vmatpush1.bf16.xpose.msra.mxu0 0
          %1831 = vmatprep.subr.bf16.mxu0 0
          %1832 = vmatpush1.bf16.xpose.msra.mxu0 0
          %1833 = vmatprep.subr.bf16.mxu0 0
          %1834 = vmatpush1.bf16.xpose.msra.mxu0 0
          %1835 = vmatprep.mubr.bf16.mxu0 0
          %1836 = vmatmul.mubr.bf16.gmra.mrb[0].mxu0 %v1798
          %v1837 = vpop.f32.mrb[0].mxu0
          %v1838 = vadd.f32 0.0, %v1837
          %v1839 = vpop.f32.mrb[0].mxu0
          %v1840 = vpop.f32.mrb[0].mxu0
          %v1841 = vpop.f32.mrb[0].mxu0
          %1842 = vdwg.mxu0
          %v1843 = vsel %vm983, %v1838, -inf
          %1844 = vmax.xlane.f32.xlu0 %v1843
          %v1845 = vpop.xlane.xlu0 %1844
          %v1846 = vsub.f32 %v1838, %v1845
          %v1847 = vmul.f32 %v1846, 1.442695
          %v1848 = vpow.pop %v1847
          %v1849 = vsel %vm983, %v1848, 0.0
          %1850 = vadd.xlane.f32.xlu0 %v1849
          %v1851 = vpop.xlane.xlu0 %1850
          %v1852 = vrcp.pop %v1851
          %v1853 = vmul.f32 %v1848, %v1852
          %v1854 = vpack.c.bf16 %v1853, %v1853
          %1855 = vrot.lane.b32.xlu0 %v1158, 72
          %v1856 = vpop.permute.xlu0 %1855
          %v1858 = vsel %vm983, %v1854, 0
          %v1861 = vsel %vm1045, %v1856, 0
          %1863 = vmatprep.subr.bf16.mxu0 0
          %1864 = vmatpush1.bf16.msra.mxu0 %v1861
          %1865 = vmatprep.subr.bf16.mxu0 0
          %1866 = vmatpush1.bf16.msra.mxu0 0
          %1867 = vmatprep.subr.bf16.mxu0 0
          %1868 = vmatpush1.bf16.msra.mxu0 0
          %1869 = vmatprep.subr.bf16.mxu0 0
          %1870 = vmatpush1.bf16.msra.mxu0 0
          %1871 = vmatprep.subr.bf16.mxu0 0
          %1872 = vmatpush1.bf16.msra.mxu0 0
          %1873 = vmatprep.subr.bf16.mxu0 0
          %1874 = vmatpush1.bf16.msra.mxu0 0
          %1875 = vmatprep.subr.bf16.mxu0 0
          %1876 = vmatpush1.bf16.msra.mxu0 0
          %1877 = vmatprep.subr.bf16.mxu0 0
          %1878 = vmatpush1.bf16.msra.mxu0 0
          %1879 = vmatprep.subr.bf16.mxu0 0
          %1880 = vmatpush1.bf16.msra.mxu0 0
          %1881 = vmatprep.subr.bf16.mxu0 0
          %1882 = vmatpush1.bf16.msra.mxu0 0
          %1883 = vmatprep.subr.bf16.mxu0 0
          %1884 = vmatpush1.bf16.msra.mxu0 0
          %1885 = vmatprep.subr.bf16.mxu0 0
          %1886 = vmatpush1.bf16.msra.mxu0 0
          %1887 = vmatprep.subr.bf16.mxu0 0
          %1888 = vmatpush1.bf16.msra.mxu0 0
          %1889 = vmatprep.subr.bf16.mxu0 0
          %1890 = vmatpush1.bf16.msra.mxu0 0
          %1891 = vmatprep.subr.bf16.mxu0 0
          %1892 = vmatpush1.bf16.msra.mxu0 0
          %1893 = vmatprep.subr.bf16.mxu0 0
          %1894 = vmatpush1.bf16.msra.mxu0 0
          %1895 = vmatprep.mubr.bf16.mxu0 0
          %1896 = vmatmul.mubr.bf16.gmra.mrb[0].mxu0 %v1858
          %v1897 = vpop.f32.mrb[0].mxu0
          %v1898 = vadd.f32 0.0, %v1897
          %v1899 = vpop.f32.mrb[0].mxu0
          %v1900 = vpop.f32.mrb[0].mxu0
          %v1901 = vpop.f32.mrb[0].mxu0
          %1902 = vdwg.mxu0
          %1904 = vrot.lane.b32.xlu0 %v1898, 56
          %v1905 = vpop.permute.xlu0 %1904
          %vm1907 = vcmask 523712
          %1908 = vst.msk [vmem:[#allocation4] sm:$0xff] %vm1907, %v1905
          %v1909 = vld [vmem:[#allocation4] sm:$0xff]
          %v1910 = vpack.c.bf16 %v1909, %v1909
          %v1911 = vld [vmem:[%s8] sm:$0xf]
          %v1912 = vld [vmem:[%s8 + $0x4] sm:$0xf]
          %v1913 = vld [vmem:[%s8 + $0x8] sm:$0xf]
          %v1914 = vld [vmem:[%s8 + $0xc] sm:$0xf]
          %v1915 = vld [vmem:[%s8 + $0x10] sm:$0xf]
          %v1916 = vld [vmem:[%s8 + $0x14] sm:$0xf]
          %v1917 = vld [vmem:[%s8 + $0x18] sm:$0xf]
          %v1918 = vld [vmem:[%s8 + $0x1c] sm:$0xf]
          %v1919 = vld [vmem:[%s9] sm:$0x1]
          %v1921 = vlaneseq
          %v1922 = vshrl.u32 %v1921, 7
          %v1923 = vsub.s32 0, %v1922
          %v1924 = vrot.slane %v1919, %v1923
          %v1934 = vunpack.c.l.b16 %v1911
          %v1935 = vunpack.c.l.b16 %v1912
          %v1936 = vunpack.c.l.b16 %v1913
          %v1937 = vunpack.c.l.b16 %v1914
          %v1938 = vunpack.c.l.b16 %v1915
          %v1939 = vunpack.c.l.b16 %v1916
          %v1940 = vunpack.c.l.b16 %v1917
          %v1941 = vunpack.c.l.b16 %v1918
          %v1942 = vpack.c.b16 %v1935, %v1934
          %v1943 = vpack.c.b16 %v1937, %v1936
          %v1944 = vpack.c.b16 %v1939, %v1938
          %v1945 = vpack.c.b16 %v1941, %v1940
          %v1951 = vsel %vm935, %v1910, 0
          %1953 = vmatprep.subr.bf16.mxu0 0
          %1954 = vmatpush1.bf16.msra.mxu0 %v1942
          %1955 = vmatprep.subr.bf16.mxu0 0
          %1956 = vmatpush1.bf16.msra.mxu0 %v1943
          %1957 = vmatprep.subr.bf16.mxu0 0
          %1958 = vmatpush1.bf16.msra.mxu0 %v1944
          %1959 = vmatprep.subr.bf16.mxu0 0
          %1960 = vmatpush1.bf16.msra.mxu0 %v1945
          %1961 = vmatprep.subr.bf16.mxu0 0
          %1962 = vmatpush1.bf16.msra.mxu0 0
          %1963 = vmatprep.subr.bf16.mxu0 0
          %1964 = vmatpush1.bf16.msra.mxu0 0
          %1965 = vmatprep.subr.bf16.mxu0 0
          %1966 = vmatpush1.bf16.msra.mxu0 0
          %1967 = vmatprep.subr.bf16.mxu0 0
          %1968 = vmatpush1.bf16.msra.mxu0 0
          %1969 = vmatprep.subr.bf16.mxu0 0
          %1970 = vmatpush1.bf16.msra.mxu0 0
          %1971 = vmatprep.subr.bf16.mxu0 0
          %1972 = vmatpush1.bf16.msra.mxu0 0
          %1973 = vmatprep.subr.bf16.mxu0 0
          %1974 = vmatpush1.bf16.msra.mxu0 0
          %1975 = vmatprep.subr.bf16.mxu0 0
          %1976 = vmatpush1.bf16.msra.mxu0 0
          %1977 = vmatprep.subr.bf16.mxu0 0
          %1978 = vmatpush1.bf16.msra.mxu0 0
          %1979 = vmatprep.subr.bf16.mxu0 0
          %1980 = vmatpush1.bf16.msra.mxu0 0
          %1981 = vmatprep.subr.bf16.mxu0 0
          %1982 = vmatpush1.bf16.msra.mxu0 0
          %1983 = vmatprep.subr.bf16.mxu0 0
          %1984 = vmatpush1.bf16.msra.mxu0 0
          %1985 = vmatprep.mubr.bf16.mxu0 0
          %1986 = vmatmul.mubr.bf16.gmra.mrb[0].mxu0 %v1951
          %v1987 = vpop.f32.mrb[0].mxu0
          %v1988 = vadd.f32 %v1924, %v1987
          %v1989 = vpop.f32.mrb[0].mxu0
          %v1990 = vpop.f32.mrb[0].mxu0
          %v1991 = vpop.f32.mrb[0].mxu0
          %1992 = vdwg.mxu0
          %v1993 = vadd.f32 %v894, %v1988
          %v1994 = vld [vmem:[%s10] sm:$0x1]
          %v1995 = vld [vmem:[%s11] sm:$0x1]
          %v1996 = vsel %vm935, %v1993, 0.0
          %1997 = vadd.xlane.f32.xlu0 %v1996
          %v1998 = vpop.xlane.xlu0 %1997
          %v1999 = vrcp.pop 64.0
          %v2000 = vmul.f32 %v1998, %v1999
          %v2001 = vsub.f32 %v1993, %v2000
          %v2002 = vmul.f32 %v2001, %v2001
          %v2003 = vsel %vm935, %v2002, 0.0
          %2004 = vadd.xlane.f32.xlu0 %v2003
          %v2005 = vpop.xlane.xlu0 %2004
          %v2006 = vmul.f32 %v2005, %v1999
          %v2007 = vadd.f32 %v2006, 1e-05
          %v2008 = vrsqrt.pop %v2007
          %v2009 = vmul.f32 %v2001, %v2008
          %v2011 = vlaneseq
          %v2012 = vshrl.u32 %v2011, 7
          %v2013 = vsub.s32 0, %v2012
          %v2014 = vrot.slane %v1994, %v2013
          %v2016 = vmul.f32 %v2009, %v2014
          %v2018 = vlaneseq
          %v2019 = vshrl.u32 %v2018, 7
          %v2020 = vsub.s32 0, %v2019
          %v2021 = vrot.slane %v1995, %v2020
          %v2023 = vadd.f32 %v2016, %v2021
          %2024 = vst.msk [vmem:[#allocation5] sm:$0xff] %vm935, %v2023
          %2025 = vst.msk [vmem:[#allocation6] sm:$0xff] %vm935, 0.0
        $region108: #{tpu_custom_call.1} parent=91 // pred_fallthru
          _
        %v2026 = vld [vmem:[#allocation5] sm:$0xff]
        %v2027 = vpack.c.bf16 %v2026, %v2026
        %v2028 = vld [vmem:[%s702] sm:$0xff]
        %v2029 = vld [vmem:[%s702 + $0x8] sm:$0xff]
        %v2030 = vld [vmem:[%s702 + $0x10] sm:$0xff]
        %v2031 = vld [vmem:[%s702 + $0x18] sm:$0xff]
        %v2032 = vld [vmem:[%s702 + $0x20] sm:$0xff]
        %v2033 = vld [vmem:[%s702 + $0x28] sm:$0xff]
        %v2034 = vld [vmem:[%s702 + $0x30] sm:$0xff]
        %v2035 = vld [vmem:[%s702 + $0x38] sm:$0xff]
        %v2036 = vld [vmem:[%s707] sm:$0x3]
        %v2038 = vlaneseq
        %v2039 = vshrl.u32 %v2038, 7
        %v2040 = vsub.s32 0, %v2039
        %v2041 = vrot.slane %v2036, %v2040
        %v2042 = vlaneseq
        %v2043 = vshrl.u32 %v2042, 7
        %v2044 = vsub.s32 1, %v2043
        %v2045 = vrot.slane %v2036, %v2044
        %v2056 = vunpack.c.l.b16 %v2028
        %v2057 = vunpack.c.h.b16 %v2028
        %v2058 = vunpack.c.l.b16 %v2029
        %v2059 = vunpack.c.h.b16 %v2029
        %v2060 = vunpack.c.l.b16 %v2030
        %v2061 = vunpack.c.h.b16 %v2030
        %v2062 = vunpack.c.l.b16 %v2031
        %v2063 = vunpack.c.h.b16 %v2031
        %v2064 = vunpack.c.l.b16 %v2032
        %v2065 = vunpack.c.h.b16 %v2032
        %v2066 = vunpack.c.l.b16 %v2033
        %v2067 = vunpack.c.h.b16 %v2033
        %v2068 = vunpack.c.l.b16 %v2034
        %v2069 = vunpack.c.h.b16 %v2034
        %v2070 = vunpack.c.l.b16 %v2035
        %v2071 = vunpack.c.h.b16 %v2035
        %v2072 = vpack.c.b16 %v2058, %v2056
        %v2073 = vpack.c.b16 %v2059, %v2057
        %v2074 = vpack.c.b16 %v2062, %v2060
        %v2075 = vpack.c.b16 %v2063, %v2061
        %v2076 = vpack.c.b16 %v2066, %v2064
        %v2077 = vpack.c.b16 %v2067, %v2065
        %v2078 = vpack.c.b16 %v2070, %v2068
        %v2079 = vpack.c.b16 %v2071, %v2069
        %vm2088 = vcmask 523264
        %v2090 = vsel %vm2088, %v2027, 0
        %2092 = vmatprep.subr.bf16.mxu0 %v2073
        %2093 = vmatpush1.bf16.msra.mxu0 %v2072
        %2094 = vmatprep.subr.bf16.mxu0 %v2075
        %2095 = vmatpush1.bf16.msra.mxu0 %v2074
        %2096 = vmatprep.subr.bf16.mxu0 %v2077
        %2097 = vmatpush1.bf16.msra.mxu0 %v2076
        %2098 = vmatprep.subr.bf16.mxu0 %v2079
        %2099 = vmatpush1.bf16.msra.mxu0 %v2078
        %2100 = vmatprep.subr.bf16.mxu0 0
        %2101 = vmatpush1.bf16.msra.mxu0 0
        %2102 = vmatprep.subr.bf16.mxu0 0
        %2103 = vmatpush1.bf16.msra.mxu0 0
        %2104 = vmatprep.subr.bf16.mxu0 0
        %2105 = vmatpush1.bf16.msra.mxu0 0
        %2106 = vmatprep.subr.bf16.mxu0 0
        %2107 = vmatpush1.bf16.msra.mxu0 0
        %2108 = vmatprep.subr.bf16.mxu0 0
        %2109 = vmatpush1.bf16.msra.mxu0 0
        %2110 = vmatprep.subr.bf16.mxu0 0
        %2111 = vmatpush1.bf16.msra.mxu0 0
        %2112 = vmatprep.subr.bf16.mxu0 0
        %2113 = vmatpush1.bf16.msra.mxu0 0
        %2114 = vmatprep.subr.bf16.mxu0 0
        %2115 = vmatpush1.bf16.msra.mxu0 0
        %2116 = vmatprep.subr.bf16.mxu0 0
        %2117 = vmatpush1.bf16.msra.mxu0 0
        %2118 = vmatprep.subr.bf16.mxu0 0
        %2119 = vmatpush1.bf16.msra.mxu0 0
        %2120 = vmatprep.subr.bf16.mxu0 0
        %2121 = vmatpush1.bf16.msra.mxu0 0
        %2122 = vmatprep.subr.bf16.mxu0 0
        %2123 = vmatpush1.bf16.msra.mxu0 0
        %2124 = vmatprep.mubr.bf16.mxu0 0
        %2125 = vmatmul.mubr.bf16.gmra.mrb[0].mxu0 %v2090
        %v2126 = vpop.f32.mrb[0].mxu0
        %v2127 = vadd.f32 %v2041, %v2126
        %v2128 = vpop.f32.mrb[0].mxu0
        %v2129 = vadd.f32 %v2045, %v2128
        %v2130 = vpop.f32.mrb[0].mxu0
        %v2131 = vpop.f32.mrb[0].mxu0
        %2132 = vdwg.mxu0
        %vm2133 = vcmp.gt.f32.partialorder %v2127, 0.0
        %vm2134 = vcmp.gt.f32.partialorder %v2129, 0.0
        %v2135 = vmin.f32 %v2127, 0.0
        %v2136 = vmin.f32 %v2129, 0.0
        %v2137 = vmul.f32 %v2135, 1.442695
        %v2138 = vpow.pop %v2137
        %v2139 = vmul.f32 %v2136, 1.442695
        %v2140 = vpow.pop %v2139
        %v2141 = vsub.f32 %v2138, 1.0
        %v2142 = vsub.f32 %v2140, 1.0
        %v2143 = vsel %vm2133, %v2127, %v2141
        %v2144 = vsel %vm2134, %v2129, %v2142
        %v2145 = vld [vmem:[#allocation6] sm:$0xff]
        %v2146 = vpack.c.bf16 %v2143, %v2143
        %v2147 = vpack.c.bf16 %v2144, %v2144
        %v2148 = vld [vmem:[%s713] sm:$0xf]
        %v2149 = vld [vmem:[%s713 + $0x4] sm:$0xf]
        %v2150 = vld [vmem:[%s713 + $0x8] sm:$0xf]
        %v2151 = vld [vmem:[%s713 + $0xc] sm:$0xf]
        %v2152 = vld [vmem:[%s713 + $0x10] sm:$0xf]
        %v2153 = vld [vmem:[%s713 + $0x14] sm:$0xf]
        %v2154 = vld [vmem:[%s713 + $0x18] sm:$0xf]
        %v2155 = vld [vmem:[%s713 + $0x1c] sm:$0xf]
        %v2156 = vld [vmem:[%s713 + $0x20] sm:$0xf]
        %v2157 = vld [vmem:[%s713 + $0x24] sm:$0xf]
        %v2158 = vld [vmem:[%s713 + $0x28] sm:$0xf]
        %v2159 = vld [vmem:[%s713 + $0x2c] sm:$0xf]
        %v2160 = vld [vmem:[%s713 + $0x30] sm:$0xf]
        %v2161 = vld [vmem:[%s713 + $0x34] sm:$0xf]
        %v2162 = vld [vmem:[%s713 + $0x38] sm:$0xf]
        %v2163 = vld [vmem:[%s713 + $0x3c] sm:$0xf]
        %v2164 = vld [vmem:[%s713 + $0x40] sm:$0xf]
        %v2165 = vld [vmem:[%s713 + $0x44] sm:$0xf]
        %v2166 = vld [vmem:[%s713 + $0x48] sm:$0xf]
        %v2167 = vld [vmem:[%s713 + $0x4c] sm:$0xf]
        %v2168 = vld [vmem:[%s713 + $0x50] sm:$0xf]
        %v2169 = vld [vmem:[%s713 + $0x54] sm:$0xf]
        %v2170 = vld [vmem:[%s713 + $0x58] sm:$0xf]
        %v2171 = vld [vmem:[%s713 + $0x5c] sm:$0xf]
        %v2172 = vld [vmem:[%s713 + $0x60] sm:$0xf]
        %v2173 = vld [vmem:[%s713 + $0x64] sm:$0xf]
        %v2174 = vld [vmem:[%s713 + $0x68] sm:$0xf]
        %v2175 = vld [vmem:[%s713 + $0x6c] sm:$0xf]
        %v2176 = vld [vmem:[%s713 + $0x70] sm:$0xf]
        %v2177 = vld [vmem:[%s713 + $0x74] sm:$0xf]
        %v2178 = vld [vmem:[%s713 + $0x78] sm:$0xf]
        %v2179 = vld [vmem:[%s713 + $0x7c] sm:$0xf]
        %v2212 = vunpack.c.l.b16 %v2148
        %v2213 = vunpack.c.l.b16 %v2149
        %v2214 = vunpack.c.l.b16 %v2150
        %v2215 = vunpack.c.l.b16 %v2151
        %v2216 = vunpack.c.l.b16 %v2152
        %v2217 = vunpack.c.l.b16 %v2153
        %v2218 = vunpack.c.l.b16 %v2154
        %v2219 = vunpack.c.l.b16 %v2155
        %v2220 = vunpack.c.l.b16 %v2156
        %v2221 = vunpack.c.l.b16 %v2157
        %v2222 = vunpack.c.l.b16 %v2158
        %v2223 = vunpack.c.l.b16 %v2159
        %v2224 = vunpack.c.l.b16 %v2160
        %v2225 = vunpack.c.l.b16 %v2161
        %v2226 = vunpack.c.l.b16 %v2162
        %v2227 = vunpack.c.l.b16 %v2163
        %v2228 = vunpack.c.l.b16 %v2164
        %v2229 = vunpack.c.l.b16 %v2165
        %v2230 = vunpack.c.l.b16 %v2166
        %v2231 = vunpack.c.l.b16 %v2167
        %v2232 = vunpack.c.l.b16 %v2168
        %v2233 = vunpack.c.l.b16 %v2169
        %v2234 = vunpack.c.l.b16 %v2170
        %v2235 = vunpack.c.l.b16 %v2171
        %v2236 = vunpack.c.l.b16 %v2172
        %v2237 = vunpack.c.l.b16 %v2173
        %v2238 = vunpack.c.l.b16 %v2174
        %v2239 = vunpack.c.l.b16 %v2175
        %v2240 = vunpack.c.l.b16 %v2176
        %v2241 = vunpack.c.l.b16 %v2177
        %v2242 = vunpack.c.l.b16 %v2178
        %v2243 = vunpack.c.l.b16 %v2179
        %v2244 = vpack.c.b16 %v2213, %v2212
        %v2245 = vpack.c.b16 %v2215, %v2214
        %v2246 = vpack.c.b16 %v2217, %v2216
        %v2247 = vpack.c.b16 %v2219, %v2218
        %v2248 = vpack.c.b16 %v2221, %v2220
        %v2249 = vpack.c.b16 %v2223, %v2222
        %v2250 = vpack.c.b16 %v2225, %v2224
        %v2251 = vpack.c.b16 %v2227, %v2226
        %v2252 = vpack.c.b16 %v2229, %v2228
        %v2253 = vpack.c.b16 %v2231, %v2230
        %v2254 = vpack.c.b16 %v2233, %v2232
        %v2255 = vpack.c.b16 %v2235, %v2234
        %v2256 = vpack.c.b16 %v2237, %v2236
        %v2257 = vpack.c.b16 %v2239, %v2238
        %v2258 = vpack.c.b16 %v2241, %v2240
        %v2259 = vpack.c.b16 %v2243, %v2242
        %2276 = vmatprep.subr.bf16.mxu0 0
        %2277 = vmatpush1.bf16.msra.mxu0 %v2244
        %2278 = vmatprep.subr.bf16.mxu0 0
        %2279 = vmatpush1.bf16.msra.mxu0 %v2245
        %2280 = vmatprep.subr.bf16.mxu0 0
        %2281 = vmatpush1.bf16.msra.mxu0 %v2246
        %2282 = vmatprep.subr.bf16.mxu0 0
        %2283 = vmatpush1.bf16.msra.mxu0 %v2247
        %2284 = vmatprep.subr.bf16.mxu0 0
        %2285 = vmatpush1.bf16.msra.mxu0 %v2248
        %2286 = vmatprep.subr.bf16.mxu0 0
        %2287 = vmatpush1.bf16.msra.mxu0 %v2249
        %2288 = vmatprep.subr.bf16.mxu0 0
        %2289 = vmatpush1.bf16.msra.mxu0 %v2250
        %2290 = vmatprep.subr.bf16.mxu0 0
        %2291 = vmatpush1.bf16.msra.mxu0 %v2251
        %2292 = vmatprep.subr.bf16.mxu0 0
        %2293 = vmatpush1.bf16.msra.mxu0 %v2252
        %2294 = vmatprep.subr.bf16.mxu0 0
        %2295 = vmatpush1.bf16.msra.mxu0 %v2253
        %2296 = vmatprep.subr.bf16.mxu0 0
        %2297 = vmatpush1.bf16.msra.mxu0 %v2254
        %2298 = vmatprep.subr.bf16.mxu0 0
        %2299 = vmatpush1.bf16.msra.mxu0 %v2255
        %2300 = vmatprep.subr.bf16.mxu0 0
        %2301 = vmatpush1.bf16.msra.mxu0 %v2256
        %2302 = vmatprep.subr.bf16.mxu0 0
        %2303 = vmatpush1.bf16.msra.mxu0 %v2257
        %2304 = vmatprep.subr.bf16.mxu0 0
        %2305 = vmatpush1.bf16.msra.mxu0 %v2258
        %2306 = vmatprep.subr.bf16.mxu0 0
        %2307 = vmatpush1.bf16.msra.mxu0 %v2259
        %2308 = vmatprep.mubr.bf16.mxu0 %v2147
        %2309 = vmatmul.mubr.bf16.gmra.mrb[0].mxu0 %v2146
        %v2310 = vpop.f32.mrb[0].mxu0
        %v2311 = vadd.f32 0.0, %v2310
        %v2312 = vpop.f32.mrb[0].mxu0
        %v2313 = vpop.f32.mrb[0].mxu0
        %v2314 = vpop.f32.mrb[0].mxu0
        %2315 = vdwg.mxu0
        %v2316 = vadd.f32 %v2145, %v2311
        %2317 = vst.msk [vmem:[#allocation6] sm:$0xff] %vm2088, %v2316
        // Predicated region
        $region109: #{tpu_custom_call.1} parent=91 // pred_check
          %p2318 = pneg %p717
        $region110: #{tpu_custom_call.1} parent=91 // pred_check_branch
          %2320 = sbr.rel (%p2318) target = $region112
        $region111: #{tpu_custom_call.1} parent=91 // pred_region
          %v2321 = vld [vmem:[#allocation5] sm:$0xff]
          %v2322 = vld [vmem:[#allocation6] sm:$0xff]
          %v2323 = vadd.f32 %v2321, %v2322
          %v2324 = vld [vmem:[%s15] sm:$0x1]
          %v2326 = vlaneseq
          %v2327 = vshrl.u32 %v2326, 7
          %v2328 = vsub.s32 0, %v2327
          %v2329 = vrot.slane %v2324, %v2328
          %v2331 = vadd.f32 %v2323, %v2329
          %v2332 = vld [vmem:[%s16] sm:$0x1]
          %v2333 = vld [vmem:[%s17] sm:$0x1]
          %v2334 = vsel %vm2088, %v2331, 0.0
          %2335 = vadd.xlane.f32.xlu0 %v2334
          %v2336 = vpop.xlane.xlu0 %2335
          %v2337 = vrcp.pop 64.0
          %v2338 = vmul.f32 %v2336, %v2337
          %v2339 = vsub.f32 %v2331, %v2338
          %v2340 = vmul.f32 %v2339, %v2339
          %v2341 = vsel %vm2088, %v2340, 0.0
          %2342 = vadd.xlane.f32.xlu0 %v2341
          %v2343 = vpop.xlane.xlu0 %2342
          %v2344 = vmul.f32 %v2343, %v2337
          %v2345 = vadd.f32 %v2344, 1e-05
          %v2346 = vrsqrt.pop %v2345
          %v2347 = vmul.f32 %v2339, %v2346
          %v2349 = vlaneseq
          %v2350 = vshrl.u32 %v2349, 7
          %v2351 = vsub.s32 0, %v2350
          %v2352 = vrot.slane %v2332, %v2351
          %v2354 = vmul.f32 %v2347, %v2352
          %v2356 = vlaneseq
          %v2357 = vshrl.u32 %v2356, 7
          %v2358 = vsub.s32 0, %v2357
          %v2359 = vrot.slane %v2333, %v2358
          %v2361 = vadd.f32 %v2354, %v2359
          %2362 = vst.msk [vmem:[%s697] sm:$0xff] %vm2088, %v2361
        $region112: #{tpu_custom_call.1} parent=91 // pred_fallthru
          _
        %s2363 = sand.u32 %s472, 1
        %s2364 = scalar_lea.sflag [#allocation9], %s2363
        %s2365 = sand.u32 %s472, 1
        %s2366 = smul.addr %s2365, 8
        %s2367 = scalar_lea.vmem [#allocation12], %s2366
        // Predicated region
        $region113: #{tpu_custom_call.1} parent=91 // pred_check
          %p2368 = pneg %p482
        $region114: #{tpu_custom_call.1} parent=91 // pred_check_branch
          %2370 = sbr.rel (%p2368) target = $region116
        $region115: #{tpu_custom_call.1} parent=91 // pred_region
          %s2372 = ssub.s32 128, 128
          %2373 = vsyncadd %s2364, %s2372
          %s2374 = sadd.s32 %s44, %s43
          %s2375 = smul.addr %s2374, 128
          %s2376 = scalar_lea.hbm %s18, %s2375
          %s2378 = sshll.u32 %s2367, 4
          %s2379 = int_to_ptr.vmem [resolvable:$true] %s2378
          %2381 = dma.vmem_to_hbm [thread:$0]  %s2379, 128, %s2376, %s2364
        $region116: #{tpu_custom_call.1} parent=91 // pred_fallthru
          _
      $region92: #{tpu_custom_call.1} parent=5 // pred_fallthru
        _
      %p2382 = scmp.le.s32.totalorder 2, %s33
      // Predicated region
      $region117: #{tpu_custom_call.1} parent=5 // pred_check
        %p2383 = pneg %p2382
      $region118: #{tpu_custom_call.1} parent=5 // pred_check_branch
        %2385 = sbr.rel (%p2383) target = $region120
      $region119: #{tpu_custom_call.1} parent=5 // pred_region
        %s2386 = ssub.s32 %s33, 2
        // Predicated region
        $region121: #{tpu_custom_call.1} parent=119 // pred_check
          %p2387 = pneg %p488
        $region122: #{tpu_custom_call.1} parent=119 // pred_check_branch
          %2389 = sbr.rel (%p2387) target = $region124
        $region123: #{tpu_custom_call.1} parent=119 // pred_region
          %s2390 = sand.u32 %s473, 1
          %s2391 = scalar_lea.sflag [#allocation9], %s2390
          %s2392 = sand.u32 %s473, 1
          %s2393 = smul.addr %s2392, 8
          %s2394 = scalar_lea.vmem [#allocation12], %s2393
          %2395 = dma.done %s2391, 128
        $region124: #{tpu_custom_call.1} parent=119 // pred_fallthru
          _
      $region120: #{tpu_custom_call.1} parent=5 // pred_fallthru
        _
    $region6: #{tpu_custom_call.1} parent=1 // loop_footer
      %s37 = sadd.s32 1, %s33
    $region7: #{tpu_custom_call.1} parent=1 // loop_footer_branch
      %32 = sbr.rel target = $region3
    $region8: #{tpu_custom_call.1} parent=1 // loop_exit
      _
    %2396 = vsyncpa [#allocation8], 1
    %s2397 = scalar_lea.sflag [#allocation8], 1
    %2398 = vsyncpa %s2397, 1
    %2399 = vsyncpa [#allocation11], 1
    %s2400 = scalar_lea.sflag [#allocation11], 1
    %2401 = vsyncpa %s2400, 1
    %2402 = vsyncpa [#allocation9], 1
    %s2403 = scalar_lea.sflag [#allocation9], 1
    %2404 = vsyncpa %s2403, 1

// kernel: tpu_custom_call.1
$region0: #{tpu_custom_call.1}
  #allocation0 [shape = 'u32[]', space=smem, size = 0x4, offset = 0x4, fixed_abs, tag = 'smem constant byte address 0x4 - core index']
  #allocation1 [shape = 'u32[144,128]{1,0:T(1,128)}', space=vmem, size = 0x12000, scoped, tag = 'internal scratch']
  #allocation2 [shape = 'bf16[8,64]{1,0:T(8,128)(2,1)}', space=vmem, size = 0x800, scoped, tag = 'scratch operand']
  #allocation3 [shape = 'bf16[8,64]{1,0:T(8,128)(2,1)}', space=vmem, size = 0x800, scoped, tag = 'scratch operand']
  #allocation4 [shape = 'f32[8,64]{1,0:T(8,128)}', space=vmem, size = 0x1000, scoped, tag = 'scratch operand']
  #allocation5 [shape = 'f32[8,64]{1,0:T(8,128)}', space=vmem, size = 0x1000, scoped, tag = 'scratch operand']
  #allocation6 [shape = 'f32[8,64]{1,0:T(8,128)}', space=vmem, size = 0x1000, scoped, tag = 'scratch operand']
  %s0 = inlined_call_operand.hbm [shape: f32[2,8,64], index: 0, kind: input, shape index: {}]
  %s1 = inlined_call_operand.hbm [shape: f32[2,8,64], index: 1, kind: input, shape index: {}]
  %s2 = inlined_call_operand.vmem [shape: bf16[64,64], index: 2, kind: input, shape index: {}]
  %s3 = inlined_call_operand.vmem [shape: f32[1,64], index: 3, kind: input, shape index: {}]
  %s4 = inlined_call_operand.vmem [shape: bf16[64,64], index: 4, kind: input, shape index: {}]
  %s5 = inlined_call_operand.vmem [shape: f32[1,64], index: 5, kind: input, shape index: {}]
  %s6 = inlined_call_operand.vmem [shape: bf16[64,64], index: 6, kind: input, shape index: {}]
  %s7 = inlined_call_operand.vmem [shape: f32[1,64], index: 7, kind: input, shape index: {}]
  %s8 = inlined_call_operand.vmem [shape: bf16[64,64], index: 8, kind: input, shape index: {}]
  %s9 = inlined_call_operand.vmem [shape: f32[1,64], index: 9, kind: input, shape index: {}]
  %s10 = inlined_call_operand.vmem [shape: f32[1,64], index: 10, kind: input, shape index: {}]
  %s11 = inlined_call_operand.vmem [shape: f32[1,64], index: 11, kind: input, shape index: {}]
  %s12 = inlined_call_operand.vmem [shape: bf16[64,256], index: 12, kind: input, shape index: {}]
  %s13 = inlined_call_operand.vmem [shape: f32[1,256], index: 13, kind: input, shape index: {}]
  %s14 = inlined_call_operand.vmem [shape: bf16[256,64], index: 14, kind: input, shape index: {}]
  %s15 = inlined_call_operand.vmem [shape: f32[1,64], index: 15, kind: input, shape index: {}]
  %s16 = inlined_call_operand.vmem [shape: f32[1,64], index: 16, kind: input, shape index: {}]
  %s17 = inlined_call_operand.vmem [shape: f32[1,64], index: 17, kind: input, shape index: {}]
  %s18 = inlined_call_operand.hbm [shape: f32[2,8,64], index: 18, kind: output, shape index: {}]
  %s19 = sld [smem:[#allocation0]]
  $region125: #{tpu_custom_call.1} parent=0
    _
  %s21 = ssub.s32 1, %s19
  %s22 = scalar_select 0, %s21, %s19
  $region1: #{tpu_custom_call.1} parent=0
    #allocation7 [shape = 'u8[8192]{0}', space=vmem, size = 0x2000, scoped, tag = 'input window, operand 0']
    #allocation8 [shape = 's32[2]{0}', space=sflag, size = 0x8, scoped, tag = 'scoped memory for tpu_custom_call.1']
    #allocation9 [shape = 's32[2]{0}', space=sflag, size = 0x8, scoped, tag = 'scoped memory for tpu_custom_call.1']
    #allocation10 [shape = 'u8[8192]{0}', space=vmem, size = 0x2000, scoped, tag = 'input window, operand 1']
    #allocation11 [shape = 's32[2]{0}', space=sflag, size = 0x8, scoped, tag = 'scoped memory for tpu_custom_call.1']
    #allocation12 [shape = 'u8[8192]{0}', space=vmem, size = 0x2000, scoped, tag = 'output window, operand 0']
    %23 = vsyncpa [#allocation8], 0
    %s24 = scalar_lea.sflag [#allocation8], 1
    %25 = vsyncpa %s24, 0
    %26 = vsyncpa [#allocation11], 0
    %s27 = scalar_lea.sflag [#allocation11], 1
    %28 = vsyncpa %s27, 0
    %29 = vsyncpa [#allocation9], 0
    %s30 = scalar_lea.sflag [#allocation9], 1
    %31 = vsyncpa %s30, 0
    loop: start=0, step=1, limit=4
    $region2: #{tpu_custom_call.1} parent=1 // loop_pre_header
      _
    $region3: #{tpu_custom_call.1} parent=1 // loop_header
      %s33 = sphi 0, %s37
      %p34 = scmp.ge.s32.totalorder %s33, 4
      %s40 = sphi 0, %s59
      %s41 = sphi 0, %s55
      %s42 = sphi 0, %s51
      %s43 = sphi 0, %s40
      %s44 = sphi 0, %s41
      %s45 = sphi 0, %s42
      %s46 = sphi 0, %s43
      %s47 = sphi 0, %s44
      %s48 = sphi 0, %s45
      %s62 = sphi 0, %s64
      %s65 = sphi 0, %s62
      %s66 = sphi 0, %s65
      %s82 = sphi 0, %s66
      %s90 = sphi 0, %s92
      %s93 = sphi 0, %s90
      %s94 = sphi 0, %s93
      %s110 = sphi 0, %s94
      %s114 = sphi 0, %s114
      %s116 = sphi 0, %s114
      %s117 = sphi 0, %s116
      %s131 = sphi 0, %s117
      %s135 = sphi 0, %s135
      %s137 = sphi 0, %s135
      %s138 = sphi 0, %s137
      %s152 = sphi 0, %s138
      %s156 = sphi 0, %s156
      %s158 = sphi 0, %s156
      %s159 = sphi 0, %s158
      %s173 = sphi 0, %s159
      %s177 = sphi 0, %s177
      %s179 = sphi 0, %s177
      %s180 = sphi 0, %s179
      %s194 = sphi 0, %s180
      %s198 = sphi 0, %s198
      %s200 = sphi 0, %s198
      %s201 = sphi 0, %s200
      %s215 = sphi 0, %s201
      %s219 = sphi 0, %s219
      %s221 = sphi 0, %s219
      %s222 = sphi 0, %s221
      %s236 = sphi 0, %s222
      %s240 = sphi 0, %s240
      %s242 = sphi 0, %s240
      %s243 = sphi 0, %s242
      %s257 = sphi 0, %s243
      %s261 = sphi 0, %s261
      %s263 = sphi 0, %s261
      %s264 = sphi 0, %s263
      %s278 = sphi 0, %s264
      %s282 = sphi 0, %s282
      %s284 = sphi 0, %s282
      %s285 = sphi 0, %s284
      %s299 = sphi 0, %s285
      %s303 = sphi 0, %s303
      %s305 = sphi 0, %s303
      %s306 = sphi 0, %s305
      %s320 = sphi 0, %s306
      %s326 = sphi 0, %s328
      %s329 = sphi 0, %s326
      %s330 = sphi 0, %s329
      %s346 = sphi 0, %s330
      %s352 = sphi 0, %s354
      %s355 = sphi 0, %s352
      %s356 = sphi 0, %s355
      %s372 = sphi 0, %s356
      %s378 = sphi 0, %s380
      %s381 = sphi 0, %s378
      %s382 = sphi 0, %s381
      %s398 = sphi 0, %s382
      %s402 = sphi 0, %s402
      %s404 = sphi 0, %s402
      %s405 = sphi 0, %s404
      %s419 = sphi 0, %s405
      %s423 = sphi 0, %s423
      %s425 = sphi 0, %s423
      %s426 = sphi 0, %s425
      %s440 = sphi 0, %s426
      %s444 = sphi 0, %s444
      %s446 = sphi 0, %s444
      %s447 = sphi 0, %s446
      %s461 = sphi 0, %s447
      %s469 = sphi 0, %s471
      %s472 = sphi 0, %s469
      %s473 = sphi 0, %s472
      %s489 = sphi 0, %s473
    $region4: #{tpu_custom_call.1} parent=1 // loop_header_branch
      %36 = sbr.rel (%p34) target = $region8
    $region5: #{tpu_custom_call.1} parent=1 // loop_body
      %s38 = ssub.s32 %s33, 1
      %s39 = ssub.s32 %s33, 2
      %s49 = sadd.s32 1, %s42
      %p50 = scmp.ge.s32.totalorder %s49, 1
      %s51 = scalar_select %p50, 0, %s49
      %s52 = sadd.s32 1, %s41
      %s53 = scalar_select %p50, %s52, %s41
      %p54 = scmp.ge.s32.totalorder %s53, 1
      %s55 = scalar_select %p54, 0, %s53
      %s56 = sadd.s32 1, %s40
      %s57 = scalar_select %p54, %s56, %s40
      %p58 = scmp.ge.s32.totalorder %s57, 2
      %s59 = scalar_select %p58, 0, %s57
      %s60 = ssub.s32 %s40, %s59
      %p61 = scmp.eq.s32.totalorder %s60, 0
      %s63 = sadd.s32 %s62, 1
      %s64 = scalar_select %p61, %s62, %s63
      %p67 = pneg %p61
      %p68 = scmp.eq.s32.totalorder %s33, 1
      %p69 = por %p67, %p68
      %p70 = scmp.ne.s32.totalorder %s62, %s65
      %p71 = scmp.eq.s32.totalorder %s33, 0
      %p72 = por %p70, %p71
      %p73 = scmp.ne.s32.totalorder %s62, %s65
      %p74 = scmp.eq.s32.totalorder %s38, 1
      %p75 = por %p73, %p74
      %p76 = scmp.ne.s32.totalorder %s65, %s66
      %p77 = scmp.eq.s32.totalorder %s38, 0
      %p78 = por %p76, %p77
      %p79 = scmp.ne.s32.totalorder %s65, %s66
      %p80 = scmp.eq.s32.totalorder %s39, 1
      %p81 = por %p79, %p80
      %p83 = scmp.ne.s32.totalorder %s66, %s82
      %p84 = scmp.eq.s32.totalorder %s39, 0
      %p85 = por %p83, %p84
      %s86 = ssub.s32 %s40, %s59
      %s87 = ssub.s32 %s41, %s55
      %s88 = sor.u32 %s86, %s87
      %p89 = scmp.eq.s32.totalorder %s88, 0
      %s91 = sadd.s32 %s90, 1
      %s92 = scalar_select %p89, %s90, %s91
      %p95 = pneg %p89
      %p96 = scmp.eq.s32.totalorder %s33, 1
      %p97 = por %p95, %p96
      %p98 = scmp.ne.s32.totalorder %s90, %s93
      %p99 = scmp.eq.s32.totalorder %s33, 0
      %p100 = por %p98, %p99
      %p101 = scmp.ne.s32.totalorder %s90, %s93
      %p102 = scmp.eq.s32.totalorder %s38, 1
      %p103 = por %p101, %p102
      %p104 = scmp.ne.s32.totalorder %s93, %s94
      %p105 = scmp.eq.s32.totalorder %s38, 0
      %p106 = por %p104, %p105
      %p107 = scmp.ne.s32.totalorder %s93, %s94
      %p108 = scmp.eq.s32.totalorder %s39, 1
      %p109 = por %p107, %p108
      %p111 = scmp.ne.s32.totalorder %s94, %s110
      %p112 = scmp.eq.s32.totalorder %s39, 0
      %p113 = por %p111, %p112
      %s115 = sadd.s32 %s114, 1
      %p118 = scmp.eq.s32.totalorder %s33, 1
      %p119 = scmp.ne.s32.totalorder %s114, %s116
      %p120 = scmp.eq.s32.totalorder %s33, 0
      %p121 = por %p119, %p120
      %p122 = scmp.ne.s32.totalorder %s114, %s116
      %p123 = scmp.eq.s32.totalorder %s38, 1
      %p124 = por %p122, %p123
      %p125 = scmp.ne.s32.totalorder %s116, %s117
      %p126 = scmp.eq.s32.totalorder %s38, 0
      %p127 = por %p125, %p126
      %p128 = scmp.ne.s32.totalorder %s116, %s117
      %p129 = scmp.eq.s32.totalorder %s39, 1
      %p130 = por %p128, %p129
      %p132 = scmp.ne.s32.totalorder %s117, %s131
      %p133 = scmp.eq.s32.totalorder %s39, 0
      %p134 = por %p132, %p133
      %s136 = sadd.s32 %s135, 1
      %p139 = scmp.eq.s32.totalorder %s33, 1
      %p140 = scmp.ne.s32.totalorder %s135, %s137
      %p141 = scmp.eq.s32.totalorder %s33, 0
      %p142 = por %p140, %p141
      %p143 = scmp.ne.s32.totalorder %s135, %s137
      %p144 = scmp.eq.s32.totalorder %s38, 1
      %p145 = por %p143, %p144
      %p146 = scmp.ne.s32.totalorder %s137, %s138
      %p147 = scmp.eq.s32.totalorder %s38, 0
      %p148 = por %p146, %p147
      %p149 = scmp.ne.s32.totalorder %s137, %s138
      %p150 = scmp.eq.s32.totalorder %s39, 1
      %p151 = por %p149, %p150
      %p153 = scmp.ne.s32.totalorder %s138, %s152
      %p154 = scmp.eq.s32.totalorder %s39, 0
      %p155 = por %p153, %p154
      %s157 = sadd.s32 %s156, 1
      %p160 = scmp.eq.s32.totalorder %s33, 1
      %p161 = scmp.ne.s32.totalorder %s156, %s158
      %p162 = scmp.eq.s32.totalorder %s33, 0
      %p163 = por %p161, %p162
      %p164 = scmp.ne.s32.totalorder %s156, %s158
      %p165 = scmp.eq.s32.totalorder %s38, 1
      %p166 = por %p164, %p165
      %p167 = scmp.ne.s32.totalorder %s158, %s159
      %p168 = scmp.eq.s32.totalorder %s38, 0
      %p169 = por %p167, %p168
      %p170 = scmp.ne.s32.totalorder %s158, %s159
      %p171 = scmp.eq.s32.totalorder %s39, 1
      %p172 = por %p170, %p171
      %p174 = scmp.ne.s32.totalorder %s159, %s173
      %p175 = scmp.eq.s32.totalorder %s39, 0
      %p176 = por %p174, %p175
      %s178 = sadd.s32 %s177, 1
      %p181 = scmp.eq.s32.totalorder %s33, 1
      %p182 = scmp.ne.s32.totalorder %s177, %s179
      %p183 = scmp.eq.s32.totalorder %s33, 0
      %p184 = por %p182, %p183
      %p185 = scmp.ne.s32.totalorder %s177, %s179
      %p186 = scmp.eq.s32.totalorder %s38, 1
      %p187 = por %p185, %p186
      %p188 = scmp.ne.s32.totalorder %s179, %s180
      %p189 = scmp.eq.s32.totalorder %s38, 0
      %p190 = por %p188, %p189
      %p191 = scmp.ne.s32.totalorder %s179, %s180
      %p192 = scmp.eq.s32.totalorder %s39, 1
      %p193 = por %p191, %p192
      %p195 = scmp.ne.s32.totalorder %s180, %s194
      %p196 = scmp.eq.s32.totalorder %s39, 0
      %p197 = por %p195, %p196
      %s199 = sadd.s32 %s198, 1
      %p202 = scmp.eq.s32.totalorder %s33, 1
      %p203 = scmp.ne.s32.totalorder %s198, %s200
      %p204 = scmp.eq.s32.totalorder %s33, 0
      %p205 = por %p203, %p204
      %p206 = scmp.ne.s32.totalorder %s198, %s200
      %p207 = scmp.eq.s32.totalorder %s38, 1
      %p208 = por %p206, %p207
      %p209 = scmp.ne.s32.totalorder %s200, %s201
      %p210 = scmp.eq.s32.totalorder %s38, 0
      %p211 = por %p209, %p210
      %p212 = scmp.ne.s32.totalorder %s200, %s201
      %p213 = scmp.eq.s32.totalorder %s39, 1
      %p214 = por %p212, %p213
      %p216 = scmp.ne.s32.totalorder %s201, %s215
      %p217 = scmp.eq.s32.totalorder %s39, 0
      %p218 = por %p216, %p217
      %s220 = sadd.s32 %s219, 1
      %p223 = scmp.eq.s32.totalorder %s33, 1
      %p224 = scmp.ne.s32.totalorder %s219, %s221
      %p225 = scmp.eq.s32.totalorder %s33, 0
      %p226 = por %p224, %p225
      %p227 = scmp.ne.s32.totalorder %s219, %s221
      %p228 = scmp.eq.s32.totalorder %s38, 1
      %p229 = por %p227, %p228
      %p230 = scmp.ne.s32.totalorder %s221, %s222
      %p231 = scmp.eq.s32.totalorder %s38, 0
      %p232 = por %p230, %p231
      %p233 = scmp.ne.s32.totalorder %s221, %s222
      %p234 = scmp.eq.s32.totalorder %s39, 1
      %p235 = por %p233, %p234
      %p237 = scmp.ne.s32.totalorder %s222, %s236
      %p238 = scmp.eq.s32.totalorder %s39, 0
      %p239 = por %p237, %p238
      %s241 = sadd.s32 %s240, 1
      %p244 = scmp.eq.s32.totalorder %s33, 1
      %p245 = scmp.ne.s32.totalorder %s240, %s242
      %p246 = scmp.eq.s32.totalorder %s33, 0
      %p247 = por %p245, %p246
      %p248 = scmp.ne.s32.totalorder %s240, %s242
      %p249 = scmp.eq.s32.totalorder %s38, 1
      %p250 = por %p248, %p249
      %p251 = scmp.ne.s32.totalorder %s242, %s243
      %p252 = scmp.eq.s32.totalorder %s38, 0
      %p253 = por %p251, %p252
      %p254 = scmp.ne.s32.totalorder %s242, %s243
      %p255 = scmp.eq.s32.totalorder %s39, 1
      %p256 = por %p254, %p255
      %p258 = scmp.ne.s32.totalorder %s243, %s257
      %p259 = scmp.eq.s32.totalorder %s39, 0
      %p260 = por %p258, %p259
      %s262 = sadd.s32 %s261, 1
      %p265 = scmp.eq.s32.totalorder %s33, 1
      %p266 = scmp.ne.s32.totalorder %s261, %s263
      %p267 = scmp.eq.s32.totalorder %s33, 0
      %p268 = por %p266, %p267
      %p269 = scmp.ne.s32.totalorder %s261, %s263
      %p270 = scmp.eq.s32.totalorder %s38, 1
      %p271 = por %p269, %p270
      %p272 = scmp.ne.s32.totalorder %s263, %s264
      %p273 = scmp.eq.s32.totalorder %s38, 0
      %p274 = por %p272, %p273
      %p275 = scmp.ne.s32.totalorder %s263, %s264
      %p276 = scmp.eq.s32.totalorder %s39, 1
      %p277 = por %p275, %p276
      %p279 = scmp.ne.s32.totalorder %s264, %s278
      %p280 = scmp.eq.s32.totalorder %s39, 0
      %p281 = por %p279, %p280
      %s283 = sadd.s32 %s282, 1
      %p286 = scmp.eq.s32.totalorder %s33, 1
      %p287 = scmp.ne.s32.totalorder %s282, %s284
      %p288 = scmp.eq.s32.totalorder %s33, 0
      %p289 = por %p287, %p288
      %p290 = scmp.ne.s32.totalorder %s282, %s284
      %p291 = scmp.eq.s32.totalorder %s38, 1
      %p292 = por %p290, %p291
      %p293 = scmp.ne.s32.totalorder %s284, %s285
      %p294 = scmp.eq.s32.totalorder %s38, 0
      %p295 = por %p293, %p294
      %p296 = scmp.ne.s32.totalorder %s284, %s285
      %p297 = scmp.eq.s32.totalorder %s39, 1
      %p298 = por %p296, %p297
      %p300 = scmp.ne.s32.totalorder %s285, %s299
      %p301 = scmp.eq.s32.totalorder %s39, 0
      %p302 = por %p300, %p301
      %s304 = sadd.s32 %s303, 1
      %p307 = scmp.eq.s32.totalorder %s33, 1
      %p308 = scmp.ne.s32.totalorder %s303, %s305
      %p309 = scmp.eq.s32.totalorder %s33, 0
      %p310 = por %p308, %p309
      %p311 = scmp.ne.s32.totalorder %s303, %s305
      %p312 = scmp.eq.s32.totalorder %s38, 1
      %p313 = por %p311, %p312
      %p314 = scmp.ne.s32.totalorder %s305, %s306
      %p315 = scmp.eq.s32.totalorder %s38, 0
      %p316 = por %p314, %p315
      %p317 = scmp.ne.s32.totalorder %s305, %s306
      %p318 = scmp.eq.s32.totalorder %s39, 1
      %p319 = por %p317, %p318
      %p321 = scmp.ne.s32.totalorder %s306, %s320
      %p322 = scmp.eq.s32.totalorder %s39, 0
      %p323 = por %p321, %p322
      %s324 = ssub.s32 %s42, %s51
      %p325 = scmp.eq.s32.totalorder %s324, 0
      %s327 = sadd.s32 %s326, 1
      %s328 = scalar_select %p325, %s326, %s327
      %p331 = pneg %p325
      %p332 = scmp.eq.s32.totalorder %s33, 1
      %p333 = por %p331, %p332
      %p334 = scmp.ne.s32.totalorder %s326, %s329
      %p335 = scmp.eq.s32.totalorder %s33, 0
      %p336 = por %p334, %p335
      %p337 = scmp.ne.s32.totalorder %s326, %s329
      %p338 = scmp.eq.s32.totalorder %s38, 1
      %p339 = por %p337, %p338
      %p340 = scmp.ne.s32.totalorder %s329, %s330
      %p341 = scmp.eq.s32.totalorder %s38, 0
      %p342 = por %p340, %p341
      %p343 = scmp.ne.s32.totalorder %s329, %s330
      %p344 = scmp.eq.s32.totalorder %s39, 1
      %p345 = por %p343, %p344
      %p347 = scmp.ne.s32.totalorder %s330, %s346
      %p348 = scmp.eq.s32.totalorder %s39, 0
      %p349 = por %p347, %p348
      %s350 = ssub.s32 %s42, %s51
      %p351 = scmp.eq.s32.totalorder %s350, 0
      %s353 = sadd.s32 %s352, 1
      %s354 = scalar_select %p351, %s352, %s353
      %p357 = pneg %p351
      %p358 = scmp.eq.s32.totalorder %s33, 1
      %p359 = por %p357, %p358
      %p360 = scmp.ne.s32.totalorder %s352, %s355
      %p361 = scmp.eq.s32.totalorder %s33, 0
      %p362 = por %p360, %p361
      %p363 = scmp.ne.s32.totalorder %s352, %s355
      %p364 = scmp.eq.s32.totalorder %s38, 1
      %p365 = por %p363, %p364
      %p366 = scmp.ne.s32.totalorder %s355, %s356
      %p367 = scmp.eq.s32.totalorder %s38, 0
      %p368 = por %p366, %p367
      %p369 = scmp.ne.s32.totalorder %s355, %s356
      %p370 = scmp.eq.s32.totalorder %s39, 1
      %p371 = por %p369, %p370
      %p373 = scmp.ne.s32.totalorder %s356, %s372
      %p374 = scmp.eq.s32.totalorder %s39, 0
      %p375 = por %p373, %p374
      %s376 = ssub.s32 %s42, %s51
      %p377 = scmp.eq.s32.totalorder %s376, 0
      %s379 = sadd.s32 %s378, 1
      %s380 = scalar_select %p377, %s378, %s379
      %p383 = pneg %p377
      %p384 = scmp.eq.s32.totalorder %s33, 1
      %p385 = por %p383, %p384
      %p386 = scmp.ne.s32.totalorder %s378, %s381
      %p387 = scmp.eq.s32.totalorder %s33, 0
      %p388 = por %p386, %p387
      %p389 = scmp.ne.s32.totalorder %s378, %s381
      %p390 = scmp.eq.s32.totalorder %s38, 1
      %p391 = por %p389, %p390
      %p392 = scmp.ne.s32.totalorder %s381, %s382
      %p393 = scmp.eq.s32.totalorder %s38, 0
      %p394 = por %p392, %p393
      %p395 = scmp.ne.s32.totalorder %s381, %s382
      %p396 = scmp.eq.s32.totalorder %s39, 1
      %p397 = por %p395, %p396
      %p399 = scmp.ne.s32.totalorder %s382, %s398
      %p400 = scmp.eq.s32.totalorder %s39, 0
      %p401 = por %p399, %p400
      %s403 = sadd.s32 %s402, 1
      %p406 = scmp.eq.s32.totalorder %s33, 1
      %p407 = scmp.ne.s32.totalorder %s402, %s404
      %p408 = scmp.eq.s32.totalorder %s33, 0
      %p409 = por %p407, %p408
      %p410 = scmp.ne.s32.totalorder %s402, %s404
      %p411 = scmp.eq.s32.totalorder %s38, 1
      %p412 = por %p410, %p411
      %p413 = scmp.ne.s32.totalorder %s404, %s405
      %p414 = scmp.eq.s32.totalorder %s38, 0
      %p415 = por %p413, %p414
      %p416 = scmp.ne.s32.totalorder %s404, %s405
      %p417 = scmp.eq.s32.totalorder %s39, 1
      %p418 = por %p416, %p417
      %p420 = scmp.ne.s32.totalorder %s405, %s419
      %p421 = scmp.eq.s32.totalorder %s39, 0
      %p422 = por %p420, %p421
      %s424 = sadd.s32 %s423, 1
      %p427 = scmp.eq.s32.totalorder %s33, 1
      %p428 = scmp.ne.s32.totalorder %s423, %s425
      %p429 = scmp.eq.s32.totalorder %s33, 0
      %p430 = por %p428, %p429
      %p431 = scmp.ne.s32.totalorder %s423, %s425
      %p432 = scmp.eq.s32.totalorder %s38, 1
      %p433 = por %p431, %p432
      %p434 = scmp.ne.s32.totalorder %s425, %s426
      %p435 = scmp.eq.s32.totalorder %s38, 0
      %p436 = por %p434, %p435
      %p437 = scmp.ne.s32.totalorder %s425, %s426
      %p438 = scmp.eq.s32.totalorder %s39, 1
      %p439 = por %p437, %p438
      %p441 = scmp.ne.s32.totalorder %s426, %s440
      %p442 = scmp.eq.s32.totalorder %s39, 0
      %p443 = por %p441, %p442
      %s445 = sadd.s32 %s444, 1
      %p448 = scmp.eq.s32.totalorder %s33, 1
      %p449 = scmp.ne.s32.totalorder %s444, %s446
      %p450 = scmp.eq.s32.totalorder %s33, 0
      %p451 = por %p449, %p450
      %p452 = scmp.ne.s32.totalorder %s444, %s446
      %p453 = scmp.eq.s32.totalorder %s38, 1
      %p454 = por %p452, %p453
      %p455 = scmp.ne.s32.totalorder %s446, %s447
      %p456 = scmp.eq.s32.totalorder %s38, 0
      %p457 = por %p455, %p456
      %p458 = scmp.ne.s32.totalorder %s446, %s447
      %p459 = scmp.eq.s32.totalorder %s39, 1
      %p460 = por %p458, %p459
      %p462 = scmp.ne.s32.totalorder %s447, %s461
      %p463 = scmp.eq.s32.totalorder %s39, 0
      %p464 = por %p462, %p463
      %s465 = ssub.s32 %s40, %s59
      %s466 = ssub.s32 %s41, %s55
      %s467 = sor.u32 %s465, %s466
      %p468 = scmp.eq.s32.totalorder %s467, 0
      %s470 = sadd.s32 %s469, 1
      %s471 = scalar_select %p468, %s469, %s470
      %p474 = pneg %p468
      %p475 = scmp.eq.s32.totalorder %s33, 1
      %p476 = por %p474, %p475
      %p477 = scmp.ne.s32.totalorder %s469, %s472
      %p478 = scmp.eq.s32.totalorder %s33, 0
      %p479 = por %p477, %p478
      %p480 = scmp.ne.s32.totalorder %s469, %s472
      %p481 = scmp.eq.s32.totalorder %s38, 1
      %p482 = por %p480, %p481
      %p483 = scmp.ne.s32.totalorder %s472, %s473
      %p484 = scmp.eq.s32.totalorder %s38, 0
      %p485 = por %p483, %p484
      %p486 = scmp.ne.s32.totalorder %s472, %s473
      %p487 = scmp.eq.s32.totalorder %s39, 1
      %p488 = por %p486, %p487
      %p490 = scmp.ne.s32.totalorder %s473, %s489
      %p491 = scmp.eq.s32.totalorder %s39, 0
      %p492 = por %p490, %p491
      %p493 = scmp.le.s32.totalorder 1, %s33
      %p494 = scmp.lt.s32.totalorder %s33, 3
      %p495 = pnand %p493, %p494
      %p496 = pneg %p495
      // Predicated region
      $region9: #{tpu_custom_call.1} parent=5 // pred_check
        _
      $region10: #{tpu_custom_call.1} parent=5 // pred_check_branch
        %498 = sbr.rel (%p495) target = $region12
      $region11: #{tpu_custom_call.1} parent=5 // pred_region
        %s499 = ssub.s32 %s33, 1
        // Predicated region
        $region13: #{tpu_custom_call.1} parent=11 // pred_check
          %p500 = pneg %p127
        $region14: #{tpu_custom_call.1} parent=11 // pred_check_branch
          %502 = sbr.rel (%p500) target = $region16
        $region15: #{tpu_custom_call.1} parent=11 // pred_region
          _
        $region16: #{tpu_custom_call.1} parent=11 // pred_fallthru
          _
        // Predicated region
        $region17: #{tpu_custom_call.1} parent=11 // pred_check
          %p503 = pneg %p148
        $region18: #{tpu_custom_call.1} parent=11 // pred_check_branch
          %505 = sbr.rel (%p503) target = $region20
        $region19: #{tpu_custom_call.1} parent=11 // pred_region
          _
        $region20: #{tpu_custom_call.1} parent=11 // pred_fallthru
          _
        // Predicated region
        $region21: #{tpu_custom_call.1} parent=11 // pred_check
          %p506 = pneg %p169
        $region22: #{tpu_custom_call.1} parent=11 // pred_check_branch
          %508 = sbr.rel (%p506) target = $region24
        $region23: #{tpu_custom_call.1} parent=11 // pred_region
          _
        $region24: #{tpu_custom_call.1} parent=11 // pred_fallthru
          _
        // Predicated region
        $region25: #{tpu_custom_call.1} parent=11 // pred_check
          %p509 = pneg %p190
        $region26: #{tpu_custom_call.1} parent=11 // pred_check_branch
          %511 = sbr.rel (%p509) target = $region28
        $region27: #{tpu_custom_call.1} parent=11 // pred_region
          _
        $region28: #{tpu_custom_call.1} parent=11 // pred_fallthru
          _
        // Predicated region
        $region29: #{tpu_custom_call.1} parent=11 // pred_check
          %p512 = pneg %p211
        $region30: #{tpu_custom_call.1} parent=11 // pred_check_branch
          %514 = sbr.rel (%p512) target = $region32
        $region31: #{tpu_custom_call.1} parent=11 // pred_region
          _
        $region32: #{tpu_custom_call.1} parent=11 // pred_fallthru
          _
        // Predicated region
        $region33: #{tpu_custom_call.1} parent=11 // pred_check
          %p515 = pneg %p232
        $region34: #{tpu_custom_call.1} parent=11 // pred_check_branch
          %517 = sbr.rel (%p515) target = $region36
        $region35: #{tpu_custom_call.1} parent=11 // pred_region
          _
        $region36: #{tpu_custom_call.1} parent=11 // pred_fallthru
          _
        // Predicated region
        $region37: #{tpu_custom_call.1} parent=11 // pred_check
          %p518 = pneg %p253
        $region38: #{tpu_custom_call.1} parent=11 // pred_check_branch
          %520 = sbr.rel (%p518) target = $region40
        $region39: #{tpu_custom_call.1} parent=11 // pred_region
          _
        $region40: #{tpu_custom_call.1} parent=11 // pred_fallthru
          _
        // Predicated region
        $region41: #{tpu_custom_call.1} parent=11 // pred_check
          %p521 = pneg %p274
        $region42: #{tpu_custom_call.1} parent=11 // pred_check_branch
          %523 = sbr.rel (%p521) target = $region44
        $region43: #{tpu_custom_call.1} parent=11 // pred_region
          _
        $region44: #{tpu_custom_call.1} parent=11 // pred_fallthru
          _
        // Predicated region
        $region45: #{tpu_custom_call.1} parent=11 // pred_check
          %p524 = pneg %p295
        $region46: #{tpu_custom_call.1} parent=11 // pred_check_branch
          %526 = sbr.rel (%p524) target = $region48
        $region47: #{tpu_custom_call.1} parent=11 // pred_region
          _
        $region48: #{tpu_custom_call.1} parent=11 // pred_fallthru
          _
        // Predicated region
        $region49: #{tpu_custom_call.1} parent=11 // pred_check
          %p527 = pneg %p316
        $region50: #{tpu_custom_call.1} parent=11 // pred_check_branch
          %529 = sbr.rel (%p527) target = $region52
        $region51: #{tpu_custom_call.1} parent=11 // pred_region
          _
        $region52: #{tpu_custom_call.1} parent=11 // pred_fallthru
          _
        // Predicated region
        $region53: #{tpu_custom_call.1} parent=11 // pred_check
          %p530 = pneg %p342
        $region54: #{tpu_custom_call.1} parent=11 // pred_check_branch
          %532 = sbr.rel (%p530) target = $region56
        $region55: #{tpu_custom_call.1} parent=11 // pred_region
          %s533 = smul.u32 2, %s45
          %p534 = scmp.lt.s32.totalorder %s533, 1
          %s535 = scalar_select %p534, %s533, 1
          %s536 = smul.addr %s535, 4
          %s537 = scalar_lea.vmem %s12, %s536
          %s538 = smul.u32 2, %s45
        $region56: #{tpu_custom_call.1} parent=11 // pred_fallthru
          _
        // Predicated region
        $region57: #{tpu_custom_call.1} parent=11 // pred_check
          %p539 = pneg %p368
        $region58: #{tpu_custom_call.1} parent=11 // pred_check_branch
          %541 = sbr.rel (%p539) target = $region60
        $region59: #{tpu_custom_call.1} parent=11 // pred_region
          %s542 = smul.u32 2, %s45
          %p543 = scmp.lt.s32.totalorder %s542, 1
          %s544 = scalar_select %p543, %s542, 1
          %s545 = scalar_lea.vmem %s13, %s544
          %s546 = smul.u32 2, %s45
        $region60: #{tpu_custom_call.1} parent=11 // pred_fallthru
          _
        // Predicated region
        $region61: #{tpu_custom_call.1} parent=11 // pred_check
          %p547 = pneg %p394
        $region62: #{tpu_custom_call.1} parent=11 // pred_check_branch
          %549 = sbr.rel (%p547) target = $region64
        $region63: #{tpu_custom_call.1} parent=11 // pred_region
          %s550 = smul.u32 32, %s45
          %p551 = scmp.lt.s32.totalorder %s550, 31
          %s552 = scalar_select %p551, %s550, 31
          %s553 = smul.addr %s552, 4
          %s554 = scalar_lea.vmem %s14, %s553
          %s555 = smul.u32 32, %s45
        $region64: #{tpu_custom_call.1} parent=11 // pred_fallthru
          _
        // Predicated region
        $region65: #{tpu_custom_call.1} parent=11 // pred_check
          %p556 = pneg %p415
        $region66: #{tpu_custom_call.1} parent=11 // pred_check_branch
          %558 = sbr.rel (%p556) target = $region68
        $region67: #{tpu_custom_call.1} parent=11 // pred_region
          _
        $region68: #{tpu_custom_call.1} parent=11 // pred_fallthru
          _
        // Predicated region
        $region69: #{tpu_custom_call.1} parent=11 // pred_check
          %p559 = pneg %p436
        $region70: #{tpu_custom_call.1} parent=11 // pred_check_branch
          %561 = sbr.rel (%p559) target = $region72
        $region71: #{tpu_custom_call.1} parent=11 // pred_region
          _
        $region72: #{tpu_custom_call.1} parent=11 // pred_fallthru
          _
        // Predicated region
        $region73: #{tpu_custom_call.1} parent=11 // pred_check
          %p562 = pneg %p457
        $region74: #{tpu_custom_call.1} parent=11 // pred_check_branch
          %564 = sbr.rel (%p562) target = $region76
        $region75: #{tpu_custom_call.1} parent=11 // pred_region
          _
        $region76: #{tpu_custom_call.1} parent=11 // pred_fallthru
          _
      $region12: #{tpu_custom_call.1} parent=5 // pred_fallthru
        _
      %p565 = scmp.lt.s32.totalorder %s33, 2
      // Predicated region
      $region77: #{tpu_custom_call.1} parent=5 // pred_check
        %p566 = pneg %p565
      $region78: #{tpu_custom_call.1} parent=5 // pred_check_branch
        %568 = sbr.rel (%p566) target = $region80
      $region79: #{tpu_custom_call.1} parent=5 // pred_region
        // Predicated region
        $region81: #{tpu_custom_call.1} parent=79 // pred_check
          %p569 = pneg %p72
        $region82: #{tpu_custom_call.1} parent=79 // pred_check_branch
          %571 = sbr.rel (%p569) target = $region84
        $region83: #{tpu_custom_call.1} parent=79 // pred_region
          %s572 = sand.u32 %s62, 1
          %s573 = scalar_lea.sflag [#allocation8], %s572
          %s574 = sand.u32 %s62, 1
          %s575 = smul.addr %s574, 8
          %s576 = scalar_lea.vmem [#allocation7], %s575
          %s578 = ssub.s32 128, 128
          %579 = vsyncadd %s573, %s578
          %s580 = smul.addr %s40, 128
          %s581 = scalar_lea.hbm %s0, %s580
          %s583 = sshll.u32 %s576, 4
          %s584 = int_to_ptr.vmem [resolvable:$true] %s583
          %586 = dma.hbm_to_vmem [thread:$0]  %s581, 128, %s584, %s573
        $region84: #{tpu_custom_call.1} parent=79 // pred_fallthru
          _
        // Predicated region
        $region85: #{tpu_custom_call.1} parent=79 // pred_check
          %p587 = pneg %p100
        $region86: #{tpu_custom_call.1} parent=79 // pred_check_branch
          %589 = sbr.rel (%p587) target = $region88
        $region87: #{tpu_custom_call.1} parent=79 // pred_region
          %s590 = sand.u32 %s90, 1
          %s591 = scalar_lea.sflag [#allocation11], %s590
          %s592 = sand.u32 %s90, 1
          %s593 = smul.addr %s592, 8
          %s594 = scalar_lea.vmem [#allocation10], %s593
          %s596 = ssub.s32 128, 128
          %597 = vsyncadd %s591, %s596
          %s598 = sadd.s32 %s41, %s40
          %s599 = smul.addr %s598, 128
          %s600 = scalar_lea.hbm %s1, %s599
          %s602 = sshll.u32 %s594, 4
          %s603 = int_to_ptr.vmem [resolvable:$true] %s602
          %605 = dma.hbm_to_vmem [thread:$0]  %s600, 128, %s603, %s591
        $region88: #{tpu_custom_call.1} parent=79 // pred_fallthru
          _
      $region80: #{tpu_custom_call.1} parent=5 // pred_fallthru
        _
      %p606 = scmp.le.s32.totalorder 1, %s33
      %p607 = scmp.lt.s32.totalorder %s33, 3
      %p608 = pnand %p606, %p607
      %p609 = pneg %p608
      // Predicated region
      $region89: #{tpu_custom_call.1} parent=5 // pred_check
        _
      $region90: #{tpu_custom_call.1} parent=5 // pred_check_branch
        %611 = sbr.rel (%p608) target = $region92
      $region91: #{tpu_custom_call.1} parent=5 // pred_region
        %s612 = ssub.s32 %s33, 1
        %s613 = sand.u32 %s65, 1
        %s614 = scalar_lea.sflag [#allocation8], %s613
        %s615 = sand.u32 %s65, 1
        %s616 = smul.addr %s615, 8
        %s617 = scalar_lea.vmem [#allocation7], %s616
        // Predicated region
        $region93: #{tpu_custom_call.1} parent=91 // pred_check
          %p618 = pneg %p78
        $region94: #{tpu_custom_call.1} parent=91 // pred_check_branch
          %620 = sbr.rel (%p618) target = $region96
        $region95: #{tpu_custom_call.1} parent=91 // pred_region
          %621 = dma.done %s614, 128
        $region96: #{tpu_custom_call.1} parent=91 // pred_fallthru
          _
        %s622 = sand.u32 %s93, 1
        %s623 = scalar_lea.sflag [#allocation11], %s622
        %s624 = sand.u32 %s93, 1
        %s625 = smul.addr %s624, 8
        %s626 = scalar_lea.vmem [#allocation10], %s625
        // Predicated region
        $region97: #{tpu_custom_call.1} parent=91 // pred_check
          %p627 = pneg %p106
        $region98: #{tpu_custom_call.1} parent=91 // pred_check_branch
          %629 = sbr.rel (%p627) target = $region100
        $region99: #{tpu_custom_call.1} parent=91 // pred_region
          %630 = dma.done %s623, 128
        $region100: #{tpu_custom_call.1} parent=91 // pred_fallthru
          _
        %s631 = sand.u32 %s65, 1
        %s632 = scalar_lea.sflag [#allocation8], %s631
        %s633 = sand.u32 %s65, 1
        %s634 = smul.addr %s633, 8
        %s635 = scalar_lea.vmem [#allocation7], %s634
        %p636 = pneg %p78
        %p637 = pneg %p75
        %s638 = sand.u32 %s93, 1
        %s639 = scalar_lea.sflag [#allocation11], %s638
        %s640 = sand.u32 %s93, 1
        %s641 = smul.addr %s640, 8
        %s642 = scalar_lea.vmem [#allocation10], %s641
        %p643 = pneg %p106
        %p644 = pneg %p103
        %p645 = pneg %p127
        %p646 = pneg %p124
        %p647 = pneg %p148
        %p648 = pneg %p145
        %p649 = pneg %p169
        %p650 = pneg %p166
        %p651 = pneg %p190
        %p652 = pneg %p187
        %p653 = pneg %p211
        %p654 = pneg %p208
        %p655 = pneg %p232
        %p656 = pneg %p229
        %p657 = pneg %p253
        %p658 = pneg %p250
        %p659 = pneg %p274
        %p660 = pneg %p271
        %p661 = pneg %p295
        %p662 = pneg %p292
        %p663 = pneg %p316
        %p664 = pneg %p313
        %s665 = smul.u32 2, %s45
        %p666 = scmp.lt.s32.totalorder %s665, 1
        %s667 = scalar_select %p666, %s665, 1
        %s668 = smul.addr %s667, 4
        %s669 = scalar_lea.vmem %s12, %s668
        %p670 = pneg %p342
        %p671 = pneg %p339
        %s672 = smul.u32 2, %s45
        %p673 = scmp.lt.s32.totalorder %s672, 1
        %s674 = scalar_select %p673, %s672, 1
        %s675 = scalar_lea.vmem %s13, %s674
        %p676 = pneg %p368
        %p677 = pneg %p365
        %s678 = smul.u32 32, %s45
        %p679 = scmp.lt.s32.totalorder %s678, 31
        %s680 = scalar_select %p679, %s678, 31
        %s681 = smul.addr %s680, 4
        %s682 = scalar_lea.vmem %s14, %s681
        %p683 = pneg %p394
        %p684 = pneg %p391
        %p685 = pneg %p415
        %p686 = pneg %p412
        %p687 = pneg %p436
        %p688 = pneg %p433
        %p689 = pneg %p457
        %p690 = pneg %p454
        %p691 = pneg %p485
        %p692 = pneg %p482
        %s693 = sand.u32 %s472, 1
        %s694 = scalar_lea.sflag [#allocation9], %s693
        %s695 = sand.u32 %s472, 1
        %s696 = smul.addr %s695, 8
        %s697 = scalar_lea.vmem [#allocation12], %s696
        %s698 = smul.u32 2, %s45
        %p699 = scmp.lt.s32.totalorder %s698, 1
        %s700 = scalar_select %p699, %s698, 1
        %s701 = smul.addr %s700, 4
        %s702 = scalar_lea.vmem %s12, %s701
        %s703 = smul.u32 2, %s45
        %s704 = smul.u32 2, %s45
        %p705 = scmp.lt.s32.totalorder %s704, 1
        %s706 = scalar_select %p705, %s704, 1
        %s707 = scalar_lea.vmem %s13, %s706
        %s708 = smul.u32 2, %s45
        %s709 = smul.u32 32, %s45
        %p710 = scmp.lt.s32.totalorder %s709, 31
        %s711 = scalar_select %p710, %s709, 31
        %s712 = smul.addr %s711, 4
        %s713 = scalar_lea.vmem %s14, %s712
        %s714 = smul.u32 32, %s45
        %p716 = scmp.eq.s32.totalorder %s44, 0
        %p717 = scmp.eq.s32.totalorder %s45, 0
        %p718 = pnand %p716, %p717
        %p719 = pneg %p718
        // Predicated region
        $region101: #{tpu_custom_call.1} parent=91 // pred_check
          _
        $region102: #{tpu_custom_call.1} parent=91 // pred_check_branch
          %721 = sbr.rel (%p718) target = $region104
        $region103: #{tpu_custom_call.1} parent=91 // pred_region
          %v722 = vld [vmem:[%s617] sm:$0xff]
          %v723 = vpack.c.bf16 %v722, %v722
          %v724 = vld [vmem:[%s4] sm:$0xf]
          %v725 = vld [vmem:[%s4 + $0x4] sm:$0xf]
          %v726 = vld [vmem:[%s4 + $0x8] sm:$0xf]
          %v727 = vld [vmem:[%s4 + $0xc] sm:$0xf]
          %v728 = vld [vmem:[%s4 + $0x10] sm:$0xf]
          %v729 = vld [vmem:[%s4 + $0x14] sm:$0xf]
          %v730 = vld [vmem:[%s4 + $0x18] sm:$0xf]
          %v731 = vld [vmem:[%s4 + $0x1c] sm:$0xf]
          %v732 = vld [vmem:[%s5] sm:$0x1]
          %v734 = vlaneseq
          %v735 = vshrl.u32 %v734, 7
          %v736 = vsub.s32 0, %v735
          %v737 = vrot.slane %v732, %v736
          %v747 = vunpack.c.l.b16 %v724
          %v748 = vunpack.c.l.b16 %v725
          %v749 = vunpack.c.l.b16 %v726
          %v750 = vunpack.c.l.b16 %v727
          %v751 = vunpack.c.l.b16 %v728
          %v752 = vunpack.c.l.b16 %v729
          %v753 = vunpack.c.l.b16 %v730
          %v754 = vunpack.c.l.b16 %v731
          %v755 = vpack.c.b16 %v748, %v747
          %v756 = vpack.c.b16 %v750, %v749
          %v757 = vpack.c.b16 %v752, %v751
          %v758 = vpack.c.b16 %v754, %v753
          %vm763 = vcmask 523264
          %v765 = vsel %vm763, %v723, 0
          %767 = vmatprep.subr.bf16.mxu0 0
          %768 = vmatpush1.bf16.msra.mxu0 %v755
          %769 = vmatprep.subr.bf16.mxu0 0
          %770 = vmatpush1.bf16.msra.mxu0 %v756
          %771 = vmatprep.subr.bf16.mxu0 0
          %772 = vmatpush1.bf16.msra.mxu0 %v757
          %773 = vmatprep.subr.bf16.mxu0 0
          %774 = vmatpush1.bf16.msra.mxu0 %v758
          %775 = vmatprep.subr.bf16.mxu0 0
          %776 = vmatpush1.bf16.msra.mxu0 0
          %777 = vmatprep.subr.bf16.mxu0 0
          %778 = vmatpush1.bf16.msra.mxu0 0
          %779 = vmatprep.subr.bf16.mxu0 0
          %780 = vmatpush1.bf16.msra.mxu0 0
          %781 = vmatprep.subr.bf16.mxu0 0
          %782 = vmatpush1.bf16.msra.mxu0 0
          %783 = vmatprep.subr.bf16.mxu0 0
          %784 = vmatpush1.bf16.msra.mxu0 0
          %785 = vmatprep.subr.bf16.mxu0 0
          %786 = vmatpush1.bf16.msra.mxu0 0
          %787 = vmatprep.subr.bf16.mxu0 0
          %788 = vmatpush1.bf16.msra.mxu0 0
          %789 = vmatprep.subr.bf16.mxu0 0
          %790 = vmatpush1.bf16.msra.mxu0 0
          %791 = vmatprep.subr.bf16.mxu0 0
          %792 = vmatpush1.bf16.msra.mxu0 0
          %793 = vmatprep.subr.bf16.mxu0 0
          %794 = vmatpush1.bf16.msra.mxu0 0
          %795 = vmatprep.subr.bf16.mxu0 0
          %796 = vmatpush1.bf16.msra.mxu0 0
          %797 = vmatprep.subr.bf16.mxu0 0
          %798 = vmatpush1.bf16.msra.mxu0 0
          %799 = vmatprep.mubr.bf16.mxu0 0
          %800 = vmatmul.mubr.bf16.gmra.mrb[0].mxu0 %v765
          %v801 = vpop.f32.mrb[0].mxu0
          %v802 = vadd.f32 %v737, %v801
          %v803 = vpop.f32.mrb[0].mxu0
          %v804 = vpop.f32.mrb[0].mxu0
          %v805 = vpop.f32.mrb[0].mxu0
          %806 = vdwg.mxu0
          %v807 = vld [vmem:[%s6] sm:$0xf]
          %v808 = vld [vmem:[%s6 + $0x4] sm:$0xf]
          %v809 = vld [vmem:[%s6 + $0x8] sm:$0xf]
          %v810 = vld [vmem:[%s6 + $0xc] sm:$0xf]
          %v811 = vld [vmem:[%s6 + $0x10] sm:$0xf]
          %v812 = vld [vmem:[%s6 + $0x14] sm:$0xf]
          %v813 = vld [vmem:[%s6 + $0x18] sm:$0xf]
          %v814 = vld [vmem:[%s6 + $0x1c] sm:$0xf]
          %v815 = vld [vmem:[%s7] sm:$0x1]
          %v817 = vlaneseq
          %v818 = vshrl.u32 %v817, 7
          %v819 = vsub.s32 0, %v818
          %v820 = vrot.slane %v815, %v819
          %v830 = vunpack.c.l.b16 %v807
          %v831 = vunpack.c.l.b16 %v808
          %v832 = vunpack.c.l.b16 %v809
          %v833 = vunpack.c.l.b16 %v810
          %v834 = vunpack.c.l.b16 %v811
          %v835 = vunpack.c.l.b16 %v812
          %v836 = vunpack.c.l.b16 %v813
          %v837 = vunpack.c.l.b16 %v814
          %v838 = vpack.c.b16 %v831, %v830
          %v839 = vpack.c.b16 %v833, %v832
          %v840 = vpack.c.b16 %v835, %v834
          %v841 = vpack.c.b16 %v837, %v836
          %846 = vmatprep.subr.bf16.mxu0 0
          %847 = vmatpush1.bf16.msra.mxu0 %v838
          %848 = vmatprep.subr.bf16.mxu0 0
          %849 = vmatpush1.bf16.msra.mxu0 %v839
          %850 = vmatprep.subr.bf16.mxu0 0
          %851 = vmatpush1.bf16.msra.mxu0 %v840
          %852 = vmatprep.subr.bf16.mxu0 0
          %853 = vmatpush1.bf16.msra.mxu0 %v841
          %854 = vmatprep.subr.bf16.mxu0 0
          %855 = vmatpush1.bf16.msra.mxu0 0
          %856 = vmatprep.subr.bf16.mxu0 0
          %857 = vmatpush1.bf16.msra.mxu0 0
          %858 = vmatprep.subr.bf16.mxu0 0
          %859 = vmatpush1.bf16.msra.mxu0 0
          %860 = vmatprep.subr.bf16.mxu0 0
          %861 = vmatpush1.bf16.msra.mxu0 0
          %862 = vmatprep.subr.bf16.mxu0 0
          %863 = vmatpush1.bf16.msra.mxu0 0
          %864 = vmatprep.subr.bf16.mxu0 0
          %865 = vmatpush1.bf16.msra.mxu0 0
          %866 = vmatprep.subr.bf16.mxu0 0
          %867 = vmatpush1.bf16.msra.mxu0 0
          %868 = vmatprep.subr.bf16.mxu0 0
          %869 = vmatpush1.bf16.msra.mxu0 0
          %870 = vmatprep.subr.bf16.mxu0 0
          %871 = vmatpush1.bf16.msra.mxu0 0
          %872 = vmatprep.subr.bf16.mxu0 0
          %873 = vmatpush1.bf16.msra.mxu0 0
          %874 = vmatprep.subr.bf16.mxu0 0
          %875 = vmatpush1.bf16.msra.mxu0 0
          %876 = vmatprep.subr.bf16.mxu0 0
          %877 = vmatpush1.bf16.msra.mxu0 0
          %878 = vmatprep.mubr.bf16.mxu0 0
          %879 = vmatmul.mubr.bf16.gmra.mrb[0].mxu0 %v765
          %v880 = vpop.f32.mrb[0].mxu0
          %v881 = vadd.f32 %v820, %v880
          %v882 = vpop.f32.mrb[0].mxu0
          %v883 = vpop.f32.mrb[0].mxu0
          %v884 = vpop.f32.mrb[0].mxu0
          %885 = vdwg.mxu0
          %v886 = vpack.c.bf16 %v802, %v802
          %vm887 = vcmask 519168
          %888 = vst.msk [vmem:[#allocation2] sm:$0xf] %vm887, %v886
          %v889 = vpack.c.bf16 %v881, %v881
          %890 = vst.msk [vmem:[#allocation3] sm:$0xf] %vm887, %v889
        $region104: #{tpu_custom_call.1} parent=91 // pred_fallthru
          _
        // Predicated region
        $region105: #{tpu_custom_call.1} parent=91 // pred_check
          %p891 = pneg %p717
        $region106: #{tpu_custom_call.1} parent=91 // pred_check_branch
          %893 = sbr.rel (%p891) target = $region108
        $region107: #{tpu_custom_call.1} parent=91 // pred_region
          %v894 = vld [vmem:[%s626] sm:$0xff]
          %v895 = vpack.c.bf16 %v894, %v894
          %v896 = vld [vmem:[%s2] sm:$0xf]
          %v897 = vld [vmem:[%s2 + $0x4] sm:$0xf]
          %v898 = vld [vmem:[%s2 + $0x8] sm:$0xf]
          %v899 = vld [vmem:[%s2 + $0xc] sm:$0xf]
          %v900 = vld [vmem:[%s2 + $0x10] sm:$0xf]
          %v901 = vld [vmem:[%s2 + $0x14] sm:$0xf]
          %v902 = vld [vmem:[%s2 + $0x18] sm:$0xf]
          %v903 = vld [vmem:[%s2 + $0x1c] sm:$0xf]
          %v904 = vld [vmem:[%s3] sm:$0x1]
          %v906 = vlaneseq
          %v907 = vshrl.u32 %v906, 7
          %v908 = vsub.s32 0, %v907
          %v909 = vrot.slane %v904, %v908
          %v919 = vunpack.c.l.b16 %v896
          %v920 = vunpack.c.l.b16 %v897
          %v921 = vunpack.c.l.b16 %v898
          %v922 = vunpack.c.l.b16 %v899
          %v923 = vunpack.c.l.b16 %v900
          %v924 = vunpack.c.l.b16 %v901
          %v925 = vunpack.c.l.b16 %v902
          %v926 = vunpack.c.l.b16 %v903
          %v927 = vpack.c.b16 %v920, %v919
          %v928 = vpack.c.b16 %v922, %v921
          %v929 = vpack.c.b16 %v924, %v923
          %v930 = vpack.c.b16 %v926, %v925
          %vm935 = vcmask 523264
          %v937 = vsel %vm935, %v895, 0
          %939 = vmatprep.subr.bf16.mxu0 0
          %940 = vmatpush1.bf16.msra.mxu0 %v927
          %941 = vmatprep.subr.bf16.mxu0 0
          %942 = vmatpush1.bf16.msra.mxu0 %v928
          %943 = vmatprep.subr.bf16.mxu0 0
          %944 = vmatpush1.bf16.msra.mxu0 %v929
          %945 = vmatprep.subr.bf16.mxu0 0
          %946 = vmatpush1.bf16.msra.mxu0 %v930
          %947 = vmatprep.subr.bf16.mxu0 0
          %948 = vmatpush1.bf16.msra.mxu0 0
          %949 = vmatprep.subr.bf16.mxu0 0
          %950 = vmatpush1.bf16.msra.mxu0 0
          %951 = vmatprep.subr.bf16.mxu0 0
          %952 = vmatpush1.bf16.msra.mxu0 0
          %953 = vmatprep.subr.bf16.mxu0 0
          %954 = vmatpush1.bf16.msra.mxu0 0
          %955 = vmatprep.subr.bf16.mxu0 0
          %956 = vmatpush1.bf16.msra.mxu0 0
          %957 = vmatprep.subr.bf16.mxu0 0
          %958 = vmatpush1.bf16.msra.mxu0 0
          %959 = vmatprep.subr.bf16.mxu0 0
          %960 = vmatpush1.bf16.msra.mxu0 0
          %961 = vmatprep.subr.bf16.mxu0 0
          %962 = vmatpush1.bf16.msra.mxu0 0
          %963 = vmatprep.subr.bf16.mxu0 0
          %964 = vmatpush1.bf16.msra.mxu0 0
          %965 = vmatprep.subr.bf16.mxu0 0
          %966 = vmatpush1.bf16.msra.mxu0 0
          %967 = vmatprep.subr.bf16.mxu0 0
          %968 = vmatpush1.bf16.msra.mxu0 0
          %969 = vmatprep.subr.bf16.mxu0 0
          %970 = vmatpush1.bf16.msra.mxu0 0
          %971 = vmatprep.mubr.bf16.mxu0 0
          %972 = vmatmul.mubr.bf16.gmra.mrb[0].mxu0 %v937
          %v973 = vpop.f32.mrb[0].mxu0
          %v974 = vadd.f32 %v909, %v973
          %v975 = vpop.f32.mrb[0].mxu0
          %v976 = vpop.f32.mrb[0].mxu0
          %v977 = vpop.f32.mrb[0].mxu0
          %978 = vdwg.mxu0
          %v979 = vmul.f32 %v974, 0.35355338
          %v980 = vpack.c.bf16 %v979, %v979
          %v981 = vld [vmem:[#allocation2] sm:$0xf]
          %v982 = vld [vmem:[#allocation3] sm:$0xf]
          %vm983 = vcmask 64512
          %v985 = vsel %vm983, %v980, 0
          %v988 = vsel %vm983, %v981, 0
          %990 = vmatprep.subr.bf16.mxu0 0
          %991 = vmatpush1.bf16.xpose.msra.mxu0 %v988
          %992 = vmatprep.subr.bf16.mxu0 0
          %993 = vmatpush1.bf16.xpose.msra.mxu0 0
          %994 = vmatprep.subr.bf16.mxu0 0
          %995 = vmatpush1.bf16.xpose.msra.mxu0 0
          %996 = vmatprep.subr.bf16.mxu0 0
          %997 = vmatpush1.bf16.xpose.msra.mxu0 0
          %998 = vmatprep.subr.bf16.mxu0 0
          %999 = vmatpush1.bf16.xpose.msra.mxu0 0
          %1000 = vmatprep.subr.bf16.mxu0 0
          %1001 = vmatpush1.bf16.xpose.msra.mxu0 0
          %1002 = vmatprep.subr.bf16.mxu0 0
          %1003 = vmatpush1.bf16.xpose.msra.mxu0 0
          %1004 = vmatprep.subr.bf16.mxu0 0
          %1005 = vmatpush1.bf16.xpose.msra.mxu0 0
          %1006 = vmatprep.subr.bf16.mxu0 0
          %1007 = vmatpush1.bf16.xpose.msra.mxu0 0
          %1008 = vmatprep.subr.bf16.mxu0 0
          %1009 = vmatpush1.bf16.xpose.msra.mxu0 0
          %1010 = vmatprep.subr.bf16.mxu0 0
          %1011 = vmatpush1.bf16.xpose.msra.mxu0 0
          %1012 = vmatprep.subr.bf16.mxu0 0
          %1013 = vmatpush1.bf16.xpose.msra.mxu0 0
          %1014 = vmatprep.subr.bf16.mxu0 0
          %1015 = vmatpush1.bf16.xpose.msra.mxu0 0
          %1016 = vmatprep.subr.bf16.mxu0 0
          %1017 = vmatpush1.bf16.xpose.msra.mxu0 0
          %1018 = vmatprep.subr.bf16.mxu0 0
          %1019 = vmatpush1.bf16.xpose.msra.mxu0 0
          %1020 = vmatprep.subr.bf16.mxu0 0
          %1021 = vmatpush1.bf16.xpose.msra.mxu0 0
          %1022 = vmatprep.mubr.bf16.mxu0 0
          %1023 = vmatmul.mubr.bf16.gmra.mrb[0].mxu0 %v985
          %v1024 = vpop.f32.mrb[0].mxu0
          %v1025 = vadd.f32 0.0, %v1024
          %v1026 = vpop.f32.mrb[0].mxu0
          %v1027 = vpop.f32.mrb[0].mxu0
          %v1028 = vpop.f32.mrb[0].mxu0
          %1029 = vdwg.mxu0
          %v1030 = vsel %vm983, %v1025, -inf
          %1031 = vmax.xlane.f32.xlu0 %v1030
          %v1032 = vpop.xlane.xlu0 %1031
          %v1033 = vsub.f32 %v1025, %v1032
          %v1034 = vmul.f32 %v1033, 1.442695
          %v1035 = vpow.pop %v1034
          %v1036 = vsel %vm983, %v1035, 0.0
          %1037 = vadd.xlane.f32.xlu0 %v1036
          %v1038 = vpop.xlane.xlu0 %1037
          %v1039 = vrcp.pop %v1038
          %v1040 = vmul.f32 %v1035, %v1039
          %v1041 = vpack.c.bf16 %v1040, %v1040
          %v1043 = vsel %vm983, %v1041, 0
          %vm1045 = vcmask 1043456
          %v1047 = vsel %vm1045, %v982, 0
          %1049 = vmatprep.subr.bf16.mxu0 0
          %1050 = vmatpush1.bf16.msra.mxu0 %v1047
          %1051 = vmatprep.subr.bf16.mxu0 0
          %1052 = vmatpush1.bf16.msra.mxu0 0
          %1053 = vmatprep.subr.bf16.mxu0 0
          %1054 = vmatpush1.bf16.msra.mxu0 0
          %1055 = vmatprep.subr.bf16.mxu0 0
          %1056 = vmatpush1.bf16.msra.mxu0 0
          %1057 = vmatprep.subr.bf16.mxu0 0
          %1058 = vmatpush1.bf16.msra.mxu0 0
          %1059 = vmatprep.subr.bf16.mxu0 0
          %1060 = vmatpush1.bf16.msra.mxu0 0
          %1061 = vmatprep.subr.bf16.mxu0 0
          %1062 = vmatpush1.bf16.msra.mxu0 0
          %1063 = vmatprep.subr.bf16.mxu0 0
          %1064 = vmatpush1.bf16.msra.mxu0 0
          %1065 = vmatprep.subr.bf16.mxu0 0
          %1066 = vmatpush1.bf16.msra.mxu0 0
          %1067 = vmatprep.subr.bf16.mxu0 0
          %1068 = vmatpush1.bf16.msra.mxu0 0
          %1069 = vmatprep.subr.bf16.mxu0 0
          %1070 = vmatpush1.bf16.msra.mxu0 0
          %1071 = vmatprep.subr.bf16.mxu0 0
          %1072 = vmatpush1.bf16.msra.mxu0 0
          %1073 = vmatprep.subr.bf16.mxu0 0
          %1074 = vmatpush1.bf16.msra.mxu0 0
          %1075 = vmatprep.subr.bf16.mxu0 0
          %1076 = vmatpush1.bf16.msra.mxu0 0
          %1077 = vmatprep.subr.bf16.mxu0 0
          %1078 = vmatpush1.bf16.msra.mxu0 0
          %1079 = vmatprep.subr.bf16.mxu0 0
          %1080 = vmatpush1.bf16.msra.mxu0 0
          %1081 = vmatprep.mubr.bf16.mxu0 0
          %1082 = vmatmul.mubr.bf16.gmra.mrb[0].mxu0 %v1043
          %v1083 = vpop.f32.mrb[0].mxu0
          %v1084 = vadd.f32 0.0, %v1083
          %v1085 = vpop.f32.mrb[0].mxu0
          %v1086 = vpop.f32.mrb[0].mxu0
          %v1087 = vpop.f32.mrb[0].mxu0
          %1088 = vdwg.mxu0
          %1089 = vst.msk [vmem:[#allocation4] sm:$0xff] %vm983, %v1084
          %1091 = vrot.lane.b32.xlu0 %v980, 120
          %v1092 = vpop.permute.xlu0 %1091
          %v1094 = vunpack.c.l.b16 %v981
          %v1095 = vpack.c.b16 %v1094, %v1094
          %1096 = vrot.lane.b32.xlu0 %v1095, 120
          %v1097 = vpop.permute.xlu0 %1096
          %v1099 = vsel %vm983, %v1092, 0
          %v1102 = vsel %vm983, %v1097, 0
          %1104 = vmatprep.subr.bf16.mxu0 0
          %1105 = vmatpush1.bf16.xpose.msra.mxu0 %v1102
          %1106 = vmatprep.subr.bf16.mxu0 0
          %1107 = vmatpush1.bf16.xpose.msra.mxu0 0
          %1108 = vmatprep.subr.bf16.mxu0 0
          %1109 = vmatpush1.bf16.xpose.msra.mxu0 0
          %1110 = vmatprep.subr.bf16.mxu0 0
          %1111 = vmatpush1.bf16.xpose.msra.mxu0 0
          %1112 = vmatprep.subr.bf16.mxu0 0
          %1113 = vmatpush1.bf16.xpose.msra.mxu0 0
          %1114 = vmatprep.subr.bf16.mxu0 0
          %1115 = vmatpush1.bf16.xpose.msra.mxu0 0
          %1116 = vmatprep.subr.bf16.mxu0 0
          %1117 = vmatpush1.bf16.xpose.msra.mxu0 0
          %1118 = vmatprep.subr.bf16.mxu0 0
          %1119 = vmatpush1.bf16.xpose.msra.mxu0 0
          %1120 = vmatprep.subr.bf16.mxu0 0
          %1121 = vmatpush1.bf16.xpose.msra.mxu0 0
          %1122 = vmatprep.subr.bf16.mxu0 0
          %1123 = vmatpush1.bf16.xpose.msra.mxu0 0
          %1124 = vmatprep.subr.bf16.mxu0 0
          %1125 = vmatpush1.bf16.xpose.msra.mxu0 0
          %1126 = vmatprep.subr.bf16.mxu0 0
          %1127 = vmatpush1.bf16.xpose.msra.mxu0 0
          %1128 = vmatprep.subr.bf16.mxu0 0
          %1129 = vmatpush1.bf16.xpose.msra.mxu0 0
          %1130 = vmatprep.subr.bf16.mxu0 0
          %1131 = vmatpush1.bf16.xpose.msra.mxu0 0
          %1132 = vmatprep.subr.bf16.mxu0 0
          %1133 = vmatpush1.bf16.xpose.msra.mxu0 0
          %1134 = vmatprep.subr.bf16.mxu0 0
          %1135 = vmatpush1.bf16.xpose.msra.mxu0 0
          %1136 = vmatprep.mubr.bf16.mxu0 0
          %1137 = vmatmul.mubr.bf16.gmra.mrb[0].mxu0 %v1099
          %v1138 = vpop.f32.mrb[0].mxu0
          %v1139 = vadd.f32 0.0, %v1138
          %v1140 = vpop.f32.mrb[0].mxu0
          %v1141 = vpop.f32.mrb[0].mxu0
          %v1142 = vpop.f32.mrb[0].mxu0
          %1143 = vdwg.mxu0
          %v1144 = vsel %vm983, %v1139, -inf
          %1145 = vmax.xlane.f32.xlu0 %v1144
          %v1146 = vpop.xlane.xlu0 %1145
          %v1147 = vsub.f32 %v1139, %v1146
          %v1148 = vmul.f32 %v1147, 1.442695
          %v1149 = vpow.pop %v1148
          %v1150 = vsel %vm983, %v1149, 0.0
          %1151 = vadd.xlane.f32.xlu0 %v1150
          %v1152 = vpop.xlane.xlu0 %1151
          %v1153 = vrcp.pop %v1152
          %v1154 = vmul.f32 %v1149, %v1153
          %v1155 = vpack.c.bf16 %v1154, %v1154
          %v1157 = vunpack.c.l.b16 %v982
          %v1158 = vpack.c.b16 %v1157, %v1157
          %1159 = vrot.lane.b32.xlu0 %v1158, 120
          %v1160 = vpop.permute.xlu0 %1159
          %v1162 = vsel %vm983, %v1155, 0
          %v1165 = vsel %vm1045, %v1160, 0
          %1167 = vmatprep.subr.bf16.mxu0 0
          %1168 = vmatpush1.bf16.msra.mxu0 %v1165
          %1169 = vmatprep.subr.bf16.mxu0 0
          %1170 = vmatpush1.bf16.msra.mxu0 0
          %1171 = vmatprep.subr.bf16.mxu0 0
          %1172 = vmatpush1.bf16.msra.mxu0 0
          %1173 = vmatprep.subr.bf16.mxu0 0
          %1174 = vmatpush1.bf16.msra.mxu0 0
          %1175 = vmatprep.subr.bf16.mxu0 0
          %1176 = vmatpush1.bf16.msra.mxu0 0
          %1177 = vmatprep.subr.bf16.mxu0 0
          %1178 = vmatpush1.bf16.msra.mxu0 0
          %1179 = vmatprep.subr.bf16.mxu0 0
          %1180 = vmatpush1.bf16.msra.mxu0 0
          %1181 = vmatprep.subr.bf16.mxu0 0
          %1182 = vmatpush1.bf16.msra.mxu0 0
          %1183 = vmatprep.subr.bf16.mxu0 0
          %1184 = vmatpush1.bf16.msra.mxu0 0
          %1185 = vmatprep.subr.bf16.mxu0 0
          %1186 = vmatpush1.bf16.msra.mxu0 0
          %1187 = vmatprep.subr.bf16.mxu0 0
          %1188 = vmatpush1.bf16.msra.mxu0 0
          %1189 = vmatprep.subr.bf16.mxu0 0
          %1190 = vmatpush1.bf16.msra.mxu0 0
          %1191 = vmatprep.subr.bf16.mxu0 0
          %1192 = vmatpush1.bf16.msra.mxu0 0
          %1193 = vmatprep.subr.bf16.mxu0 0
          %1194 = vmatpush1.bf16.msra.mxu0 0
          %1195 = vmatprep.subr.bf16.mxu0 0
          %1196 = vmatpush1.bf16.msra.mxu0 0
          %1197 = vmatprep.subr.bf16.mxu0 0
          %1198 = vmatpush1.bf16.msra.mxu0 0
          %1199 = vmatprep.mubr.bf16.mxu0 0
          %1200 = vmatmul.mubr.bf16.gmra.mrb[0].mxu0 %v1162
          %v1201 = vpop.f32.mrb[0].mxu0
          %v1202 = vadd.f32 0.0, %v1201
          %v1203 = vpop.f32.mrb[0].mxu0
          %v1204 = vpop.f32.mrb[0].mxu0
          %v1205 = vpop.f32.mrb[0].mxu0
          %1206 = vdwg.mxu0
          %1208 = vrot.lane.b32.xlu0 %v1202, 8
          %v1209 = vpop.permute.xlu0 %1208
          %vm1211 = vcmask 130112
          %1212 = vst.msk [vmem:[#allocation4] sm:$0xff] %vm1211, %v1209
          %1213 = vrot.lane.b32.xlu0 %v980, 112
          %v1214 = vpop.permute.xlu0 %1213
          %1215 = vrot.lane.b32.xlu0 %v1095, 112
          %v1216 = vpop.permute.xlu0 %1215
          %v1218 = vsel %vm983, %v1214, 0
          %v1221 = vsel %vm983, %v1216, 0
          %1223 = vmatprep.subr.bf16.mxu0 0
          %1224 = vmatpush1.bf16.xpose.msra.mxu0 %v1221
          %1225 = vmatprep.subr.bf16.mxu0 0
          %1226 = vmatpush1.bf16.xpose.msra.mxu0 0
          %1227 = vmatprep.subr.bf16.mxu0 0
          %1228 = vmatpush1.bf16.xpose.msra.mxu0 0
          %1229 = vmatprep.subr.bf16.mxu0 0
          %1230 = vmatpush1.bf16.xpose.msra.mxu0 0
          %1231 = vmatprep.subr.bf16.mxu0 0
          %1232 = vmatpush1.bf16.xpose.msra.mxu0 0
          %1233 = vmatprep.subr.bf16.mxu0 0
          %1234 = vmatpush1.bf16.xpose.msra.mxu0 0
          %1235 = vmatprep.subr.bf16.mxu0 0
          %1236 = vmatpush1.bf16.xpose.msra.mxu0 0
          %1237 = vmatprep.subr.bf16.mxu0 0
          %1238 = vmatpush1.bf16.xpose.msra.mxu0 0
          %1239 = vmatprep.subr.bf16.mxu0 0
          %1240 = vmatpush1.bf16.xpose.msra.mxu0 0
          %1241 = vmatprep.subr.bf16.mxu0 0
          %1242 = vmatpush1.bf16.xpose.msra.mxu0 0
          %1243 = vmatprep.subr.bf16.mxu0 0
          %1244 = vmatpush1.bf16.xpose.msra.mxu0 0
          %1245 = vmatprep.subr.bf16.mxu0 0
          %1246 = vmatpush1.bf16.xpose.msra.mxu0 0
          %1247 = vmatprep.subr.bf16.mxu0 0
          %1248 = vmatpush1.bf16.xpose.msra.mxu0 0
          %1249 = vmatprep.subr.bf16.mxu0 0
          %1250 = vmatpush1.bf16.xpose.msra.mxu0 0
          %1251 = vmatprep.subr.bf16.mxu0 0
          %1252 = vmatpush1.bf16.xpose.msra.mxu0 0
          %1253 = vmatprep.subr.bf16.mxu0 0
          %1254 = vmatpush1.bf16.xpose.msra.mxu0 0
          %1255 = vmatprep.mubr.bf16.mxu0 0
          %1256 = vmatmul.mubr.bf16.gmra.mrb[0].mxu0 %v1218
          %v1257 = vpop.f32.mrb[0].mxu0
          %v1258 = vadd.f32 0.0, %v1257
          %v1259 = vpop.f32.mrb[0].mxu0
          %v1260 = vpop.f32.mrb[0].mxu0
          %v1261 = vpop.f32.mrb[0].mxu0
          %1262 = vdwg.mxu0
          %v1263 = vsel %vm983, %v1258, -inf
          %1264 = vmax.xlane.f32.xlu0 %v1263
          %v1265 = vpop.xlane.xlu0 %1264
          %v1266 = vsub.f32 %v1258, %v1265
          %v1267 = vmul.f32 %v1266, 1.442695
          %v1268 = vpow.pop %v1267
          %v1269 = vsel %vm983, %v1268, 0.0
          %1270 = vadd.xlane.f32.xlu0 %v1269
          %v1271 = vpop.xlane.xlu0 %1270
          %v1272 = vrcp.pop %v1271
          %v1273 = vmul.f32 %v1268, %v1272
          %v1274 = vpack.c.bf16 %v1273, %v1273
          %1275 = vrot.lane.b32.xlu0 %v1158, 112
          %v1276 = vpop.permute.xlu0 %1275
          %v1278 = vsel %vm983, %v1274, 0
          %v1281 = vsel %vm1045, %v1276, 0
          %1283 = vmatprep.subr.bf16.mxu0 0
          %1284 = vmatpush1.bf16.msra.mxu0 %v1281
          %1285 = vmatprep.subr.bf16.mxu0 0
          %1286 = vmatpush1.bf16.msra.mxu0 0
          %1287 = vmatprep.subr.bf16.mxu0 0
          %1288 = vmatpush1.bf16.msra.mxu0 0
          %1289 = vmatprep.subr.bf16.mxu0 0
          %1290 = vmatpush1.bf16.msra.mxu0 0
          %1291 = vmatprep.subr.bf16.mxu0 0
          %1292 = vmatpush1.bf16.msra.mxu0 0
          %1293 = vmatprep.subr.bf16.mxu0 0
          %1294 = vmatpush1.bf16.msra.mxu0 0
          %1295 = vmatprep.subr.bf16.mxu0 0
          %1296 = vmatpush1.bf16.msra.mxu0 0
          %1297 = vmatprep.subr.bf16.mxu0 0
          %1298 = vmatpush1.bf16.msra.mxu0 0
          %1299 = vmatprep.subr.bf16.mxu0 0
          %1300 = vmatpush1.bf16.msra.mxu0 0
          %1301 = vmatprep.subr.bf16.mxu0 0
          %1302 = vmatpush1.bf16.msra.mxu0 0
          %1303 = vmatprep.subr.bf16.mxu0 0
          %1304 = vmatpush1.bf16.msra.mxu0 0
          %1305 = vmatprep.subr.bf16.mxu0 0
          %1306 = vmatpush1.bf16.msra.mxu0 0
          %1307 = vmatprep.subr.bf16.mxu0 0
          %1308 = vmatpush1.bf16.msra.mxu0 0
          %1309 = vmatprep.subr.bf16.mxu0 0
          %1310 = vmatpush1.bf16.msra.mxu0 0
          %1311 = vmatprep.subr.bf16.mxu0 0
          %1312 = vmatpush1.bf16.msra.mxu0 0
          %1313 = vmatprep.subr.bf16.mxu0 0
          %1314 = vmatpush1.bf16.msra.mxu0 0
          %1315 = vmatprep.mubr.bf16.mxu0 0
          %1316 = vmatmul.mubr.bf16.gmra.mrb[0].mxu0 %v1278
          %v1317 = vpop.f32.mrb[0].mxu0
          %v1318 = vadd.f32 0.0, %v1317
          %v1319 = vpop.f32.mrb[0].mxu0
          %v1320 = vpop.f32.mrb[0].mxu0
          %v1321 = vpop.f32.mrb[0].mxu0
          %1322 = vdwg.mxu0
          %1324 = vrot.lane.b32.xlu0 %v1318, 16
          %v1325 = vpop.permute.xlu0 %1324
          %vm1327 = vcmask 195712
          %1328 = vst.msk [vmem:[#allocation4] sm:$0xff] %vm1327, %v1325
          %1329 = vrot.lane.b32.xlu0 %v980, 104
          %v1330 = vpop.permute.xlu0 %1329
          %1331 = vrot.lane.b32.xlu0 %v1095, 104
          %v1332 = vpop.permute.xlu0 %1331
          %v1334 = vsel %vm983, %v1330, 0
          %v1337 = vsel %vm983, %v1332, 0
          %1339 = vmatprep.subr.bf16.mxu0 0
          %1340 = vmatpush1.bf16.xpose.msra.mxu0 %v1337
          %1341 = vmatprep.subr.bf16.mxu0 0
          %1342 = vmatpush1.bf16.xpose.msra.mxu0 0
          %1343 = vmatprep.subr.bf16.mxu0 0
          %1344 = vmatpush1.bf16.xpose.msra.mxu0 0
          %1345 = vmatprep.subr.bf16.mxu0 0
          %1346 = vmatpush1.bf16.xpose.msra.mxu0 0
          %1347 = vmatprep.subr.bf16.mxu0 0
          %1348 = vmatpush1.bf16.xpose.msra.mxu0 0
          %1349 = vmatprep.subr.bf16.mxu0 0
          %1350 = vmatpush1.bf16.xpose.msra.mxu0 0
          %1351 = vmatprep.subr.bf16.mxu0 0
          %1352 = vmatpush1.bf16.xpose.msra.mxu0 0
          %1353 = vmatprep.subr.bf16.mxu0 0
          %1354 = vmatpush1.bf16.xpose.msra.mxu0 0
          %1355 = vmatprep.subr.bf16.mxu0 0
          %1356 = vmatpush1.bf16.xpose.msra.mxu0 0
          %1357 = vmatprep.subr.bf16.mxu0 0
          %1358 = vmatpush1.bf16.xpose.msra.mxu0 0
          %1359 = vmatprep.subr.bf16.mxu0 0
          %1360 = vmatpush1.bf16.xpose.msra.mxu0 0
          %1361 = vmatprep.subr.bf16.mxu0 0
          %1362 = vmatpush1.bf16.xpose.msra.mxu0 0
          %1363 = vmatprep.subr.bf16.mxu0 0
          %1364 = vmatpush1.bf16.xpose.msra.mxu0 0
          %1365 = vmatprep.subr.bf16.mxu0 0
          %1366 = vmatpush1.bf16.xpose.msra.mxu0 0
          %1367 = vmatprep.subr.bf16.mxu0 0
          %1368 = vmatpush1.bf16.xpose.msra.mxu0 0
          %1369 = vmatprep.subr.bf16.mxu0 0
          %1370 = vmatpush1.bf16.xpose.msra.mxu0 0
          %1371 = vmatprep.mubr.bf16.mxu0 0
          %1372 = vmatmul.mubr.bf16.gmra.mrb[0].mxu0 %v1334
          %v1373 = vpop.f32.mrb[0].mxu0
          %v1374 = vadd.f32 0.0, %v1373
          %v1375 = vpop.f32.mrb[0].mxu0
          %v1376 = vpop.f32.mrb[0].mxu0
          %v1377 = vpop.f32.mrb[0].mxu0
          %1378 = vdwg.mxu0
          %v1379 = vsel %vm983, %v1374, -inf
          %1380 = vmax.xlane.f32.xlu0 %v1379
          %v1381 = vpop.xlane.xlu0 %1380
          %v1382 = vsub.f32 %v1374, %v1381
          %v1383 = vmul.f32 %v1382, 1.442695
          %v1384 = vpow.pop %v1383
          %v1385 = vsel %vm983, %v1384, 0.0
          %1386 = vadd.xlane.f32.xlu0 %v1385
          %v1387 = vpop.xlane.xlu0 %1386
          %v1388 = vrcp.pop %v1387
          %v1389 = vmul.f32 %v1384, %v1388
          %v1390 = vpack.c.bf16 %v1389, %v1389
          %1391 = vrot.lane.b32.xlu0 %v1158, 104
          %v1392 = vpop.permute.xlu0 %1391
          %v1394 = vsel %vm983, %v1390, 0
          %v1397 = vsel %vm1045, %v1392, 0
          %1399 = vmatprep.subr.bf16.mxu0 0
          %1400 = vmatpush1.bf16.msra.mxu0 %v1397
          %1401 = vmatprep.subr.bf16.mxu0 0
          %1402 = vmatpush1.bf16.msra.mxu0 0
          %1403 = vmatprep.subr.bf16.mxu0 0
          %1404 = vmatpush1.bf16.msra.mxu0 0
          %1405 = vmatprep.subr.bf16.mxu0 0
          %1406 = vmatpush1.bf16.msra.mxu0 0
          %1407 = vmatprep.subr.bf16.mxu0 0
          %1408 = vmatpush1.bf16.msra.mxu0 0
          %1409 = vmatprep.subr.bf16.mxu0 0
          %1410 = vmatpush1.bf16.msra.mxu0 0
          %1411 = vmatprep.subr.bf16.mxu0 0
          %1412 = vmatpush1.bf16.msra.mxu0 0
          %1413 = vmatprep.subr.bf16.mxu0 0
          %1414 = vmatpush1.bf16.msra.mxu0 0
          %1415 = vmatprep.subr.bf16.mxu0 0
          %1416 = vmatpush1.bf16.msra.mxu0 0
          %1417 = vmatprep.subr.bf16.mxu0 0
          %1418 = vmatpush1.bf16.msra.mxu0 0
          %1419 = vmatprep.subr.bf16.mxu0 0
          %1420 = vmatpush1.bf16.msra.mxu0 0
          %1421 = vmatprep.subr.bf16.mxu0 0
          %1422 = vmatpush1.bf16.msra.mxu0 0
          %1423 = vmatprep.subr.bf16.mxu0 0
          %1424 = vmatpush1.bf16.msra.mxu0 0
          %1425 = vmatprep.subr.bf16.mxu0 0
          %1426 = vmatpush1.bf16.msra.mxu0 0
          %1427 = vmatprep.subr.bf16.mxu0 0
          %1428 = vmatpush1.bf16.msra.mxu0 0
          %1429 = vmatprep.subr.bf16.mxu0 0
          %1430 = vmatpush1.bf16.msra.mxu0 0
          %1431 = vmatprep.mubr.bf16.mxu0 0
          %1432 = vmatmul.mubr.bf16.gmra.mrb[0].mxu0 %v1394
          %v1433 = vpop.f32.mrb[0].mxu0
          %v1434 = vadd.f32 0.0, %v1433
          %v1435 = vpop.f32.mrb[0].mxu0
          %v1436 = vpop.f32.mrb[0].mxu0
          %v1437 = vpop.f32.mrb[0].mxu0
          %1438 = vdwg.mxu0
          %1440 = vrot.lane.b32.xlu0 %v1434, 24
          %v1441 = vpop.permute.xlu0 %1440
          %vm1443 = vcmask 261312
          %1444 = vst.msk [vmem:[#allocation4] sm:$0xff] %vm1443, %v1441
          %1445 = vrot.lane.b32.xlu0 %v980, 96
          %v1446 = vpop.permute.xlu0 %1445
          %1447 = vrot.lane.b32.xlu0 %v1095, 96
          %v1448 = vpop.permute.xlu0 %1447
          %v1450 = vsel %vm983, %v1446, 0
          %v1453 = vsel %vm983, %v1448, 0
          %1455 = vmatprep.subr.bf16.mxu0 0
          %1456 = vmatpush1.bf16.xpose.msra.mxu0 %v1453
          %1457 = vmatprep.subr.bf16.mxu0 0
          %1458 = vmatpush1.bf16.xpose.msra.mxu0 0
          %1459 = vmatprep.subr.bf16.mxu0 0
          %1460 = vmatpush1.bf16.xpose.msra.mxu0 0
          %1461 = vmatprep.subr.bf16.mxu0 0
          %1462 = vmatpush1.bf16.xpose.msra.mxu0 0
          %1463 = vmatprep.subr.bf16.mxu0 0
          %1464 = vmatpush1.bf16.xpose.msra.mxu0 0
          %1465 = vmatprep.subr.bf16.mxu0 0
          %1466 = vmatpush1.bf16.xpose.msra.mxu0 0
          %1467 = vmatprep.subr.bf16.mxu0 0
          %1468 = vmatpush1.bf16.xpose.msra.mxu0 0
          %1469 = vmatprep.subr.bf16.mxu0 0
          %1470 = vmatpush1.bf16.xpose.msra.mxu0 0
          %1471 = vmatprep.subr.bf16.mxu0 0
          %1472 = vmatpush1.bf16.xpose.msra.mxu0 0
          %1473 = vmatprep.subr.bf16.mxu0 0
          %1474 = vmatpush1.bf16.xpose.msra.mxu0 0
          %1475 = vmatprep.subr.bf16.mxu0 0
          %1476 = vmatpush1.bf16.xpose.msra.mxu0 0
          %1477 = vmatprep.subr.bf16.mxu0 0
          %1478 = vmatpush1.bf16.xpose.msra.mxu0 0
          %1479 = vmatprep.subr.bf16.mxu0 0
          %1480 = vmatpush1.bf16.xpose.msra.mxu0 0
          %1481 = vmatprep.subr.bf16.mxu0 0
          %1482 = vmatpush1.bf16.xpose.msra.mxu0 0
          %1483 = vmatprep.subr.bf16.mxu0 0
          %1484 = vmatpush1.bf16.xpose.msra.mxu0 0
          %1485 = vmatprep.subr.bf16.mxu0 0
          %1486 = vmatpush1.bf16.xpose.msra.mxu0 0
          %1487 = vmatprep.mubr.bf16.mxu0 0
          %1488 = vmatmul.mubr.bf16.gmra.mrb[0].mxu0 %v1450
          %v1489 = vpop.f32.mrb[0].mxu0
          %v1490 = vadd.f32 0.0, %v1489
          %v1491 = vpop.f32.mrb[0].mxu0
          %v1492 = vpop.f32.mrb[0].mxu0
          %v1493 = vpop.f32.mrb[0].mxu0
          %1494 = vdwg.mxu0
          %v1495 = vsel %vm983, %v1490, -inf
          %1496 = vmax.xlane.f32.xlu0 %v1495
          %v1497 = vpop.xlane.xlu0 %1496
          %v1498 = vsub.f32 %v1490, %v1497
          %v1499 = vmul.f32 %v1498, 1.442695
          %v1500 = vpow.pop %v1499
          %v1501 = vsel %vm983, %v1500, 0.0
          %1502 = vadd.xlane.f32.xlu0 %v1501
          %v1503 = vpop.xlane.xlu0 %1502
          %v1504 = vrcp.pop %v1503
          %v1505 = vmul.f32 %v1500, %v1504
          %v1506 = vpack.c.bf16 %v1505, %v1505
          %1507 = vrot.lane.b32.xlu0 %v1158, 96
          %v1508 = vpop.permute.xlu0 %1507
          %v1510 = vsel %vm983, %v1506, 0
          %v1513 = vsel %vm1045, %v1508, 0
          %1515 = vmatprep.subr.bf16.mxu0 0
          %1516 = vmatpush1.bf16.msra.mxu0 %v1513
          %1517 = vmatprep.subr.bf16.mxu0 0
          %1518 = vmatpush1.bf16.msra.mxu0 0
          %1519 = vmatprep.subr.bf16.mxu0 0
          %1520 = vmatpush1.bf16.msra.mxu0 0
          %1521 = vmatprep.subr.bf16.mxu0 0
          %1522 = vmatpush1.bf16.msra.mxu0 0
          %1523 = vmatprep.subr.bf16.mxu0 0
          %1524 = vmatpush1.bf16.msra.mxu0 0
          %1525 = vmatprep.subr.bf16.mxu0 0
          %1526 = vmatpush1.bf16.msra.mxu0 0
          %1527 = vmatprep.subr.bf16.mxu0 0
          %1528 = vmatpush1.bf16.msra.mxu0 0
          %1529 = vmatprep.subr.bf16.mxu0 0
          %1530 = vmatpush1.bf16.msra.mxu0 0
          %1531 = vmatprep.subr.bf16.mxu0 0
          %1532 = vmatpush1.bf16.msra.mxu0 0
          %1533 = vmatprep.subr.bf16.mxu0 0
          %1534 = vmatpush1.bf16.msra.mxu0 0
          %1535 = vmatprep.subr.bf16.mxu0 0
          %1536 = vmatpush1.bf16.msra.mxu0 0
          %1537 = vmatprep.subr.bf16.mxu0 0
          %1538 = vmatpush1.bf16.msra.mxu0 0
          %1539 = vmatprep.subr.bf16.mxu0 0
          %1540 = vmatpush1.bf16.msra.mxu0 0
          %1541 = vmatprep.subr.bf16.mxu0 0
          %1542 = vmatpush1.bf16.msra.mxu0 0
          %1543 = vmatprep.subr.bf16.mxu0 0
          %1544 = vmatpush1.bf16.msra.mxu0 0
          %1545 = vmatprep.subr.bf16.mxu0 0
          %1546 = vmatpush1.bf16.msra.mxu0 0
          %1547 = vmatprep.mubr.bf16.mxu0 0
          %1548 = vmatmul.mubr.bf16.gmra.mrb[0].mxu0 %v1510
          %v1549 = vpop.f32.mrb[0].mxu0
          %v1550 = vadd.f32 0.0, %v1549
          %v1551 = vpop.f32.mrb[0].mxu0
          %v1552 = vpop.f32.mrb[0].mxu0
          %v1553 = vpop.f32.mrb[0].mxu0
          %1554 = vdwg.mxu0
          %1556 = vrot.lane.b32.xlu0 %v1550, 32
          %v1557 = vpop.permute.xlu0 %1556
          %vm1559 = vcmask 326912
          %1560 = vst.msk [vmem:[#allocation4] sm:$0xff] %vm1559, %v1557
          %1561 = vrot.lane.b32.xlu0 %v980, 88
          %v1562 = vpop.permute.xlu0 %1561
          %1563 = vrot.lane.b32.xlu0 %v1095, 88
          %v1564 = vpop.permute.xlu0 %1563
          %v1566 = vsel %vm983, %v1562, 0
          %v1569 = vsel %vm983, %v1564, 0
          %1571 = vmatprep.subr.bf16.mxu0 0
          %1572 = vmatpush1.bf16.xpose.msra.mxu0 %v1569
          %1573 = vmatprep.subr.bf16.mxu0 0
          %1574 = vmatpush1.bf16.xpose.msra.mxu0 0
          %1575 = vmatprep.subr.bf16.mxu0 0
          %1576 = vmatpush1.bf16.xpose.msra.mxu0 0
          %1577 = vmatprep.subr.bf16.mxu0 0
          %1578 = vmatpush1.bf16.xpose.msra.mxu0 0
          %1579 = vmatprep.subr.bf16.mxu0 0
          %1580 = vmatpush1.bf16.xpose.msra.mxu0 0
          %1581 = vmatprep.subr.bf16.mxu0 0
          %1582 = vmatpush1.bf16.xpose.msra.mxu0 0
          %1583 = vmatprep.subr.bf16.mxu0 0
          %1584 = vmatpush1.bf16.xpose.msra.mxu0 0
          %1585 = vmatprep.subr.bf16.mxu0 0
          %1586 = vmatpush1.bf16.xpose.msra.mxu0 0
          %1587 = vmatprep.subr.bf16.mxu0 0
          %1588 = vmatpush1.bf16.xpose.msra.mxu0 0
          %1589 = vmatprep.subr.bf16.mxu0 0
          %1590 = vmatpush1.bf16.xpose.msra.mxu0 0
          %1591 = vmatprep.subr.bf16.mxu0 0
          %1592 = vmatpush1.bf16.xpose.msra.mxu0 0
          %1593 = vmatprep.subr.bf16.mxu0 0
          %1594 = vmatpush1.bf16.xpose.msra.mxu0 0
          %1595 = vmatprep.subr.bf16.mxu0 0
          %1596 = vmatpush1.bf16.xpose.msra.mxu0 0
          %1597 = vmatprep.subr.bf16.mxu0 0
          %1598 = vmatpush1.bf16.xpose.msra.mxu0 0
          %1599 = vmatprep.subr.bf16.mxu0 0
          %1600 = vmatpush1.bf16.xpose.msra.mxu0 0
          %1601 = vmatprep.subr.bf16.mxu0 0
          %1602 = vmatpush1.bf16.xpose.msra.mxu0 0
          %1603 = vmatprep.mubr.bf16.mxu0 0
          %1604 = vmatmul.mubr.bf16.gmra.mrb[0].mxu0 %v1566
          %v1605 = vpop.f32.mrb[0].mxu0
          %v1606 = vadd.f32 0.0, %v1605
          %v1607 = vpop.f32.mrb[0].mxu0
          %v1608 = vpop.f32.mrb[0].mxu0
          %v1609 = vpop.f32.mrb[0].mxu0
          %1610 = vdwg.mxu0
          %v1611 = vsel %vm983, %v1606, -inf
          %1612 = vmax.xlane.f32.xlu0 %v1611
          %v1613 = vpop.xlane.xlu0 %1612
          %v1614 = vsub.f32 %v1606, %v1613
          %v1615 = vmul.f32 %v1614, 1.442695
          %v1616 = vpow.pop %v1615
          %v1617 = vsel %vm983, %v1616, 0.0
          %1618 = vadd.xlane.f32.xlu0 %v1617
          %v1619 = vpop.xlane.xlu0 %1618
          %v1620 = vrcp.pop %v1619
          %v1621 = vmul.f32 %v1616, %v1620
          %v1622 = vpack.c.bf16 %v1621, %v1621
          %1623 = vrot.lane.b32.xlu0 %v1158, 88
          %v1624 = vpop.permute.xlu0 %1623
          %v1626 = vsel %vm983, %v1622, 0
          %v1629 = vsel %vm1045, %v1624, 0
          %1631 = vmatprep.subr.bf16.mxu0 0
          %1632 = vmatpush1.bf16.msra.mxu0 %v1629
          %1633 = vmatprep.subr.bf16.mxu0 0
          %1634 = vmatpush1.bf16.msra.mxu0 0
          %1635 = vmatprep.subr.bf16.mxu0 0
          %1636 = vmatpush1.bf16.msra.mxu0 0
          %1637 = vmatprep.subr.bf16.mxu0 0
          %1638 = vmatpush1.bf16.msra.mxu0 0
          %1639 = vmatprep.subr.bf16.mxu0 0
          %1640 = vmatpush1.bf16.msra.mxu0 0
          %1641 = vmatprep.subr.bf16.mxu0 0
          %1642 = vmatpush1.bf16.msra.mxu0 0
          %1643 = vmatprep.subr.bf16.mxu0 0
          %1644 = vmatpush1.bf16.msra.mxu0 0
          %1645 = vmatprep.subr.bf16.mxu0 0
          %1646 = vmatpush1.bf16.msra.mxu0 0
          %1647 = vmatprep.subr.bf16.mxu0 0
          %1648 = vmatpush1.bf16.msra.mxu0 0
          %1649 = vmatprep.subr.bf16.mxu0 0
          %1650 = vmatpush1.bf16.msra.mxu0 0
          %1651 = vmatprep.subr.bf16.mxu0 0
          %1652 = vmatpush1.bf16.msra.mxu0 0
          %1653 = vmatprep.subr.bf16.mxu0 0
          %1654 = vmatpush1.bf16.msra.mxu0 0
          %1655 = vmatprep.subr.bf16.mxu0 0
          %1656 = vmatpush1.bf16.msra.mxu0 0
          %1657 = vmatprep.subr.bf16.mxu0 0
          %1658 = vmatpush1.bf16.msra.mxu0 0
          %1659 = vmatprep.subr.bf16.mxu0 0
          %1660 = vmatpush1.bf16.msra.mxu0 0
          %1661 = vmatprep.subr.bf16.mxu0 0
          %1662 = vmatpush1.bf16.msra.mxu0 0
          %1663 = vmatprep.mubr.bf16.mxu0 0
          %1664 = vmatmul.mubr.bf16.gmra.mrb[0].mxu0 %v1626
          %v1665 = vpop.f32.mrb[0].mxu0
          %v1666 = vadd.f32 0.0, %v1665
          %v1667 = vpop.f32.mrb[0].mxu0
          %v1668 = vpop.f32.mrb[0].mxu0
          %v1669 = vpop.f32.mrb[0].mxu0
          %1670 = vdwg.mxu0
          %1672 = vrot.lane.b32.xlu0 %v1666, 40
          %v1673 = vpop.permute.xlu0 %1672
          %vm1675 = vcmask 392512
          %1676 = vst.msk [vmem:[#allocation4] sm:$0xff] %vm1675, %v1673
          %1677 = vrot.lane.b32.xlu0 %v980, 80
          %v1678 = vpop.permute.xlu0 %1677
          %1679 = vrot.lane.b32.xlu0 %v1095, 80
          %v1680 = vpop.permute.xlu0 %1679
          %v1682 = vsel %vm983, %v1678, 0
          %v1685 = vsel %vm983, %v1680, 0
          %1687 = vmatprep.subr.bf16.mxu0 0
          %1688 = vmatpush1.bf16.xpose.msra.mxu0 %v1685
          %1689 = vmatprep.subr.bf16.mxu0 0
          %1690 = vmatpush1.bf16.xpose.msra.mxu0 0
          %1691 = vmatprep.subr.bf16.mxu0 0
          %1692 = vmatpush1.bf16.xpose.msra.mxu0 0
          %1693 = vmatprep.subr.bf16.mxu0 0
          %1694 = vmatpush1.bf16.xpose.msra.mxu0 0
          %1695 = vmatprep.subr.bf16.mxu0 0
          %1696 = vmatpush1.bf16.xpose.msra.mxu0 0
          %1697 = vmatprep.subr.bf16.mxu0 0
          %1698 = vmatpush1.bf16.xpose.msra.mxu0 0
          %1699 = vmatprep.subr.bf16.mxu0 0
          %1700 = vmatpush1.bf16.xpose.msra.mxu0 0
          %1701 = vmatprep.subr.bf16.mxu0 0
          %1702 = vmatpush1.bf16.xpose.msra.mxu0 0
          %1703 = vmatprep.subr.bf16.mxu0 0
          %1704 = vmatpush1.bf16.xpose.msra.mxu0 0
          %1705 = vmatprep.subr.bf16.mxu0 0
          %1706 = vmatpush1.bf16.xpose.msra.mxu0 0
          %1707 = vmatprep.subr.bf16.mxu0 0
          %1708 = vmatpush1.bf16.xpose.msra.mxu0 0
          %1709 = vmatprep.subr.bf16.mxu0 0
          %1710 = vmatpush1.bf16.xpose.msra.mxu0 0
          %1711 = vmatprep.subr.bf16.mxu0 0
          %1712 = vmatpush1.bf16.xpose.msra.mxu0 0
          %1713 = vmatprep.subr.bf16.mxu0 0
          %1714 = vmatpush1.bf16.xpose.msra.mxu0 0
          %1715 = vmatprep.subr.bf16.mxu0 0
          %1716 = vmatpush1.bf16.xpose.msra.mxu0 0
          %1717 = vmatprep.subr.bf16.mxu0 0
          %1718 = vmatpush1.bf16.xpose.msra.mxu0 0
          %1719 = vmatprep.mubr.bf16.mxu0 0
          %1720 = vmatmul.mubr.bf16.gmra.mrb[0].mxu0 %v1682
          %v1721 = vpop.f32.mrb[0].mxu0
          %v1722 = vadd.f32 0.0, %v1721
          %v1723 = vpop.f32.mrb[0].mxu0
          %v1724 = vpop.f32.mrb[0].mxu0
          %v1725 = vpop.f32.mrb[0].mxu0
          %1726 = vdwg.mxu0
          %v1727 = vsel %vm983, %v1722, -inf
          %1728 = vmax.xlane.f32.xlu0 %v1727
          %v1729 = vpop.xlane.xlu0 %1728
          %v1730 = vsub.f32 %v1722, %v1729
          %v1731 = vmul.f32 %v1730, 1.442695
          %v1732 = vpow.pop %v1731
          %v1733 = vsel %vm983, %v1732, 0.0
          %1734 = vadd.xlane.f32.xlu0 %v1733
          %v1735 = vpop.xlane.xlu0 %1734
          %v1736 = vrcp.pop %v1735
          %v1737 = vmul.f32 %v1732, %v1736
          %v1738 = vpack.c.bf16 %v1737, %v1737
          %1739 = vrot.lane.b32.xlu0 %v1158, 80
          %v1740 = vpop.permute.xlu0 %1739
          %v1742 = vsel %vm983, %v1738, 0
          %v1745 = vsel %vm1045, %v1740, 0
          %1747 = vmatprep.subr.bf16.mxu0 0
          %1748 = vmatpush1.bf16.msra.mxu0 %v1745
          %1749 = vmatprep.subr.bf16.mxu0 0
          %1750 = vmatpush1.bf16.msra.mxu0 0
          %1751 = vmatprep.subr.bf16.mxu0 0
          %1752 = vmatpush1.bf16.msra.mxu0 0
          %1753 = vmatprep.subr.bf16.mxu0 0
          %1754 = vmatpush1.bf16.msra.mxu0 0
          %1755 = vmatprep.subr.bf16.mxu0 0
          %1756 = vmatpush1.bf16.msra.mxu0 0
          %1757 = vmatprep.subr.bf16.mxu0 0
          %1758 = vmatpush1.bf16.msra.mxu0 0
          %1759 = vmatprep.subr.bf16.mxu0 0
          %1760 = vmatpush1.bf16.msra.mxu0 0
          %1761 = vmatprep.subr.bf16.mxu0 0
          %1762 = vmatpush1.bf16.msra.mxu0 0
          %1763 = vmatprep.subr.bf16.mxu0 0
          %1764 = vmatpush1.bf16.msra.mxu0 0
          %1765 = vmatprep.subr.bf16.mxu0 0
          %1766 = vmatpush1.bf16.msra.mxu0 0
          %1767 = vmatprep.subr.bf16.mxu0 0
          %1768 = vmatpush1.bf16.msra.mxu0 0
          %1769 = vmatprep.subr.bf16.mxu0 0
          %1770 = vmatpush1.bf16.msra.mxu0 0
          %1771 = vmatprep.subr.bf16.mxu0 0
          %1772 = vmatpush1.bf16.msra.mxu0 0
          %1773 = vmatprep.subr.bf16.mxu0 0
          %1774 = vmatpush1.bf16.msra.mxu0 0
          %1775 = vmatprep.subr.bf16.mxu0 0
          %1776 = vmatpush1.bf16.msra.mxu0 0
          %1777 = vmatprep.subr.bf16.mxu0 0
          %1778 = vmatpush1.bf16.msra.mxu0 0
          %1779 = vmatprep.mubr.bf16.mxu0 0
          %1780 = vmatmul.mubr.bf16.gmra.mrb[0].mxu0 %v1742
          %v1781 = vpop.f32.mrb[0].mxu0
          %v1782 = vadd.f32 0.0, %v1781
          %v1783 = vpop.f32.mrb[0].mxu0
          %v1784 = vpop.f32.mrb[0].mxu0
          %v1785 = vpop.f32.mrb[0].mxu0
          %1786 = vdwg.mxu0
          %1788 = vrot.lane.b32.xlu0 %v1782, 48
          %v1789 = vpop.permute.xlu0 %1788
          %vm1791 = vcmask 458112
          %1792 = vst.msk [vmem:[#allocation4] sm:$0xff] %vm1791, %v1789
          %1793 = vrot.lane.b32.xlu0 %v980, 72
          %v1794 = vpop.permute.xlu0 %1793
          %1795 = vrot.lane.b32.xlu0 %v1095, 72
          %v1796 = vpop.permute.xlu0 %1795
          %v1798 = vsel %vm983, %v1794, 0
          %v1801 = vsel %vm983, %v1796, 0
          %1803 = vmatprep.subr.bf16.mxu0 0
          %1804 = vmatpush1.bf16.xpose.msra.mxu0 %v1801
          %1805 = vmatprep.subr.bf16.mxu0 0
          %1806 = vmatpush1.bf16.xpose.msra.mxu0 0
          %1807 = vmatprep.subr.bf16.mxu0 0
          %1808 = vmatpush1.bf16.xpose.msra.mxu0 0
          %1809 = vmatprep.subr.bf16.mxu0 0
          %1810 = vmatpush1.bf16.xpose.msra.mxu0 0
          %1811 = vmatprep.subr.bf16.mxu0 0
          %1812 = vmatpush1.bf16.xpose.msra.mxu0 0
          %1813 = vmatprep.subr.bf16.mxu0 0
          %1814 = vmatpush1.bf16.xpose.msra.mxu0 0
          %1815 = vmatprep.subr.bf16.mxu0 0
          %1816 = vmatpush1.bf16.xpose.msra.mxu0 0
          %1817 = vmatprep.subr.bf16.mxu0 0
          %1818 = vmatpush1.bf16.xpose.msra.mxu0 0
          %1819 = vmatprep.subr.bf16.mxu0 0
          %1820 = vmatpush1.bf16.xpose.msra.mxu0 0
          %1821 = vmatprep.subr.bf16.mxu0 0
          %1822 = vmatpush1.bf16.xpose.msra.mxu0 0
          %1823 = vmatprep.subr.bf16.mxu0 0
          %1824 = vmatpush1.bf16.xpose.msra.mxu0 0
          %1825 = vmatprep.subr.bf16.mxu0 0
          %1826 = vmatpush1.bf16.xpose.msra.mxu0 0
          %1827 = vmatprep.subr.bf16.mxu0 0
          %1828 = vmatpush1.bf16.xpose.msra.mxu0 0
          %1829 = vmatprep.subr.bf16.mxu0 0
          %1830 = vmatpush1.bf16.xpose.msra.mxu0 0
          %1831 = vmatprep.subr.bf16.mxu0 0
          %1832 = vmatpush1.bf16.xpose.msra.mxu0 0
          %1833 = vmatprep.subr.bf16.mxu0 0
          %1834 = vmatpush1.bf16.xpose.msra.mxu0 0
          %1835 = vmatprep.mubr.bf16.mxu0 0
          %1836 = vmatmul.mubr.bf16.gmra.mrb[0].mxu0 %v1798
          %v1837 = vpop.f32.mrb[0].mxu0
          %v1838 = vadd.f32 0.0, %v1837
          %v1839 = vpop.f32.mrb[0].mxu0
          %v1840 = vpop.f32.mrb[0].mxu0
          %v1841 = vpop.f32.mrb[0].mxu0
          %1842 = vdwg.mxu0
          %v1843 = vsel %vm983, %v1838, -inf
          %1844 = vmax.xlane.f32.xlu0 %v1843
          %v1845 = vpop.xlane.xlu0 %1844
          %v1846 = vsub.f32 %v1838, %v1845
          %v1847 = vmul.f32 %v1846, 1.442695
          %v1848 = vpow.pop %v1847
          %v1849 = vsel %vm983, %v1848, 0.0
          %1850 = vadd.xlane.f32.xlu0 %v1849
          %v1851 = vpop.xlane.xlu0 %1850
          %v1852 = vrcp.pop %v1851
          %v1853 = vmul.f32 %v1848, %v1852
          %v1854 = vpack.c.bf16 %v1853, %v1853
          %1855 = vrot.lane.b32.xlu0 %v1158, 72
          %v1856 = vpop.permute.xlu0 %1855
          %v1858 = vsel %vm983, %v1854, 0
          %v1861 = vsel %vm1045, %v1856, 0
          %1863 = vmatprep.subr.bf16.mxu0 0
          %1864 = vmatpush1.bf16.msra.mxu0 %v1861
          %1865 = vmatprep.subr.bf16.mxu0 0
          %1866 = vmatpush1.bf16.msra.mxu0 0
          %1867 = vmatprep.subr.bf16.mxu0 0
          %1868 = vmatpush1.bf16.msra.mxu0 0
          %1869 = vmatprep.subr.bf16.mxu0 0
          %1870 = vmatpush1.bf16.msra.mxu0 0
          %1871 = vmatprep.subr.bf16.mxu0 0
          %1872 = vmatpush1.bf16.msra.mxu0 0
          %1873 = vmatprep.subr.bf16.mxu0 0
          %1874 = vmatpush1.bf16.msra.mxu0 0
          %1875 = vmatprep.subr.bf16.mxu0 0
          %1876 = vmatpush1.bf16.msra.mxu0 0
          %1877 = vmatprep.subr.bf16.mxu0 0
          %1878 = vmatpush1.bf16.msra.mxu0 0
          %1879 = vmatprep.subr.bf16.mxu0 0
          %1880 = vmatpush1.bf16.msra.mxu0 0
          %1881 = vmatprep.subr.bf16.mxu0 0
          %1882 = vmatpush1.bf16.msra.mxu0 0
          %1883 = vmatprep.subr.bf16.mxu0 0
          %1884 = vmatpush1.bf16.msra.mxu0 0
          %1885 = vmatprep.subr.bf16.mxu0 0
          %1886 = vmatpush1.bf16.msra.mxu0 0
          %1887 = vmatprep.subr.bf16.mxu0 0
          %1888 = vmatpush1.bf16.msra.mxu0 0
          %1889 = vmatprep.subr.bf16.mxu0 0
          %1890 = vmatpush1.bf16.msra.mxu0 0
          %1891 = vmatprep.subr.bf16.mxu0 0
          %1892 = vmatpush1.bf16.msra.mxu0 0
          %1893 = vmatprep.subr.bf16.mxu0 0
          %1894 = vmatpush1.bf16.msra.mxu0 0
          %1895 = vmatprep.mubr.bf16.mxu0 0
          %1896 = vmatmul.mubr.bf16.gmra.mrb[0].mxu0 %v1858
          %v1897 = vpop.f32.mrb[0].mxu0
          %v1898 = vadd.f32 0.0, %v1897
          %v1899 = vpop.f32.mrb[0].mxu0
          %v1900 = vpop.f32.mrb[0].mxu0
          %v1901 = vpop.f32.mrb[0].mxu0
          %1902 = vdwg.mxu0
          %1904 = vrot.lane.b32.xlu0 %v1898, 56
          %v1905 = vpop.permute.xlu0 %1904
          %vm1907 = vcmask 523712
          %1908 = vst.msk [vmem:[#allocation4] sm:$0xff] %vm1907, %v1905
          %v1909 = vld [vmem:[#allocation4] sm:$0xff]
          %v1910 = vpack.c.bf16 %v1909, %v1909
          %v1911 = vld [vmem:[%s8] sm:$0xf]
          %v1912 = vld [vmem:[%s8 + $0x4] sm:$0xf]
          %v1913 = vld [vmem:[%s8 + $0x8] sm:$0xf]
          %v1914 = vld [vmem:[%s8 + $0xc] sm:$0xf]
          %v1915 = vld [vmem:[%s8 + $0x10] sm:$0xf]
          %v1916 = vld [vmem:[%s8 + $0x14] sm:$0xf]
          %v1917 = vld [vmem:[%s8 + $0x18] sm:$0xf]
          %v1918 = vld [vmem:[%s8 + $0x1c] sm:$0xf]
          %v1919 = vld [vmem:[%s9] sm:$0x1]
          %v1921 = vlaneseq
          %v1922 = vshrl.u32 %v1921, 7
          %v1923 = vsub.s32 0, %v1922
          %v1924 = vrot.slane %v1919, %v1923
          %v1934 = vunpack.c.l.b16 %v1911
          %v1935 = vunpack.c.l.b16 %v1912
          %v1936 = vunpack.c.l.b16 %v1913
          %v1937 = vunpack.c.l.b16 %v1914
          %v1938 = vunpack.c.l.b16 %v1915
          %v1939 = vunpack.c.l.b16 %v1916
          %v1940 = vunpack.c.l.b16 %v1917
          %v1941 = vunpack.c.l.b16 %v1918
          %v1942 = vpack.c.b16 %v1935, %v1934
          %v1943 = vpack.c.b16 %v1937, %v1936
          %v1944 = vpack.c.b16 %v1939, %v1938
          %v1945 = vpack.c.b16 %v1941, %v1940
          %v1951 = vsel %vm935, %v1910, 0
          %1953 = vmatprep.subr.bf16.mxu0 0
          %1954 = vmatpush1.bf16.msra.mxu0 %v1942
          %1955 = vmatprep.subr.bf16.mxu0 0
          %1956 = vmatpush1.bf16.msra.mxu0 %v1943
          %1957 = vmatprep.subr.bf16.mxu0 0
          %1958 = vmatpush1.bf16.msra.mxu0 %v1944
          %1959 = vmatprep.subr.bf16.mxu0 0
          %1960 = vmatpush1.bf16.msra.mxu0 %v1945
          %1961 = vmatprep.subr.bf16.mxu0 0
          %1962 = vmatpush1.bf16.msra.mxu0 0
          %1963 = vmatprep.subr.bf16.mxu0 0
          %1964 = vmatpush1.bf16.msra.mxu0 0
          %1965 = vmatprep.subr.bf16.mxu0 0
          %1966 = vmatpush1.bf16.msra.mxu0 0
          %1967 = vmatprep.subr.bf16.mxu0 0
          %1968 = vmatpush1.bf16.msra.mxu0 0
          %1969 = vmatprep.subr.bf16.mxu0 0
          %1970 = vmatpush1.bf16.msra.mxu0 0
          %1971 = vmatprep.subr.bf16.mxu0 0
          %1972 = vmatpush1.bf16.msra.mxu0 0
          %1973 = vmatprep.subr.bf16.mxu0 0
          %1974 = vmatpush1.bf16.msra.mxu0 0
          %1975 = vmatprep.subr.bf16.mxu0 0
          %1976 = vmatpush1.bf16.msra.mxu0 0
          %1977 = vmatprep.subr.bf16.mxu0 0
          %1978 = vmatpush1.bf16.msra.mxu0 0
          %1979 = vmatprep.subr.bf16.mxu0 0
          %1980 = vmatpush1.bf16.msra.mxu0 0
          %1981 = vmatprep.subr.bf16.mxu0 0
          %1982 = vmatpush1.bf16.msra.mxu0 0
          %1983 = vmatprep.subr.bf16.mxu0 0
          %1984 = vmatpush1.bf16.msra.mxu0 0
          %1985 = vmatprep.mubr.bf16.mxu0 0
          %1986 = vmatmul.mubr.bf16.gmra.mrb[0].mxu0 %v1951
          %v1987 = vpop.f32.mrb[0].mxu0
          %v1988 = vadd.f32 %v1924, %v1987
          %v1989 = vpop.f32.mrb[0].mxu0
          %v1990 = vpop.f32.mrb[0].mxu0
          %v1991 = vpop.f32.mrb[0].mxu0
          %1992 = vdwg.mxu0
          %v1993 = vadd.f32 %v894, %v1988
          %v1994 = vld [vmem:[%s10] sm:$0x1]
          %v1995 = vld [vmem:[%s11] sm:$0x1]
          %v1996 = vsel %vm935, %v1993, 0.0
          %1997 = vadd.xlane.f32.xlu0 %v1996
          %v1998 = vpop.xlane.xlu0 %1997
          %v1999 = vrcp.pop 64.0
          %v2000 = vmul.f32 %v1998, %v1999
          %v2001 = vsub.f32 %v1993, %v2000
          %v2002 = vmul.f32 %v2001, %v2001
          %v2003 = vsel %vm935, %v2002, 0.0
          %2004 = vadd.xlane.f32.xlu0 %v2003
          %v2005 = vpop.xlane.xlu0 %2004
          %v2006 = vmul.f32 %v2005, %v1999
          %v2007 = vadd.f32 %v2006, 1e-05
          %v2008 = vrsqrt.pop %v2007
          %v2009 = vmul.f32 %v2001, %v2008
          %v2011 = vlaneseq
          %v2012 = vshrl.u32 %v2011, 7
          %v2013 = vsub.s32 0, %v2012
          %v2014 = vrot.slane %v1994, %v2013
          %v2016 = vmul.f32 %v2009, %v2014
          %v2018 = vlaneseq
          %v2019 = vshrl.u32 %v2018, 7
          %v2020 = vsub.s32 0, %v2019
          %v2021 = vrot.slane %v1995, %v2020
          %v2023 = vadd.f32 %v2016, %v2021
          %2024 = vst.msk [vmem:[#allocation5] sm:$0xff] %vm935, %v2023
          %2025 = vst.msk [vmem:[#allocation6] sm:$0xff] %vm935, 0.0
        $region108: #{tpu_custom_call.1} parent=91 // pred_fallthru
          _
        %v2026 = vld [vmem:[#allocation5] sm:$0xff]
        %v2027 = vpack.c.bf16 %v2026, %v2026
        %v2028 = vld [vmem:[%s702] sm:$0xff]
        %v2029 = vld [vmem:[%s702 + $0x8] sm:$0xff]
        %v2030 = vld [vmem:[%s702 + $0x10] sm:$0xff]
        %v2031 = vld [vmem:[%s702 + $0x18] sm:$0xff]
        %v2032 = vld [vmem:[%s702 + $0x20] sm:$0xff]
        %v2033 = vld [vmem:[%s702 + $0x28] sm:$0xff]
        %v2034 = vld [vmem:[%s702 + $0x30] sm:$0xff]
        %v2035 = vld [vmem:[%s702 + $0x38] sm:$0xff]
        %v2036 = vld [vmem:[%s707] sm:$0x3]
        %v2038 = vlaneseq
        %v2039 = vshrl.u32 %v2038, 7
        %v2040 = vsub.s32 0, %v2039
        %v2041 = vrot.slane %v2036, %v2040
        %v2042 = vlaneseq
        %v2043 = vshrl.u32 %v2042, 7
        %v2044 = vsub.s32 1, %v2043
        %v2045 = vrot.slane %v2036, %v2044
        %v2056 = vunpack.c.l.b16 %v2028
        %v2057 = vunpack.c.h.b16 %v2028
        %v2058 = vunpack.c.l.b16 %v2029
        %v2059 = vunpack.c.h.b16 %v2029
        %v2060 = vunpack.c.l.b16 %v2030
        %v2061 = vunpack.c.h.b16 %v2030
        %v2062 = vunpack.c.l.b16 %v2031
        %v2063 = vunpack.c.h.b16 %v2031
        %v2064 = vunpack.c.l.b16 %v2032
        %v2065 = vunpack.c.h.b16 %v2032
        %v2066 = vunpack.c.l.b16 %v2033
        %v2067 = vunpack.c.h.b16 %v2033
        %v2068 = vunpack.c.l.b16 %v2034
        %v2069 = vunpack.c.h.b16 %v2034
        %v2070 = vunpack.c.l.b16 %v2035
        %v2071 = vunpack.c.h.b16 %v2035
        %v2072 = vpack.c.b16 %v2058, %v2056
        %v2073 = vpack.c.b16 %v2059, %v2057
        %v2074 = vpack.c.b16 %v2062, %v2060
        %v2075 = vpack.c.b16 %v2063, %v2061
        %v2076 = vpack.c.b16 %v2066, %v2064
        %v2077 = vpack.c.b16 %v2067, %v2065
        %v2078 = vpack.c.b16 %v2070, %v2068
        %v2079 = vpack.c.b16 %v2071, %v2069
        %vm2088 = vcmask 523264
        %v2090 = vsel %vm2088, %v2027, 0
        %2092 = vmatprep.subr.bf16.mxu0 %v2073
        %2093 = vmatpush1.bf16.msra.mxu0 %v2072
        %2094 = vmatprep.subr.bf16.mxu0 %v2075
        %2095 = vmatpush1.bf16.msra.mxu0 %v2074
        %2096 = vmatprep.subr.bf16.mxu0 %v2077
        %2097 = vmatpush1.bf16.msra.mxu0 %v2076
        %2098 = vmatprep.subr.bf16.mxu0 %v2079
        %2099 = vmatpush1.bf16.msra.mxu0 %v2078
        %2100 = vmatprep.subr.bf16.mxu0 0
        %2101 = vmatpush1.bf16.msra.mxu0 0
        %2102 = vmatprep.subr.bf16.mxu0 0
        %2103 = vmatpush1.bf16.msra.mxu0 0
        %2104 = vmatprep.subr.bf16.mxu0 0
        %2105 = vmatpush1.bf16.msra.mxu0 0
        %2106 = vmatprep.subr.bf16.mxu0 0
        %2107 = vmatpush1.bf16.msra.mxu0 0
        %2108 = vmatprep.subr.bf16.mxu0 0
        %2109 = vmatpush1.bf16.msra.mxu0 0
        %2110 = vmatprep.subr.bf16.mxu0 0
        %2111 = vmatpush1.bf16.msra.mxu0 0
        %2112 = vmatprep.subr.bf16.mxu0 0
        %2113 = vmatpush1.bf16.msra.mxu0 0
        %2114 = vmatprep.subr.bf16.mxu0 0
        %2115 = vmatpush1.bf16.msra.mxu0 0
        %2116 = vmatprep.subr.bf16.mxu0 0
        %2117 = vmatpush1.bf16.msra.mxu0 0
        %2118 = vmatprep.subr.bf16.mxu0 0
        %2119 = vmatpush1.bf16.msra.mxu0 0
        %2120 = vmatprep.subr.bf16.mxu0 0
        %2121 = vmatpush1.bf16.msra.mxu0 0
        %2122 = vmatprep.subr.bf16.mxu0 0
        %2123 = vmatpush1.bf16.msra.mxu0 0
        %2124 = vmatprep.mubr.bf16.mxu0 0
        %2125 = vmatmul.mubr.bf16.gmra.mrb[0].mxu0 %v2090
        %v2126 = vpop.f32.mrb[0].mxu0
        %v2127 = vadd.f32 %v2041, %v2126
        %v2128 = vpop.f32.mrb[0].mxu0
        %v2129 = vadd.f32 %v2045, %v2128
        %v2130 = vpop.f32.mrb[0].mxu0
        %v2131 = vpop.f32.mrb[0].mxu0
        %2132 = vdwg.mxu0
        %vm2133 = vcmp.gt.f32.partialorder %v2127, 0.0
        %vm2134 = vcmp.gt.f32.partialorder %v2129, 0.0
        %v2135 = vmin.f32 %v2127, 0.0
        %v2136 = vmin.f32 %v2129, 0.0
        %v2137 = vmul.f32 %v2135, 1.442695
        %v2138 = vpow.pop %v2137
        %v2139 = vmul.f32 %v2136, 1.442695
        %v2140 = vpow.pop %v2139
        %v2141 = vsub.f32 %v2138, 1.0
        %v2142 = vsub.f32 %v2140, 1.0
        %v2143 = vsel %vm2133, %v2127, %v2141
        %v2144 = vsel %vm2134, %v2129, %v2142
        %v2145 = vld [vmem:[#allocation6] sm:$0xff]
        %v2146 = vpack.c.bf16 %v2143, %v2143
        %v2147 = vpack.c.bf16 %v2144, %v2144
        %v2148 = vld [vmem:[%s713] sm:$0xf]
        %v2149 = vld [vmem:[%s713 + $0x4] sm:$0xf]
        %v2150 = vld [vmem:[%s713 + $0x8] sm:$0xf]
        %v2151 = vld [vmem:[%s713 + $0xc] sm:$0xf]
        %v2152 = vld [vmem:[%s713 + $0x10] sm:$0xf]
        %v2153 = vld [vmem:[%s713 + $0x14] sm:$0xf]
        %v2154 = vld [vmem:[%s713 + $0x18] sm:$0xf]
        %v2155 = vld [vmem:[%s713 + $0x1c] sm:$0xf]
        %v2156 = vld [vmem:[%s713 + $0x20] sm:$0xf]
        %v2157 = vld [vmem:[%s713 + $0x24] sm:$0xf]
        %v2158 = vld [vmem:[%s713 + $0x28] sm:$0xf]
        %v2159 = vld [vmem:[%s713 + $0x2c] sm:$0xf]
        %v2160 = vld [vmem:[%s713 + $0x30] sm:$0xf]
        %v2161 = vld [vmem:[%s713 + $0x34] sm:$0xf]
        %v2162 = vld [vmem:[%s713 + $0x38] sm:$0xf]
        %v2163 = vld [vmem:[%s713 + $0x3c] sm:$0xf]
        %v2164 = vld [vmem:[%s713 + $0x40] sm:$0xf]
        %v2165 = vld [vmem:[%s713 + $0x44] sm:$0xf]
        %v2166 = vld [vmem:[%s713 + $0x48] sm:$0xf]
        %v2167 = vld [vmem:[%s713 + $0x4c] sm:$0xf]
        %v2168 = vld [vmem:[%s713 + $0x50] sm:$0xf]
        %v2169 = vld [vmem:[%s713 + $0x54] sm:$0xf]
        %v2170 = vld [vmem:[%s713 + $0x58] sm:$0xf]
        %v2171 = vld [vmem:[%s713 + $0x5c] sm:$0xf]
        %v2172 = vld [vmem:[%s713 + $0x60] sm:$0xf]
        %v2173 = vld [vmem:[%s713 + $0x64] sm:$0xf]
        %v2174 = vld [vmem:[%s713 + $0x68] sm:$0xf]
        %v2175 = vld [vmem:[%s713 + $0x6c] sm:$0xf]
        %v2176 = vld [vmem:[%s713 + $0x70] sm:$0xf]
        %v2177 = vld [vmem:[%s713 + $0x74] sm:$0xf]
        %v2178 = vld [vmem:[%s713 + $0x78] sm:$0xf]
        %v2179 = vld [vmem:[%s713 + $0x7c] sm:$0xf]
        %v2212 = vunpack.c.l.b16 %v2148
        %v2213 = vunpack.c.l.b16 %v2149
        %v2214 = vunpack.c.l.b16 %v2150
        %v2215 = vunpack.c.l.b16 %v2151
        %v2216 = vunpack.c.l.b16 %v2152
        %v2217 = vunpack.c.l.b16 %v2153
        %v2218 = vunpack.c.l.b16 %v2154
        %v2219 = vunpack.c.l.b16 %v2155
        %v2220 = vunpack.c.l.b16 %v2156
        %v2221 = vunpack.c.l.b16 %v2157
        %v2222 = vunpack.c.l.b16 %v2158
        %v2223 = vunpack.c.l.b16 %v2159
        %v2224 = vunpack.c.l.b16 %v2160
        %v2225 = vunpack.c.l.b16 %v2161
        %v2226 = vunpack.c.l.b16 %v2162
        %v2227 = vunpack.c.l.b16 %v2163
        %v2228 = vunpack.c.l.b16 %v2164
        %v2229 = vunpack.c.l.b16 %v2165
        %v2230 = vunpack.c.l.b16 %v2166
        %v2231 = vunpack.c.l.b16 %v2167
        %v2232 = vunpack.c.l.b16 %v2168
        %v2233 = vunpack.c.l.b16 %v2169
        %v2234 = vunpack.c.l.b16 %v2170
        %v2235 = vunpack.c.l.b16 %v2171
        %v2236 = vunpack.c.l.b16 %v2172
        %v2237 = vunpack.c.l.b16 %v2173
        %v2238 = vunpack.c.l.b16 %v2174
        %v2239 = vunpack.c.l.b16 %v2175
        %v2240 = vunpack.c.l.b16 %v2176
        %v2241 = vunpack.c.l.b16 %v2177
        %v2242 = vunpack.c.l.b16 %v2178
        %v2243 = vunpack.c.l.b16 %v2179
        %v2244 = vpack.c.b16 %v2213, %v2212
        %v2245 = vpack.c.b16 %v2215, %v2214
        %v2246 = vpack.c.b16 %v2217, %v2216
        %v2247 = vpack.c.b16 %v2219, %v2218
        %v2248 = vpack.c.b16 %v2221, %v2220
        %v2249 = vpack.c.b16 %v2223, %v2222
        %v2250 = vpack.c.b16 %v2225, %v2224
        %v2251 = vpack.c.b16 %v2227, %v2226
        %v2252 = vpack.c.b16 %v2229, %v2228
        %v2253 = vpack.c.b16 %v2231, %v2230
        %v2254 = vpack.c.b16 %v2233, %v2232
        %v2255 = vpack.c.b16 %v2235, %v2234
        %v2256 = vpack.c.b16 %v2237, %v2236
        %v2257 = vpack.c.b16 %v2239, %v2238
        %v2258 = vpack.c.b16 %v2241, %v2240
        %v2259 = vpack.c.b16 %v2243, %v2242
        %2276 = vmatprep.subr.bf16.mxu0 0
        %2277 = vmatpush1.bf16.msra.mxu0 %v2244
        %2278 = vmatprep.subr.bf16.mxu0 0
        %2279 = vmatpush1.bf16.msra.mxu0 %v2245
        %2280 = vmatprep.subr.bf16.mxu0 0
        %2281 = vmatpush1.bf16.msra.mxu0 %v2246
        %2282 = vmatprep.subr.bf16.mxu0 0
        %2283 = vmatpush1.bf16.msra.mxu0 %v2247
        %2284 = vmatprep.subr.bf16.mxu0 0
        %2285 = vmatpush1.bf16.msra.mxu0 %v2248
        %2286 = vmatprep.subr.bf16.mxu0 0
        %2287 = vmatpush1.bf16.msra.mxu0 %v2249
        %2288 = vmatprep.subr.bf16.mxu0 0
        %2289 = vmatpush1.bf16.msra.mxu0 %v2250
        %2290 = vmatprep.subr.bf16.mxu0 0
        %2291 = vmatpush1.bf16.msra.mxu0 %v2251
        %2292 = vmatprep.subr.bf16.mxu0 0
        %2293 = vmatpush1.bf16.msra.mxu0 %v2252
        %2294 = vmatprep.subr.bf16.mxu0 0
        %2295 = vmatpush1.bf16.msra.mxu0 %v2253
        %2296 = vmatprep.subr.bf16.mxu0 0
        %2297 = vmatpush1.bf16.msra.mxu0 %v2254
        %2298 = vmatprep.subr.bf16.mxu0 0
        %2299 = vmatpush1.bf16.msra.mxu0 %v2255
        %2300 = vmatprep.subr.bf16.mxu0 0
        %2301 = vmatpush1.bf16.msra.mxu0 %v2256
        %2302 = vmatprep.subr.bf16.mxu0 0
        %2303 = vmatpush1.bf16.msra.mxu0 %v2257
        %2304 = vmatprep.subr.bf16.mxu0 0
        %2305 = vmatpush1.bf16.msra.mxu0 %v2258
        %2306 = vmatprep.subr.bf16.mxu0 0
        %2307 = vmatpush1.bf16.msra.mxu0 %v2259
        %2308 = vmatprep.mubr.bf16.mxu0 %v2147
        %2309 = vmatmul.mubr.bf16.gmra.mrb[0].mxu0 %v2146
        %v2310 = vpop.f32.mrb[0].mxu0
        %v2311 = vadd.f32 0.0, %v2310
        %v2312 = vpop.f32.mrb[0].mxu0
        %v2313 = vpop.f32.mrb[0].mxu0
        %v2314 = vpop.f32.mrb[0].mxu0
        %2315 = vdwg.mxu0
        %v2316 = vadd.f32 %v2145, %v2311
        %2317 = vst.msk [vmem:[#allocation6] sm:$0xff] %vm2088, %v2316
        // Predicated region
        $region109: #{tpu_custom_call.1} parent=91 // pred_check
          %p2318 = pneg %p717
        $region110: #{tpu_custom_call.1} parent=91 // pred_check_branch
          %2320 = sbr.rel (%p2318) target = $region112
        $region111: #{tpu_custom_call.1} parent=91 // pred_region
          %v2321 = vld [vmem:[#allocation5] sm:$0xff]
          %v2322 = vld [vmem:[#allocation6] sm:$0xff]
          %v2323 = vadd.f32 %v2321, %v2322
          %v2324 = vld [vmem:[%s15] sm:$0x1]
          %v2326 = vlaneseq
          %v2327 = vshrl.u32 %v2326, 7
          %v2328 = vsub.s32 0, %v2327
          %v2329 = vrot.slane %v2324, %v2328
          %v2331 = vadd.f32 %v2323, %v2329
          %v2332 = vld [vmem:[%s16] sm:$0x1]
          %v2333 = vld [vmem:[%s17] sm:$0x1]
          %v2334 = vsel %vm2088, %v2331, 0.0
          %2335 = vadd.xlane.f32.xlu0 %v2334
          %v2336 = vpop.xlane.xlu0 %2335
          %v2337 = vrcp.pop 64.0
          %v2338 = vmul.f32 %v2336, %v2337
          %v2339 = vsub.f32 %v2331, %v2338
          %v2340 = vmul.f32 %v2339, %v2339
          %v2341 = vsel %vm2088, %v2340, 0.0
          %2342 = vadd.xlane.f32.xlu0 %v2341
          %v2343 = vpop.xlane.xlu0 %2342
          %v2344 = vmul.f32 %v2343, %v2337
          %v2345 = vadd.f32 %v2344, 1e-05
          %v2346 = vrsqrt.pop %v2345
          %v2347 = vmul.f32 %v2339, %v2346
          %v2349 = vlaneseq
          %v2350 = vshrl.u32 %v2349, 7
          %v2351 = vsub.s32 0, %v2350
          %v2352 = vrot.slane %v2332, %v2351
          %v2354 = vmul.f32 %v2347, %v2352
          %v2356 = vlaneseq
          %v2357 = vshrl.u32 %v2356, 7
          %v2358 = vsub.s32 0, %v2357
          %v2359 = vrot.slane %v2333, %v2358
          %v2361 = vadd.f32 %v2354, %v2359
          %2362 = vst.msk [vmem:[%s697] sm:$0xff] %vm2088, %v2361
        $region112: #{tpu_custom_call.1} parent=91 // pred_fallthru
          _
        %s2363 = sand.u32 %s472, 1
        %s2364 = scalar_lea.sflag [#allocation9], %s2363
        %s2365 = sand.u32 %s472, 1
        %s2366 = smul.addr %s2365, 8
        %s2367 = scalar_lea.vmem [#allocation12], %s2366
        // Predicated region
        $region113: #{tpu_custom_call.1} parent=91 // pred_check
          %p2368 = pneg %p482
        $region114: #{tpu_custom_call.1} parent=91 // pred_check_branch
          %2370 = sbr.rel (%p2368) target = $region116
        $region115: #{tpu_custom_call.1} parent=91 // pred_region
          %s2372 = ssub.s32 128, 128
          %2373 = vsyncadd %s2364, %s2372
          %s2374 = sadd.s32 %s44, %s43
          %s2375 = smul.addr %s2374, 128
          %s2376 = scalar_lea.hbm %s18, %s2375
          %s2378 = sshll.u32 %s2367, 4
          %s2379 = int_to_ptr.vmem [resolvable:$true] %s2378
          %2381 = dma.vmem_to_hbm [thread:$0]  %s2379, 128, %s2376, %s2364
        $region116: #{tpu_custom_call.1} parent=91 // pred_fallthru
          _
      $region92: #{tpu_custom_call.1} parent=5 // pred_fallthru
        _
      %p2382 = scmp.le.s32.totalorder 2, %s33
      // Predicated region
      $region117: #{tpu_custom_call.1} parent=5 // pred_check
        %p2383 = pneg %p2382
      $region118: #{tpu_custom_call.1} parent=5 // pred_check_branch
        %2385 = sbr.rel (%p2383) target = $region120
      $region119: #{tpu_custom_call.1} parent=5 // pred_region
        %s2386 = ssub.s32 %s33, 2
        // Predicated region
        $region121: #{tpu_custom_call.1} parent=119 // pred_check
          %p2387 = pneg %p488
        $region122: #{tpu_custom_call.1} parent=119 // pred_check_branch
          %2389 = sbr.rel (%p2387) target = $region124
        $region123: #{tpu_custom_call.1} parent=119 // pred_region
          %s2390 = sand.u32 %s473, 1
          %s2391 = scalar_lea.sflag [#allocation9], %s2390
          %s2392 = sand.u32 %s473, 1
          %s2393 = smul.addr %s2392, 8
          %s2394 = scalar_lea.vmem [#allocation12], %s2393
          %2395 = dma.done %s2391, 128
        $region124: #{tpu_custom_call.1} parent=119 // pred_fallthru
          _
      $region120: #{tpu_custom_call.1} parent=5 // pred_fallthru
        _
    $region6: #{tpu_custom_call.1} parent=1 // loop_footer
      %s37 = sadd.s32 1, %s33
    $region7: #{tpu_custom_call.1} parent=1 // loop_footer_branch
      %32 = sbr.rel target = $region3
    $region8: #{tpu_custom_call.1} parent=1 // loop_exit
      _
    %2396 = vsyncpa [#allocation8], 1
    %s2397 = scalar_lea.sflag [#allocation8], 1
    %2398 = vsyncpa %s2397, 1
    %2399 = vsyncpa [#allocation11], 1
    %s2400 = scalar_lea.sflag [#allocation11], 1
    %2401 = vsyncpa %s2400, 1
    %2402 = vsyncpa [#allocation9], 1
    %s2403 = scalar_lea.sflag [#allocation9], 1
    %2404 = vsyncpa %s2403, 1

</llo_original>
